<compile_context>
chip_gen: v7x
topology: tpu7x:2x2x1
jax: 0.10.0
libtpu: 0.0.40
codegen_flags: <defaults>
</compile_context>

<pallas_src>
import functools

import jax
import jax.numpy as jnp
from jax import lax
from jax.experimental import pallas as pl
from jax.experimental.pallas import tpu as pltpu

EPS = 1e-5    # PyTorch GroupNorm default eps
LANE = 128


def _round_up(x, m):
    return (x + m - 1) // m * m


def _gn_affine(y, gamma, beta, n_valid, clip6):
    """GroupNorm(num_groups=1) over a per-sample slab, single fused pass.

    Padded channels carry y == 0 and gamma == beta == 0, so they contribute
    nothing to the sums and remain exactly zero afterwards; `n_valid` is the
    number of real (unpadded) elements.
    """
    s = jnp.sum(y)
    ss = jnp.sum(y * y)
    inv_n = 1.0 / n_valid
    mu = s * inv_n
    var = jnp.maximum(ss * inv_n - mu * mu, 0.0)
    out = (y - mu) * (lax.rsqrt(var + EPS) * gamma) + beta
    if clip6:
        out = jnp.clip(out, 0.0, 6.0)
    return out


def lff_kernel(x_ref, w1_ref, g1_ref, b1_ref, dw_ref, g2_ref, b2_ref,
               sew1_ref, sew2_ref, w2_ref, g3_ref, b3_ref,
               out_ref, pad_ref, *, H, W, n_hid, n_out):
    HW = H * W
    Cp = x_ref.shape[-1]        # padded in-channels (multiple of 128)
    Chp = w1_ref.shape[1]       # padded hidden channels
    Cop = w2_ref.shape[1]       # padded out-channels
    Wp = pad_ref.shape[1]       # padded scratch width (multiple of 8)

    x = x_ref[...]                          # (H, W, Cp) f32
    x2 = x.reshape(HW, Cp)                  # free: W % 8 == 0, lane dim unchanged

    # ---- 1x1 expand conv (MXU, bf16 operands, f32 accumulate) -> GN -> ReLU6 ----
    y = jnp.dot(x2.astype(jnp.bfloat16), w1_ref[...],
                preferred_element_type=jnp.float32)            # (HW, Chp)
    y = _gn_affine(y, g1_ref[...], b1_ref[...], n_hid, clip6=True)

    # ---- depthwise 3x3, stride 1, pad 1 ----
    # Re-zero only the halo border each step; the interior is fully rewritten
    # below and the border is never written by the interior store.
    zrow = jnp.zeros((1, Wp, Chp), jnp.float32)
    pad_ref[0:1] = zrow
    pad_ref[H + 1:H + 2] = zrow
    zcol = jnp.zeros((H + 2, 1, Chp), jnp.float32)
    pad_ref[:, 0:1, :] = zcol
    pad_ref[:, W + 1:W + 2, :] = zcol
    pad_ref[1:H + 1, 1:W + 1, :] = y.reshape(H, W, Chp)

    dww = dw_ref[...]                        # (3, 3, Chp) f32
    acc = jnp.zeros((H, W, Chp), jnp.float32)
    for dh in range(3):
        row = pad_ref[dh:dh + H]             # aligned leading-dim slice (H, Wp, Chp)
        for dwi in range(3):
            # TODO(synk): dwi = 1, 2 sublane-offset slices still pay a relayout;
            # a pltpu.roll-based W shift would move that work onto the XLU.
            acc = acc + row[:, dwi:dwi + W, :] * dww[dh, dwi]
    y = _gn_affine(acc.reshape(HW, Chp), g2_ref[...], b2_ref[...], n_hid, clip6=True)

    # ---- SE: global avg pool -> fc -> ReLU -> fc -> sigmoid -> scale ----
    se = jnp.mean(y, axis=0, keepdims=True)                    # (1, Chp)
    h = jnp.maximum(jnp.dot(se, sew1_ref[...],
                            preferred_element_type=jnp.float32), 0.0)
    z = jnp.dot(h, sew2_ref[...], preferred_element_type=jnp.float32)
    y = y * (1.0 / (1.0 + jnp.exp(-z)))

    # ---- 1x1 project conv (bf16 MXU) -> GroupNorm (no activation) ----
    y = jnp.dot(y.astype(jnp.bfloat16), w2_ref[...],
                preferred_element_type=jnp.float32)            # (HW, Cop)
    y = _gn_affine(y, g3_ref[...], b3_ref[...], n_out, clip6=False)

    # ---- residual; lane-dense (128-wide) output store ----
    out_ref[...] = (x2 + y).reshape(H, W, Cop)


def locality_feed_forward(x, params):
    """x: (B, H, W, Cin) float32, NHWC.  params: tuple of weight arrays."""
    (w1, g1, b1, dw_w, g2, b2, sew1, sew2, w2, g3, b3) = params
    B, H, W, Cin = x.shape
    Chid = w1.shape[1]
    Cout = w2.shape[1]
    assert Cout == Cin, "residual requires in_dim == out_dim"
    assert W % 8 == 0, "W must be a multiple of 8 so in-kernel reshapes stay tile-aligned"

    Cp = _round_up(Cin, LANE)
    Chp = _round_up(Chid, LANE)
    Cop = _round_up(Cout, LANE)
    Wpad = _round_up(W + 2, 8)

    # Lane-dense packing: zero-pad every channel dim to a multiple of 128.
    def padc(a, target_shape):
        pads = [(0, t - s) for s, t in zip(a.shape, target_shape)]
        return jnp.pad(a, pads)

    xp = padc(x, (B, H, W, Cp))
    w1p = padc(w1, (Cp, Chp)).astype(jnp.bfloat16)
    g1p = padc(g1, (1, Chp))
    b1p = padc(b1, (1, Chp))
    dwp = padc(dw_w, (3, 3, Chp))
    g2p = padc(g2, (1, Chp))
    b2p = padc(b2, (1, Chp))
    Cr = sew1.shape[1]
    sew1p = padc(sew1, (Chp, Cr))
    sew2p = padc(sew2, (Cr, Chp))
    w2p = padc(w2, (Chp, Cop)).astype(jnp.bfloat16)
    g3p = padc(g3, (1, Cop))
    b3p = padc(b3, (1, Cop))

    kernel = functools.partial(
        lff_kernel, H=H, W=W,
        n_hid=float(H * W * Chid), n_out=float(H * W * Cout))

    def cmap2(b):
        return (0, 0)

    def cmap3(b):
        return (0, 0, 0)

    in_specs = [
        pl.BlockSpec((None, H, W, Cp), lambda b: (b, 0, 0, 0)),
        pl.BlockSpec(w1p.shape, cmap2),
        pl.BlockSpec(g1p.shape, cmap2),
        pl.BlockSpec(b1p.shape, cmap2),
        pl.BlockSpec(dwp.shape, cmap3),
        pl.BlockSpec(g2p.shape, cmap2),
        pl.BlockSpec(b2p.shape, cmap2),
        pl.BlockSpec(sew1p.shape, cmap2),
        pl.BlockSpec(sew2p.shape, cmap2),
        pl.BlockSpec(w2p.shape, cmap2),
        pl.BlockSpec(g3p.shape, cmap2),
        pl.BlockSpec(b3p.shape, cmap2),
    ]
    out_specs = pl.BlockSpec((None, H, W, Cop), lambda b: (b, 0, 0, 0))

    out = pl.pallas_call(
        kernel,
        out_shape=jax.ShapeDtypeStruct((B, H, W, Cop), jnp.float32),
        grid_spec=pltpu.PrefetchScalarGridSpec(
            num_scalar_prefetch=0,
            grid=(B,),
            in_specs=in_specs,
            out_specs=out_specs,
            scratch_shapes=[pltpu.VMEM((H + 2, Wpad, Chp), jnp.float32)],
        ),
        compiler_params=pltpu.CompilerParams(
            dimension_semantics=("parallel",)),
    )(xp, w1p, g1p, b1p, dwp, g2p, b2p, sew1p, sew2p, w2p, g3p, b3p)

    return out[..., :Cout]


# ---------------- pure-JAX reference (for sanity checking) ----------------
def reference(x, params):
    (w1, g1, b1, dw_w, g2, b2, sew1, sew2, w2, g3, b3) = params
    B, H, W, _ = x.shape
    hi = lax.Precision.HIGHEST

    def gn(y, gamma, beta):
        mu = jnp.mean(y, axis=(1, 2, 3), keepdims=True)
        var = jnp.mean((y - mu) ** 2, axis=(1, 2, 3), keepdims=True)
        return (y - mu) / jnp.sqrt(var + EPS) * gamma.reshape(1, 1, 1, -1) \
               + beta.reshape(1, 1, 1, -1)

    y = jnp.einsum('bhwc,cd->bhwd', x, w1, precision=hi)
    y = jnp.clip(gn(y, g1, b1), 0.0, 6.0)

    yp = jnp.pad(y, ((0, 0), (1, 1), (1, 1), (0, 0)))
    acc = jnp.zeros_like(y)
    for dh in range(3):
        for dw in range(3):
            acc = acc + yp[:, dh:dh + H, dw:dw + W, :] * dw_w[dh, dw]
    y = jnp.clip(gn(acc, g2, b2), 0.0, 6.0)

    se = jnp.mean(y, axis=(1, 2))                                     # (B, Chid)
    h = jnp.maximum(jnp.einsum('bc,cd->bd', se, sew1, precision=hi), 0.0)
    s = jax.nn.sigmoid(jnp.einsum('bd,dc->bc', h, sew2, precision=hi))
    y = y * s[:, None, None, :]

    y = jnp.einsum('bhwc,cd->bhwd', y, w2, precision=hi)
    y = gn(y, g3, b3)
    return x + y


if __name__ == "__main__":
    # Small shapes consistent with the module: in_dim = out_dim = 16, stride = 1,
    # expand_ratio = 4 -> hidden_dim = 64, reduction = 16 -> SE bottleneck 4.
    B, H, W = 2, 16, 16
    Cin = Cout = 16
    expand_ratio = 4
    reduction = 16
    Chid = int(Cin * expand_ratio)
    Cr = Chid // reduction

    key = jax.random.PRNGKey(0)
    k_x, k_w1, k_dw, k_s1, k_s2, k_w2 = jax.random.split(key, 6)

    x = jax.random.normal(k_x, (B, H, W, Cin), dtype=jnp.float32)

    w1 = jax.random.normal(k_w1, (Cin, Chid), dtype=jnp.float32) * 0.1     # Conv2d 1x1 (no bias)
    g1 = jnp.ones((1, Chid), jnp.float32)                                  # GroupNorm affine
    b1 = jnp.zeros((1, Chid), jnp.float32)
    dw_w = jax.random.normal(k_dw, (3, 3, Chid), dtype=jnp.float32) * 0.1  # depthwise 3x3
    g2 = jnp.ones((1, Chid), jnp.float32)
    b2 = jnp.zeros((1, Chid), jnp.float32)
    sew1 = jax.random.normal(k_s1, (Chid, Cr), dtype=jnp.float32) * 0.1    # SE fc1 (no bias)
    sew2 = jax.random.normal(k_s2, (Cr, Chid), dtype=jnp.float32) * 0.1    # SE fc2 (no bias)
    w2 = jax.random.normal(k_w2, (Chid, Cout), dtype=jnp.float32) * 0.1    # Conv2d 1x1 (no bias)
    g3 = jnp.ones((1, Cout), jnp.float32)
    b3 = jnp.zeros((1, Cout), jnp.float32)

    params = (w1, g1, b1, dw_w, g2, b2, sew1, sew2, w2, g3, b3)

    out = locality_feed_forward(x, params)
    out = jax.block_until_ready(out)

    ref = jax.block_until_ready(reference(x, params))
    import numpy as np
    np.testing.assert_allclose(np.asarray(out), np.asarray(ref), rtol=5e-2, atol=5e-2)

    print("KERNEL_OK")
</pallas_src>

<mosaic_0001>
module attributes {stable_mosaic.version = 11 : i64} {
  func.func @lff_kernel(%arg0: i32, %arg1: memref<1x16x16x128xf32, #tpu.memory_space<vmem>>, %arg2: memref<128x128xbf16, #tpu.memory_space<vmem>>, %arg3: memref<1x128xf32, #tpu.memory_space<vmem>>, %arg4: memref<1x128xf32, #tpu.memory_space<vmem>>, %arg5: memref<3x3x128xf32, #tpu.memory_space<vmem>>, %arg6: memref<1x128xf32, #tpu.memory_space<vmem>>, %arg7: memref<1x128xf32, #tpu.memory_space<vmem>>, %arg8: memref<128x4xf32, #tpu.memory_space<vmem>>, %arg9: memref<4x128xf32, #tpu.memory_space<vmem>>, %arg10: memref<128x128xbf16, #tpu.memory_space<vmem>>, %arg11: memref<1x128xf32, #tpu.memory_space<vmem>>, %arg12: memref<1x128xf32, #tpu.memory_space<vmem>>, %arg13: memref<1x16x16x128xf32, #tpu.memory_space<vmem>>, %arg14: memref<18x24x128xf32, #tpu.memory_space<vmem>>) attributes {dimension_semantics = [#tpu.dimension_semantics<parallel>], iteration_bounds = array<i64: 2>, scalar_prefetch = 0 : i64, scratch_operands = 1 : i64, tpu.core_type = #tpu.core_type<tc>, window_params = [{transform_indices = @transform_0, window_bounds = array<i64: 1, 16, 16, 128>}, {pipeline_mode = #tpu.pipeline_mode<synchronous>, transform_indices = @transform_1, window_bounds = array<i64: 128, 128>}, {pipeline_mode = #tpu.pipeline_mode<synchronous>, transform_indices = @transform_2, window_bounds = array<i64: 1, 128>}, {pipeline_mode = #tpu.pipeline_mode<synchronous>, transform_indices = @transform_3, window_bounds = array<i64: 1, 128>}, {pipeline_mode = #tpu.pipeline_mode<synchronous>, transform_indices = @transform_4, window_bounds = array<i64: 3, 3, 128>}, {pipeline_mode = #tpu.pipeline_mode<synchronous>, transform_indices = @transform_5, window_bounds = array<i64: 1, 128>}, {pipeline_mode = #tpu.pipeline_mode<synchronous>, transform_indices = @transform_6, window_bounds = array<i64: 1, 128>}, {pipeline_mode = #tpu.pipeline_mode<synchronous>, transform_indices = @transform_7, window_bounds = array<i64: 128, 4>}, {pipeline_mode = #tpu.pipeline_mode<synchronous>, transform_indices = @transform_8, window_bounds = array<i64: 4, 128>}, {pipeline_mode = #tpu.pipeline_mode<synchronous>, transform_indices = @transform_9, window_bounds = array<i64: 128, 128>}, {pipeline_mode = #tpu.pipeline_mode<synchronous>, transform_indices = @transform_10, window_bounds = array<i64: 1, 128>}, {pipeline_mode = #tpu.pipeline_mode<synchronous>, transform_indices = @transform_11, window_bounds = array<i64: 1, 128>}, {transform_indices = @transform_12, window_bounds = array<i64: 1, 16, 16, 128>}]} {
    %c0 = arith.constant 0 : index
    %c0_0 = arith.constant 0 : index
    %c0_1 = arith.constant 0 : index
    %c0_2 = arith.constant 0 : index
    %0 = vector.load %arg1[%c0, %c0_0, %c0_1, %c0_2] : memref<1x16x16x128xf32, #tpu.memory_space<vmem>>, vector<1x16x16x128xf32>
    %1 = vector.shape_cast %0 : vector<1x16x16x128xf32> to vector<16x16x128xf32>
    %2 = vector.shape_cast %1 : vector<16x16x128xf32> to vector<256x128xf32>
    %3 = arith.truncf %2 : vector<256x128xf32> to vector<256x128xbf16>
    %c0_3 = arith.constant 0 : index
    %c0_4 = arith.constant 0 : index
    %4 = vector.load %arg2[%c0_3, %c0_4] : memref<128x128xbf16, #tpu.memory_space<vmem>>, vector<128x128xbf16>
    %cst = arith.constant dense<0.000000e+00> : vector<256x128xf32>
    %5 = tpu.matmul %3, %4, %cst {dimension_numbers = #tpu.dot_dimension_numbers<[1], [0], [0], [1], [0, 0, 1, 1], [], []>} : vector<256x128xbf16>, vector<128x128xbf16>, vector<256x128xf32> -> vector<256x128xf32>
    %c0_5 = arith.constant 0 : index
    %c0_6 = arith.constant 0 : index
    %6 = vector.load %arg3[%c0_5, %c0_6] : memref<1x128xf32, #tpu.memory_space<vmem>>, vector<1x128xf32>
    %c0_7 = arith.constant 0 : index
    %c0_8 = arith.constant 0 : index
    %7 = vector.load %arg4[%c0_7, %c0_8] : memref<1x128xf32, #tpu.memory_space<vmem>>, vector<1x128xf32>
    %8 = vector.shape_cast %5 : vector<256x128xf32> to vector<1x256x128xf32>
    %cst_9 = arith.constant dense<0.000000e+00> : vector<1xf32>
    %9 = vector.multi_reduction <add>, %8, %cst_9 [1, 2] : vector<1x256x128xf32> to vector<1xf32>
    %10 = vector.shape_cast %9 : vector<1xf32> to vector<1x1x1xf32>
    %11 = vector.extract %10[0, 0, 0] : f32 from vector<1x1x1xf32>
    %12 = arith.mulf %5, %5 : vector<256x128xf32>
    %13 = vector.shape_cast %12 : vector<256x128xf32> to vector<1x256x128xf32>
    %cst_10 = arith.constant dense<0.000000e+00> : vector<1xf32>
    %14 = vector.multi_reduction <add>, %13, %cst_10 [1, 2] : vector<1x256x128xf32> to vector<1xf32>
    %15 = vector.shape_cast %14 : vector<1xf32> to vector<1x1x1xf32>
    %16 = vector.extract %15[0, 0, 0] : f32 from vector<1x1x1xf32>
    %cst_11 = arith.constant 6.10351563E-5 : f32
    %17 = arith.mulf %11, %cst_11 : f32
    %cst_12 = arith.constant 6.10351563E-5 : f32
    %18 = arith.mulf %16, %cst_12 : f32
    %19 = arith.mulf %17, %17 : f32
    %20 = arith.subf %18, %19 : f32
    %cst_13 = arith.constant 0.000000e+00 : f32
    %21 = arith.maximumf %20, %cst_13 : f32
    %22 = vector.broadcast %17 : f32 to vector<256x128xf32>
    %23 = arith.subf %5, %22 : vector<256x128xf32>
    %cst_14 = arith.constant 9.99999974E-6 : f32
    %24 = arith.addf %21, %cst_14 : f32
    %25 = math.rsqrt %24 : f32
    %26 = vector.broadcast %25 : f32 to vector<1x128xf32>
    %27 = arith.mulf %26, %6 : vector<1x128xf32>
    %28 = vector.broadcast %27 : vector<1x128xf32> to vector<256x128xf32>
    %29 = arith.mulf %23, %28 : vector<256x128xf32>
    %30 = vector.broadcast %7 : vector<1x128xf32> to vector<256x128xf32>
    %31 = arith.addf %29, %30 : vector<256x128xf32>
    %cst_15 = arith.constant 0.000000e+00 : f32
    %cst_16 = arith.constant 6.000000e+00 : f32
    %32 = vector.broadcast %cst_15 : f32 to vector<256x128xf32>
    %33 = arith.maximumf %32, %31 : vector<256x128xf32>
    %34 = vector.broadcast %cst_16 : f32 to vector<256x128xf32>
    %35 = arith.minimumf %34, %33 : vector<256x128xf32>
    %cst_17 = arith.constant 0.000000e+00 : f32
    %36 = vector.broadcast %cst_17 : f32 to vector<1x24x128xf32>
    %c0_18 = arith.constant 0 : index
    %c0_19 = arith.constant 0 : index
    %c0_20 = arith.constant 0 : index
    %37 = vector.load %arg14[%c0_18, %c0_19, %c0_20] : memref<18x24x128xf32, #tpu.memory_space<vmem>>, vector<1x24x128xf32>
    tpu.vector_store %arg14[%c0_18, %c0_19, %c0_20], %36 {strides = array<i32>} : memref<18x24x128xf32, #tpu.memory_space<vmem>>, vector<1x24x128xf32>,
    %c17 = arith.constant 17 : index
    %c0_21 = arith.constant 0 : index
    %c0_22 = arith.constant 0 : index
    %38 = vector.load %arg14[%c17, %c0_21, %c0_22] : memref<18x24x128xf32, #tpu.memory_space<vmem>>, vector<1x24x128xf32>
    tpu.vector_store %arg14[%c17, %c0_21, %c0_22], %36 {strides = array<i32>} : memref<18x24x128xf32, #tpu.memory_space<vmem>>, vector<1x24x128xf32>,
    %cst_23 = arith.constant 0.000000e+00 : f32
    %39 = vector.broadcast %cst_23 : f32 to vector<18x1x128xf32>
    %c0_24 = arith.constant 0 : index
    %c0_25 = arith.constant 0 : index
    %c0_26 = arith.constant 0 : index
    %40 = vector.load %arg14[%c0_24, %c0_25, %c0_26] : memref<18x24x128xf32, #tpu.memory_space<vmem>>, vector<18x1x128xf32>
    tpu.vector_store %arg14[%c0_24, %c0_25, %c0_26], %39 {strides = array<i32>} : memref<18x24x128xf32, #tpu.memory_space<vmem>>, vector<18x1x128xf32>,
    %c0_27 = arith.constant 0 : index
    %c17_28 = arith.constant 17 : index
    %c0_29 = arith.constant 0 : index
    %41 = vector.load %arg14[%c0_27, %c17_28, %c0_29] : memref<18x24x128xf32, #tpu.memory_space<vmem>>, vector<18x1x128xf32>
    tpu.vector_store %arg14[%c0_27, %c17_28, %c0_29], %39 {strides = array<i32>} : memref<18x24x128xf32, #tpu.memory_space<vmem>>, vector<18x1x128xf32>,
    %42 = vector.shape_cast %35 : vector<256x128xf32> to vector<16x16x128xf32>
    %c1 = arith.constant 1 : index
    %c1_30 = arith.constant 1 : index
    %c0_31 = arith.constant 0 : index
    %43 = vector.load %arg14[%c1, %c1_30, %c0_31] : memref<18x24x128xf32, #tpu.memory_space<vmem>>, vector<16x16x128xf32>
    tpu.vector_store %arg14[%c1, %c1_30, %c0_31], %42 {strides = array<i32>} : memref<18x24x128xf32, #tpu.memory_space<vmem>>, vector<16x16x128xf32>,
    %c0_32 = arith.constant 0 : index
    %c0_33 = arith.constant 0 : index
    %c0_34 = arith.constant 0 : index
    %44 = vector.load %arg5[%c0_32, %c0_33, %c0_34] : memref<3x3x128xf32, #tpu.memory_space<vmem>>, vector<3x3x128xf32>
    %cst_35 = arith.constant 0.000000e+00 : f32
    %45 = vector.broadcast %cst_35 : f32 to vector<16x16x128xf32>
    %c0_36 = arith.constant 0 : index
    %c0_37 = arith.constant 0 : index
    %c0_38 = arith.constant 0 : index
    %46 = vector.load %arg14[%c0_36, %c0_37, %c0_38] : memref<18x24x128xf32, #tpu.memory_space<vmem>>, vector<16x24x128xf32>
    %47 = vector.extract_strided_slice %46 {offsets = [0, 0, 0], sizes = [16, 16, 128], strides = [1, 1, 1]} : vector<16x24x128xf32> to vector<16x16x128xf32>
    %48 = vector.extract_strided_slice %44 {offsets = [0, 0, 0], sizes = [1, 1, 128], strides = [1, 1, 1]} : vector<3x3x128xf32> to vector<1x1x128xf32>
    %49 = vector.shape_cast %48 : vector<1x1x128xf32> to vector<128xf32>
    %50 = vector.shape_cast %49 : vector<128xf32> to vector<1x1x128xf32>
    %51 = vector.broadcast %50 : vector<1x1x128xf32> to vector<16x16x128xf32>
    %52 = arith.mulf %47, %51 : vector<16x16x128xf32>
    %53 = arith.addf %45, %52 : vector<16x16x128xf32>
    %54 = vector.extract_strided_slice %46 {offsets = [0, 1, 0], sizes = [16, 16, 128], strides = [1, 1, 1]} : vector<16x24x128xf32> to vector<16x16x128xf32>
    %55 = vector.extract_strided_slice %44 {offsets = [0, 1, 0], sizes = [1, 1, 128], strides = [1, 1, 1]} : vector<3x3x128xf32> to vector<1x1x128xf32>
    %56 = vector.shape_cast %55 : vector<1x1x128xf32> to vector<128xf32>
    %57 = vector.shape_cast %56 : vector<128xf32> to vector<1x1x128xf32>
    %58 = vector.broadcast %57 : vector<1x1x128xf32> to vector<16x16x128xf32>
    %59 = arith.mulf %54, %58 : vector<16x16x128xf32>
    %60 = arith.addf %53, %59 : vector<16x16x128xf32>
    %61 = vector.extract_strided_slice %46 {offsets = [0, 2, 0], sizes = [16, 16, 128], strides = [1, 1, 1]} : vector<16x24x128xf32> to vector<16x16x128xf32>
    %62 = vector.extract_strided_slice %44 {offsets = [0, 2, 0], sizes = [1, 1, 128], strides = [1, 1, 1]} : vector<3x3x128xf32> to vector<1x1x128xf32>
    %63 = vector.shape_cast %62 : vector<1x1x128xf32> to vector<128xf32>
    %64 = vector.shape_cast %63 : vector<128xf32> to vector<1x1x128xf32>
    %65 = vector.broadcast %64 : vector<1x1x128xf32> to vector<16x16x128xf32>
    %66 = arith.mulf %61, %65 : vector<16x16x128xf32>
    %67 = arith.addf %60, %66 : vector<16x16x128xf32>
    %c1_39 = arith.constant 1 : index
    %c0_40 = arith.constant 0 : index
    %c0_41 = arith.constant 0 : index
    %68 = vector.load %arg14[%c1_39, %c0_40, %c0_41] : memref<18x24x128xf32, #tpu.memory_space<vmem>>, vector<16x24x128xf32>
    %69 = vector.extract_strided_slice %68 {offsets = [0, 0, 0], sizes = [16, 16, 128], strides = [1, 1, 1]} : vector<16x24x128xf32> to vector<16x16x128xf32>
    %70 = vector.extract_strided_slice %44 {offsets = [1, 0, 0], sizes = [1, 1, 128], strides = [1, 1, 1]} : vector<3x3x128xf32> to vector<1x1x128xf32>
    %71 = vector.shape_cast %70 : vector<1x1x128xf32> to vector<128xf32>
    %72 = vector.shape_cast %71 : vector<128xf32> to vector<1x1x128xf32>
    %73 = vector.broadcast %72 : vector<1x1x128xf32> to vector<16x16x128xf32>
    %74 = arith.mulf %69, %73 : vector<16x16x128xf32>
    %75 = arith.addf %67, %74 : vector<16x16x128xf32>
    %76 = vector.extract_strided_slice %68 {offsets = [0, 1, 0], sizes = [16, 16, 128], strides = [1, 1, 1]} : vector<16x24x128xf32> to vector<16x16x128xf32>
    %77 = vector.extract_strided_slice %44 {offsets = [1, 1, 0], sizes = [1, 1, 128], strides = [1, 1, 1]} : vector<3x3x128xf32> to vector<1x1x128xf32>
    %78 = vector.shape_cast %77 : vector<1x1x128xf32> to vector<128xf32>
    %79 = vector.shape_cast %78 : vector<128xf32> to vector<1x1x128xf32>
    %80 = vector.broadcast %79 : vector<1x1x128xf32> to vector<16x16x128xf32>
    %81 = arith.mulf %76, %80 : vector<16x16x128xf32>
    %82 = arith.addf %75, %81 : vector<16x16x128xf32>
    %83 = vector.extract_strided_slice %68 {offsets = [0, 2, 0], sizes = [16, 16, 128], strides = [1, 1, 1]} : vector<16x24x128xf32> to vector<16x16x128xf32>
    %84 = vector.extract_strided_slice %44 {offsets = [1, 2, 0], sizes = [1, 1, 128], strides = [1, 1, 1]} : vector<3x3x128xf32> to vector<1x1x128xf32>
    %85 = vector.shape_cast %84 : vector<1x1x128xf32> to vector<128xf32>
    %86 = vector.shape_cast %85 : vector<128xf32> to vector<1x1x128xf32>
    %87 = vector.broadcast %86 : vector<1x1x128xf32> to vector<16x16x128xf32>
    %88 = arith.mulf %83, %87 : vector<16x16x128xf32>
    %89 = arith.addf %82, %88 : vector<16x16x128xf32>
    %c2 = arith.constant 2 : index
    %c0_42 = arith.constant 0 : index
    %c0_43 = arith.constant 0 : index
    %90 = vector.load %arg14[%c2, %c0_42, %c0_43] : memref<18x24x128xf32, #tpu.memory_space<vmem>>, vector<16x24x128xf32>
    %91 = vector.extract_strided_slice %90 {offsets = [0, 0, 0], sizes = [16, 16, 128], strides = [1, 1, 1]} : vector<16x24x128xf32> to vector<16x16x128xf32>
    %92 = vector.extract_strided_slice %44 {offsets = [2, 0, 0], sizes = [1, 1, 128], strides = [1, 1, 1]} : vector<3x3x128xf32> to vector<1x1x128xf32>
    %93 = vector.shape_cast %92 : vector<1x1x128xf32> to vector<128xf32>
    %94 = vector.shape_cast %93 : vector<128xf32> to vector<1x1x128xf32>
    %95 = vector.broadcast %94 : vector<1x1x128xf32> to vector<16x16x128xf32>
    %96 = arith.mulf %91, %95 : vector<16x16x128xf32>
    %97 = arith.addf %89, %96 : vector<16x16x128xf32>
    %98 = vector.extract_strided_slice %90 {offsets = [0, 1, 0], sizes = [16, 16, 128], strides = [1, 1, 1]} : vector<16x24x128xf32> to vector<16x16x128xf32>
    %99 = vector.extract_strided_slice %44 {offsets = [2, 1, 0], sizes = [1, 1, 128], strides = [1, 1, 1]} : vector<3x3x128xf32> to vector<1x1x128xf32>
    %100 = vector.shape_cast %99 : vector<1x1x128xf32> to vector<128xf32>
    %101 = vector.shape_cast %100 : vector<128xf32> to vector<1x1x128xf32>
    %102 = vector.broadcast %101 : vector<1x1x128xf32> to vector<16x16x128xf32>
    %103 = arith.mulf %98, %102 : vector<16x16x128xf32>
    %104 = arith.addf %97, %103 : vector<16x16x128xf32>
    %105 = vector.extract_strided_slice %90 {offsets = [0, 2, 0], sizes = [16, 16, 128], strides = [1, 1, 1]} : vector<16x24x128xf32> to vector<16x16x128xf32>
    %106 = vector.extract_strided_slice %44 {offsets = [2, 2, 0], sizes = [1, 1, 128], strides = [1, 1, 1]} : vector<3x3x128xf32> to vector<1x1x128xf32>
    %107 = vector.shape_cast %106 : vector<1x1x128xf32> to vector<128xf32>
    %108 = vector.shape_cast %107 : vector<128xf32> to vector<1x1x128xf32>
    %109 = vector.broadcast %108 : vector<1x1x128xf32> to vector<16x16x128xf32>
    %110 = arith.mulf %105, %109 : vector<16x16x128xf32>
    %111 = arith.addf %104, %110 : vector<16x16x128xf32>
    %112 = vector.shape_cast %111 : vector<16x16x128xf32> to vector<256x128xf32>
    %c0_44 = arith.constant 0 : index
    %c0_45 = arith.constant 0 : index
    %113 = vector.load %arg6[%c0_44, %c0_45] : memref<1x128xf32, #tpu.memory_space<vmem>>, vector<1x128xf32>
    %c0_46 = arith.constant 0 : index
    %c0_47 = arith.constant 0 : index
    %114 = vector.load %arg7[%c0_46, %c0_47] : memref<1x128xf32, #tpu.memory_space<vmem>>, vector<1x128xf32>
    %115 = vector.shape_cast %112 : vector<256x128xf32> to vector<1x256x128xf32>
    %cst_48 = arith.constant dense<0.000000e+00> : vector<1xf32>
    %116 = vector.multi_reduction <add>, %115, %cst_48 [1, 2] : vector<1x256x128xf32> to vector<1xf32>
    %117 = vector.shape_cast %116 : vector<1xf32> to vector<1x1x1xf32>
    %118 = vector.extract %117[0, 0, 0] : f32 from vector<1x1x1xf32>
    %119 = arith.mulf %112, %112 : vector<256x128xf32>
    %120 = vector.shape_cast %119 : vector<256x128xf32> to vector<1x256x128xf32>
    %cst_49 = arith.constant dense<0.000000e+00> : vector<1xf32>
    %121 = vector.multi_reduction <add>, %120, %cst_49 [1, 2] : vector<1x256x128xf32> to vector<1xf32>
    %122 = vector.shape_cast %121 : vector<1xf32> to vector<1x1x1xf32>
    %123 = vector.extract %122[0, 0, 0] : f32 from vector<1x1x1xf32>
    %cst_50 = arith.constant 6.10351563E-5 : f32
    %124 = arith.mulf %118, %cst_50 : f32
    %cst_51 = arith.constant 6.10351563E-5 : f32
    %125 = arith.mulf %123, %cst_51 : f32
    %126 = arith.mulf %124, %124 : f32
    %127 = arith.subf %125, %126 : f32
    %cst_52 = arith.constant 0.000000e+00 : f32
    %128 = arith.maximumf %127, %cst_52 : f32
    %129 = vector.broadcast %124 : f32 to vector<256x128xf32>
    %130 = arith.subf %112, %129 : vector<256x128xf32>
    %cst_53 = arith.constant 9.99999974E-6 : f32
    %131 = arith.addf %128, %cst_53 : f32
    %132 = math.rsqrt %131 : f32
    %133 = vector.broadcast %132 : f32 to vector<1x128xf32>
    %134 = arith.mulf %133, %113 : vector<1x128xf32>
    %135 = vector.broadcast %134 : vector<1x128xf32> to vector<256x128xf32>
    %136 = arith.mulf %130, %135 : vector<256x128xf32>
    %137 = vector.broadcast %114 : vector<1x128xf32> to vector<256x128xf32>
    %138 = arith.addf %136, %137 : vector<256x128xf32>
    %cst_54 = arith.constant 0.000000e+00 : f32
    %cst_55 = arith.constant 6.000000e+00 : f32
    %139 = vector.broadcast %cst_54 : f32 to vector<256x128xf32>
    %140 = arith.maximumf %139, %138 : vector<256x128xf32>
    %141 = vector.broadcast %cst_55 : f32 to vector<256x128xf32>
    %142 = arith.minimumf %141, %140 : vector<256x128xf32>
    %cst_56 = arith.constant dense<0.000000e+00> : vector<128xf32>
    %143 = vector.multi_reduction <add>, %142, %cst_56 [0] : vector<256x128xf32> to vector<128xf32>
    %144 = vector.shape_cast %143 : vector<128xf32> to vector<1x128xf32>
    %cst_57 = arith.constant 2.560000e+02 : f32
    %145 = vector.broadcast %cst_57 : f32 to vector<1x128xf32>
    %146 = arith.divf %144, %145 : vector<1x128xf32>
    %c0_58 = arith.constant 0 : index
    %c0_59 = arith.constant 0 : index
    %147 = vector.load %arg8[%c0_58, %c0_59] : memref<128x4xf32, #tpu.memory_space<vmem>>, vector<128x4xf32>
    %cst_60 = arith.constant dense<0.000000e+00> : vector<1x4xf32>
    %148 = tpu.matmul %146, %147, %cst_60 {dimension_numbers = #tpu.dot_dimension_numbers<[1], [0], [0], [1], [0, 0, 1, 1], [], []>} : vector<1x128xf32>, vector<128x4xf32>, vector<1x4xf32> -> vector<1x4xf32>
    %cst_61 = arith.constant 0.000000e+00 : f32
    %149 = vector.broadcast %cst_61 : f32 to vector<1x4xf32>
    %150 = arith.maximumf %148, %149 : vector<1x4xf32>
    %c0_62 = arith.constant 0 : index
    %c0_63 = arith.constant 0 : index
    %151 = vector.load %arg9[%c0_62, %c0_63] : memref<4x128xf32, #tpu.memory_space<vmem>>, vector<4x128xf32>
    %cst_64 = arith.constant dense<0.000000e+00> : vector<1x128xf32>
    %152 = tpu.matmul %150, %151, %cst_64 {dimension_numbers = #tpu.dot_dimension_numbers<[1], [0], [0], [1], [0, 0, 1, 1], [], []>} : vector<1x4xf32>, vector<4x128xf32>, vector<1x128xf32> -> vector<1x128xf32>
    %cst_65 = arith.constant 0.000000e+00 : f32
    %153 = vector.broadcast %cst_65 : f32 to vector<1x128xf32>
    %154 = arith.subf %153, %152 : vector<1x128xf32>
    %155 = math.exp %154 : vector<1x128xf32>
    %cst_66 = arith.constant 1.000000e+00 : f32
    %156 = vector.broadcast %cst_66 : f32 to vector<1x128xf32>
    %157 = arith.addf %156, %155 : vector<1x128xf32>
    %cst_67 = arith.constant 1.000000e+00 : f32
    %158 = vector.broadcast %cst_67 : f32 to vector<1x128xf32>
    %159 = arith.divf %158, %157 : vector<1x128xf32>
    %160 = vector.broadcast %159 : vector<1x128xf32> to vector<256x128xf32>
    %161 = arith.mulf %142, %160 : vector<256x128xf32>
    %162 = arith.truncf %161 : vector<256x128xf32> to vector<256x128xbf16>
    %c0_68 = arith.constant 0 : index
    %c0_69 = arith.constant 0 : index
    %163 = vector.load %arg10[%c0_68, %c0_69] : memref<128x128xbf16, #tpu.memory_space<vmem>>, vector<128x128xbf16>
    %cst_70 = arith.constant dense<0.000000e+00> : vector<256x128xf32>
    %164 = tpu.matmul %162, %163, %cst_70 {dimension_numbers = #tpu.dot_dimension_numbers<[1], [0], [0], [1], [0, 0, 1, 1], [], []>} : vector<256x128xbf16>, vector<128x128xbf16>, vector<256x128xf32> -> vector<256x128xf32>
    %c0_71 = arith.constant 0 : index
    %c0_72 = arith.constant 0 : index
    %165 = vector.load %arg11[%c0_71, %c0_72] : memref<1x128xf32, #tpu.memory_space<vmem>>, vector<1x128xf32>
    %c0_73 = arith.constant 0 : index
    %c0_74 = arith.constant 0 : index
    %166 = vector.load %arg12[%c0_73, %c0_74] : memref<1x128xf32, #tpu.memory_space<vmem>>, vector<1x128xf32>
    %167 = vector.shape_cast %164 : vector<256x128xf32> to vector<1x256x128xf32>
    %cst_75 = arith.constant dense<0.000000e+00> : vector<1xf32>
    %168 = vector.multi_reduction <add>, %167, %cst_75 [1, 2] : vector<1x256x128xf32> to vector<1xf32>
    %169 = vector.shape_cast %168 : vector<1xf32> to vector<1x1x1xf32>
    %170 = vector.extract %169[0, 0, 0] : f32 from vector<1x1x1xf32>
    %171 = arith.mulf %164, %164 : vector<256x128xf32>
    %172 = vector.shape_cast %171 : vector<256x128xf32> to vector<1x256x128xf32>
    %cst_76 = arith.constant dense<0.000000e+00> : vector<1xf32>
    %173 = vector.multi_reduction <add>, %172, %cst_76 [1, 2] : vector<1x256x128xf32> to vector<1xf32>
    %174 = vector.shape_cast %173 : vector<1xf32> to vector<1x1x1xf32>
    %175 = vector.extract %174[0, 0, 0] : f32 from vector<1x1x1xf32>
    %cst_77 = arith.constant 2.44140625E-4 : f32
    %176 = arith.mulf %170, %cst_77 : f32
    %cst_78 = arith.constant 2.44140625E-4 : f32
    %177 = arith.mulf %175, %cst_78 : f32
    %178 = arith.mulf %176, %176 : f32
    %179 = arith.subf %177, %178 : f32
    %cst_79 = arith.constant 0.000000e+00 : f32
    %180 = arith.maximumf %179, %cst_79 : f32
    %181 = vector.broadcast %176 : f32 to vector<256x128xf32>
    %182 = arith.subf %164, %181 : vector<256x128xf32>
    %cst_80 = arith.constant 9.99999974E-6 : f32
    %183 = arith.addf %180, %cst_80 : f32
    %184 = math.rsqrt %183 : f32
    %185 = vector.broadcast %184 : f32 to vector<1x128xf32>
    %186 = arith.mulf %185, %165 : vector<1x128xf32>
    %187 = vector.broadcast %186 : vector<1x128xf32> to vector<256x128xf32>
    %188 = arith.mulf %182, %187 : vector<256x128xf32>
    %189 = vector.broadcast %166 : vector<1x128xf32> to vector<256x128xf32>
    %190 = arith.addf %188, %189 : vector<256x128xf32>
    %191 = arith.addf %2, %190 : vector<256x128xf32>
    %192 = vector.shape_cast %191 : vector<256x128xf32> to vector<16x16x128xf32>
    %c0_81 = arith.constant 0 : index
    %c0_82 = arith.constant 0 : index
    %c0_83 = arith.constant 0 : index
    %c0_84 = arith.constant 0 : index
    %193 = vector.load %arg13[%c0_81, %c0_82, %c0_83, %c0_84] : memref<1x16x16x128xf32, #tpu.memory_space<vmem>>, vector<1x16x16x128xf32>
    %194 = vector.shape_cast %193 : vector<1x16x16x128xf32> to vector<16x16x128xf32>
    %195 = vector.shape_cast %192 : vector<16x16x128xf32> to vector<1x16x16x128xf32>
    tpu.vector_store %arg13[%c0_81, %c0_82, %c0_83, %c0_84], %195 {strides = array<i32>} : memref<1x16x16x128xf32, #tpu.memory_space<vmem>>, vector<1x16x16x128xf32>,
    return
  }
  func.func @transform_0(%arg0: i32) -> (i32, i32, i32, i32) {
    %c0_i32 = arith.constant 0 : i32
    %c0_i32_0 = arith.constant 0 : i32
    %c0_i32_1 = arith.constant 0 : i32
    %c0_i32_2 = arith.constant 0 : i32
    return %arg0, %c0_i32, %c0_i32_0, %c0_i32_1 : i32, i32, i32, i32
  }
  func.func @transform_1(%arg0: i32) -> (i32, i32) {
    %c0_i32 = arith.constant 0 : i32
    %c0_i32_0 = arith.constant 0 : i32
    %c0_i32_1 = arith.constant 0 : i32
    return %c0_i32, %c0_i32_0 : i32, i32
  }
  func.func @transform_2(%arg0: i32) -> (i32, i32) {
    %c0_i32 = arith.constant 0 : i32
    %c0_i32_0 = arith.constant 0 : i32
    %c0_i32_1 = arith.constant 0 : i32
    return %c0_i32, %c0_i32_0 : i32, i32
  }
  func.func @transform_3(%arg0: i32) -> (i32, i32) {
    %c0_i32 = arith.constant 0 : i32
    %c0_i32_0 = arith.constant 0 : i32
    %c0_i32_1 = arith.constant 0 : i32
    return %c0_i32, %c0_i32_0 : i32, i32
  }
  func.func @transform_4(%arg0: i32) -> (i32, i32, i32) {
    %c0_i32 = arith.constant 0 : i32
    %c0_i32_0 = arith.constant 0 : i32
    %c0_i32_1 = arith.constant 0 : i32
    %c0_i32_2 = arith.constant 0 : i32
    return %c0_i32, %c0_i32_0, %c0_i32_1 : i32, i32, i32
  }
  func.func @transform_5(%arg0: i32) -> (i32, i32) {
    %c0_i32 = arith.constant 0 : i32
    %c0_i32_0 = arith.constant 0 : i32
    %c0_i32_1 = arith.constant 0 : i32
    return %c0_i32, %c0_i32_0 : i32, i32
  }
  func.func @transform_6(%arg0: i32) -> (i32, i32) {
    %c0_i32 = arith.constant 0 : i32
    %c0_i32_0 = arith.constant 0 : i32
    %c0_i32_1 = arith.constant 0 : i32
    return %c0_i32, %c0_i32_0 : i32, i32
  }
  func.func @transform_7(%arg0: i32) -> (i32, i32) {
    %c0_i32 = arith.constant 0 : i32
    %c0_i32_0 = arith.constant 0 : i32
    %c0_i32_1 = arith.constant 0 : i32
    return %c0_i32, %c0_i32_0 : i32, i32
  }
  func.func @transform_8(%arg0: i32) -> (i32, i32) {
    %c0_i32 = arith.constant 0 : i32
    %c0_i32_0 = arith.constant 0 : i32
    %c0_i32_1 = arith.constant 0 : i32
    return %c0_i32, %c0_i32_0 : i32, i32
  }
  func.func @transform_9(%arg0: i32) -> (i32, i32) {
    %c0_i32 = arith.constant 0 : i32
    %c0_i32_0 = arith.constant 0 : i32
    %c0_i32_1 = arith.constant 0 : i32
    return %c0_i32, %c0_i32_0 : i32, i32
  }
  func.func @transform_10(%arg0: i32) -> (i32, i32) {
    %c0_i32 = arith.constant 0 : i32
    %c0_i32_0 = arith.constant 0 : i32
    %c0_i32_1 = arith.constant 0 : i32
    return %c0_i32, %c0_i32_0 : i32, i32
  }
  func.func @transform_11(%arg0: i32) -> (i32, i32) {
    %c0_i32 = arith.constant 0 : i32
    %c0_i32_0 = arith.constant 0 : i32
    %c0_i32_1 = arith.constant 0 : i32
    return %c0_i32, %c0_i32_0 : i32, i32
  }
  func.func @transform_12(%arg0: i32) -> (i32, i32, i32, i32) {
    %c0_i32 = arith.constant 0 : i32
    %c0_i32_0 = arith.constant 0 : i32
    %c0_i32_1 = arith.constant 0 : i32
    %c0_i32_2 = arith.constant 0 : i32
    return %arg0, %c0_i32, %c0_i32_0, %c0_i32_1 : i32, i32, i32, i32
  }
}

</mosaic_0001>

<llo_original>
// kernel: tpu_custom_call.1
$region0: #{tpu_custom_call.1}
  #allocation0 [shape = 'u32[]', space=smem, size = 0x4, offset = 0x4, fixed_abs, tag = 'smem constant byte address 0x4 - core index']
  #allocation1 [shape = 'u32[144,128]{1,0:T(1,128)}', space=vmem, size = 0x12000, scoped, tag = 'internal scratch']
  #allocation2 [shape = 'f32[18,24,128]{2,1,0:T(8,128)}', space=vmem, size = 0x36000, scoped, tag = 'scratch operand']
  %s0 = inlined_call_operand.hbm [shape: f32[2,16,16,128], index: 0, kind: input, shape index: {}]
  %s1 = inlined_call_operand.vmem [shape: bf16[128,128], index: 1, kind: input, shape index: {}]
  %s2 = inlined_call_operand.vmem [shape: f32[1,128], index: 2, kind: input, shape index: {}]
  %s3 = inlined_call_operand.vmem [shape: f32[1,128], index: 3, kind: input, shape index: {}]
  %s4 = inlined_call_operand.vmem [shape: f32[3,3,128], index: 4, kind: input, shape index: {}]
  %s5 = inlined_call_operand.hbm [shape: f32[1,128], index: 5, kind: input, shape index: {}]
  %s6 = inlined_call_operand.vmem [shape: f32[1,128], index: 6, kind: input, shape index: {}]
  %s7 = inlined_call_operand.vmem [shape: f32[128,4], index: 7, kind: input, shape index: {}]
  %s8 = inlined_call_operand.vmem [shape: f32[4,128], index: 8, kind: input, shape index: {}]
  %s9 = inlined_call_operand.vmem [shape: bf16[128,128], index: 9, kind: input, shape index: {}]
  %s10 = inlined_call_operand.vmem [shape: f32[1,128], index: 10, kind: input, shape index: {}]
  %s11 = inlined_call_operand.vmem [shape: f32[1,128], index: 11, kind: input, shape index: {}]
  %s12 = inlined_call_operand.hbm [shape: f32[2,16,16,128], index: 12, kind: output, shape index: {}]
  %s13 = sld [smem:[#allocation0]]
  $region89: #{tpu_custom_call.1} parent=0
    _
  %s15 = ssub.s32 1, %s13
  %s16 = scalar_select 0, %s15, %s13
  $region1: #{tpu_custom_call.1} parent=0
    #allocation3 [shape = 'u8[262144]{0}', space=vmem, size = 0x40000, scoped, tag = 'input window, operand 0']
    #allocation4 [shape = 's32[2]{0}', space=sflag, size = 0x8, scoped, tag = 'scoped memory for tpu_custom_call.1']
    #allocation5 [shape = 's32[2]{0}', space=sflag, size = 0x8, scoped, tag = 'scoped memory for tpu_custom_call.1']
    #allocation6 [shape = 'u8[512]{0}', space=vmem, size = 0x400, scoped, tag = 'input window, operand 5, single buffered']
    #allocation7 [shape = 's32[1]{0}', space=sflag, size = 0x4, scoped, tag = 'scoped memory for tpu_custom_call.1']
    #allocation8 [shape = 'u8[262144]{0}', space=vmem, size = 0x40000, scoped, tag = 'output window, operand 0']
    %17 = vsyncpa [#allocation4], 0
    %s18 = scalar_lea.sflag [#allocation4], 1
    %19 = vsyncpa %s18, 0
    %20 = vsyncpa [#allocation7], 0
    %21 = vsyncpa [#allocation5], 0
    %s22 = scalar_lea.sflag [#allocation5], 1
    %23 = vsyncpa %s22, 0
    loop: start=0, step=1, limit=4
    $region2: #{tpu_custom_call.1} parent=1 // loop_pre_header
      _
    $region3: #{tpu_custom_call.1} parent=1 // loop_header
      %s25 = sphi 0, %s29
      %p26 = scmp.ge.s32.totalorder %s25, 4
      %s35 = sphi 0, %s37
      %s38 = sphi 0, %s35
      %s39 = sphi 0, %s38
      %s55 = sphi 0, %s39
      %s59 = sphi 0, %s59
      %s61 = sphi 0, %s59
      %s62 = sphi 0, %s61
      %s76 = sphi 0, %s62
      %s80 = sphi 0, %s80
      %s82 = sphi 0, %s80
      %s83 = sphi 0, %s82
      %s97 = sphi 0, %s83
      %s101 = sphi 0, %s101
      %s103 = sphi 0, %s101
      %s104 = sphi 0, %s103
      %s118 = sphi 0, %s104
      %s122 = sphi 0, %s122
      %s124 = sphi 0, %s122
      %s125 = sphi 0, %s124
      %s139 = sphi 0, %s125
      %s143 = sphi 0, %s143
      %s145 = sphi 0, %s143
      %s146 = sphi 0, %s145
      %s160 = sphi 0, %s146
      %s164 = sphi 0, %s164
      %s166 = sphi 0, %s164
      %s167 = sphi 0, %s166
      %s181 = sphi 0, %s167
      %s185 = sphi 0, %s185
      %s187 = sphi 0, %s185
      %s188 = sphi 0, %s187
      %s202 = sphi 0, %s188
      %s206 = sphi 0, %s206
      %s208 = sphi 0, %s206
      %s209 = sphi 0, %s208
      %s223 = sphi 0, %s209
      %s227 = sphi 0, %s227
      %s229 = sphi 0, %s227
      %s230 = sphi 0, %s229
      %s244 = sphi 0, %s230
      %s248 = sphi 0, %s248
      %s250 = sphi 0, %s248
      %s251 = sphi 0, %s250
      %s265 = sphi 0, %s251
      %s269 = sphi 0, %s269
      %s271 = sphi 0, %s269
      %s272 = sphi 0, %s271
      %s286 = sphi 0, %s272
      %s292 = sphi 0, %s294
      %s295 = sphi 0, %s292
      %s296 = sphi 0, %s295
      %s312 = sphi 0, %s296
    $region4: #{tpu_custom_call.1} parent=1 // loop_header_branch
      %28 = sbr.rel (%p26) target = $region8
    $region5: #{tpu_custom_call.1} parent=1 // loop_body
      %s30 = ssub.s32 %s25, 1
      %s31 = ssub.s32 %s25, 2
      %s32 = sadd.s32 %s25, 1
      %s33 = ssub.s32 %s25, %s32
      %p34 = scmp.eq.s32.totalorder %s33, 0
      %s36 = sadd.s32 %s35, 1
      %s37 = scalar_select %p34, %s35, %s36
      %p40 = pneg %p34
      %p41 = scmp.eq.s32.totalorder %s25, 1
      %p42 = por %p40, %p41
      %p43 = scmp.ne.s32.totalorder %s35, %s38
      %p44 = scmp.eq.s32.totalorder %s25, 0
      %p45 = por %p43, %p44
      %p46 = scmp.ne.s32.totalorder %s35, %s38
      %p47 = scmp.eq.s32.totalorder %s30, 1
      %p48 = por %p46, %p47
      %p49 = scmp.ne.s32.totalorder %s38, %s39
      %p50 = scmp.eq.s32.totalorder %s30, 0
      %p51 = por %p49, %p50
      %p52 = scmp.ne.s32.totalorder %s38, %s39
      %p53 = scmp.eq.s32.totalorder %s31, 1
      %p54 = por %p52, %p53
      %p56 = scmp.ne.s32.totalorder %s39, %s55
      %p57 = scmp.eq.s32.totalorder %s31, 0
      %p58 = por %p56, %p57
      %s60 = sadd.s32 %s59, 1
      %p63 = scmp.eq.s32.totalorder %s25, 1
      %p64 = scmp.ne.s32.totalorder %s59, %s61
      %p65 = scmp.eq.s32.totalorder %s25, 0
      %p66 = por %p64, %p65
      %p67 = scmp.ne.s32.totalorder %s59, %s61
      %p68 = scmp.eq.s32.totalorder %s30, 1
      %p69 = por %p67, %p68
      %p70 = scmp.ne.s32.totalorder %s61, %s62
      %p71 = scmp.eq.s32.totalorder %s30, 0
      %p72 = por %p70, %p71
      %p73 = scmp.ne.s32.totalorder %s61, %s62
      %p74 = scmp.eq.s32.totalorder %s31, 1
      %p75 = por %p73, %p74
      %p77 = scmp.ne.s32.totalorder %s62, %s76
      %p78 = scmp.eq.s32.totalorder %s31, 0
      %p79 = por %p77, %p78
      %s81 = sadd.s32 %s80, 1
      %p84 = scmp.eq.s32.totalorder %s25, 1
      %p85 = scmp.ne.s32.totalorder %s80, %s82
      %p86 = scmp.eq.s32.totalorder %s25, 0
      %p87 = por %p85, %p86
      %p88 = scmp.ne.s32.totalorder %s80, %s82
      %p89 = scmp.eq.s32.totalorder %s30, 1
      %p90 = por %p88, %p89
      %p91 = scmp.ne.s32.totalorder %s82, %s83
      %p92 = scmp.eq.s32.totalorder %s30, 0
      %p93 = por %p91, %p92
      %p94 = scmp.ne.s32.totalorder %s82, %s83
      %p95 = scmp.eq.s32.totalorder %s31, 1
      %p96 = por %p94, %p95
      %p98 = scmp.ne.s32.totalorder %s83, %s97
      %p99 = scmp.eq.s32.totalorder %s31, 0
      %p100 = por %p98, %p99
      %s102 = sadd.s32 %s101, 1
      %p105 = scmp.eq.s32.totalorder %s25, 1
      %p106 = scmp.ne.s32.totalorder %s101, %s103
      %p107 = scmp.eq.s32.totalorder %s25, 0
      %p108 = por %p106, %p107
      %p109 = scmp.ne.s32.totalorder %s101, %s103
      %p110 = scmp.eq.s32.totalorder %s30, 1
      %p111 = por %p109, %p110
      %p112 = scmp.ne.s32.totalorder %s103, %s104
      %p113 = scmp.eq.s32.totalorder %s30, 0
      %p114 = por %p112, %p113
      %p115 = scmp.ne.s32.totalorder %s103, %s104
      %p116 = scmp.eq.s32.totalorder %s31, 1
      %p117 = por %p115, %p116
      %p119 = scmp.ne.s32.totalorder %s104, %s118
      %p120 = scmp.eq.s32.totalorder %s31, 0
      %p121 = por %p119, %p120
      %s123 = sadd.s32 %s122, 1
      %p126 = scmp.eq.s32.totalorder %s25, 1
      %p127 = scmp.ne.s32.totalorder %s122, %s124
      %p128 = scmp.eq.s32.totalorder %s25, 0
      %p129 = por %p127, %p128
      %p130 = scmp.ne.s32.totalorder %s122, %s124
      %p131 = scmp.eq.s32.totalorder %s30, 1
      %p132 = por %p130, %p131
      %p133 = scmp.ne.s32.totalorder %s124, %s125
      %p134 = scmp.eq.s32.totalorder %s30, 0
      %p135 = por %p133, %p134
      %p136 = scmp.ne.s32.totalorder %s124, %s125
      %p137 = scmp.eq.s32.totalorder %s31, 1
      %p138 = por %p136, %p137
      %p140 = scmp.ne.s32.totalorder %s125, %s139
      %p141 = scmp.eq.s32.totalorder %s31, 0
      %p142 = por %p140, %p141
      %s144 = sadd.s32 %s143, 1
      %p147 = scmp.eq.s32.totalorder %s25, 1
      %p148 = scmp.ne.s32.totalorder %s143, %s145
      %p149 = scmp.eq.s32.totalorder %s25, 0
      %p150 = por %p148, %p149
      %p151 = scmp.ne.s32.totalorder %s143, %s145
      %p152 = scmp.eq.s32.totalorder %s30, 1
      %p153 = por %p151, %p152
      %p154 = scmp.ne.s32.totalorder %s145, %s146
      %p155 = scmp.eq.s32.totalorder %s30, 0
      %p156 = por %p154, %p155
      %p157 = scmp.ne.s32.totalorder %s145, %s146
      %p158 = scmp.eq.s32.totalorder %s31, 1
      %p159 = por %p157, %p158
      %p161 = scmp.ne.s32.totalorder %s146, %s160
      %p162 = scmp.eq.s32.totalorder %s31, 0
      %p163 = por %p161, %p162
      %s165 = sadd.s32 %s164, 1
      %p168 = scmp.eq.s32.totalorder %s25, 1
      %p169 = scmp.ne.s32.totalorder %s164, %s166
      %p170 = scmp.eq.s32.totalorder %s25, 0
      %p171 = por %p169, %p170
      %p172 = scmp.ne.s32.totalorder %s164, %s166
      %p173 = scmp.eq.s32.totalorder %s30, 1
      %p174 = por %p172, %p173
      %p175 = scmp.ne.s32.totalorder %s166, %s167
      %p176 = scmp.eq.s32.totalorder %s30, 0
      %p177 = por %p175, %p176
      %p178 = scmp.ne.s32.totalorder %s166, %s167
      %p179 = scmp.eq.s32.totalorder %s31, 1
      %p180 = por %p178, %p179
      %p182 = scmp.ne.s32.totalorder %s167, %s181
      %p183 = scmp.eq.s32.totalorder %s31, 0
      %p184 = por %p182, %p183
      %s186 = sadd.s32 %s185, 1
      %p189 = scmp.eq.s32.totalorder %s25, 1
      %p190 = scmp.ne.s32.totalorder %s185, %s187
      %p191 = scmp.eq.s32.totalorder %s25, 0
      %p192 = por %p190, %p191
      %p193 = scmp.ne.s32.totalorder %s185, %s187
      %p194 = scmp.eq.s32.totalorder %s30, 1
      %p195 = por %p193, %p194
      %p196 = scmp.ne.s32.totalorder %s187, %s188
      %p197 = scmp.eq.s32.totalorder %s30, 0
      %p198 = por %p196, %p197
      %p199 = scmp.ne.s32.totalorder %s187, %s188
      %p200 = scmp.eq.s32.totalorder %s31, 1
      %p201 = por %p199, %p200
      %p203 = scmp.ne.s32.totalorder %s188, %s202
      %p204 = scmp.eq.s32.totalorder %s31, 0
      %p205 = por %p203, %p204
      %s207 = sadd.s32 %s206, 1
      %p210 = scmp.eq.s32.totalorder %s25, 1
      %p211 = scmp.ne.s32.totalorder %s206, %s208
      %p212 = scmp.eq.s32.totalorder %s25, 0
      %p213 = por %p211, %p212
      %p214 = scmp.ne.s32.totalorder %s206, %s208
      %p215 = scmp.eq.s32.totalorder %s30, 1
      %p216 = por %p214, %p215
      %p217 = scmp.ne.s32.totalorder %s208, %s209
      %p218 = scmp.eq.s32.totalorder %s30, 0
      %p219 = por %p217, %p218
      %p220 = scmp.ne.s32.totalorder %s208, %s209
      %p221 = scmp.eq.s32.totalorder %s31, 1
      %p222 = por %p220, %p221
      %p224 = scmp.ne.s32.totalorder %s209, %s223
      %p225 = scmp.eq.s32.totalorder %s31, 0
      %p226 = por %p224, %p225
      %s228 = sadd.s32 %s227, 1
      %p231 = scmp.eq.s32.totalorder %s25, 1
      %p232 = scmp.ne.s32.totalorder %s227, %s229
      %p233 = scmp.eq.s32.totalorder %s25, 0
      %p234 = por %p232, %p233
      %p235 = scmp.ne.s32.totalorder %s227, %s229
      %p236 = scmp.eq.s32.totalorder %s30, 1
      %p237 = por %p235, %p236
      %p238 = scmp.ne.s32.totalorder %s229, %s230
      %p239 = scmp.eq.s32.totalorder %s30, 0
      %p240 = por %p238, %p239
      %p241 = scmp.ne.s32.totalorder %s229, %s230
      %p242 = scmp.eq.s32.totalorder %s31, 1
      %p243 = por %p241, %p242
      %p245 = scmp.ne.s32.totalorder %s230, %s244
      %p246 = scmp.eq.s32.totalorder %s31, 0
      %p247 = por %p245, %p246
      %s249 = sadd.s32 %s248, 1
      %p252 = scmp.eq.s32.totalorder %s25, 1
      %p253 = scmp.ne.s32.totalorder %s248, %s250
      %p254 = scmp.eq.s32.totalorder %s25, 0
      %p255 = por %p253, %p254
      %p256 = scmp.ne.s32.totalorder %s248, %s250
      %p257 = scmp.eq.s32.totalorder %s30, 1
      %p258 = por %p256, %p257
      %p259 = scmp.ne.s32.totalorder %s250, %s251
      %p260 = scmp.eq.s32.totalorder %s30, 0
      %p261 = por %p259, %p260
      %p262 = scmp.ne.s32.totalorder %s250, %s251
      %p263 = scmp.eq.s32.totalorder %s31, 1
      %p264 = por %p262, %p263
      %p266 = scmp.ne.s32.totalorder %s251, %s265
      %p267 = scmp.eq.s32.totalorder %s31, 0
      %p268 = por %p266, %p267
      %s270 = sadd.s32 %s269, 1
      %p273 = scmp.eq.s32.totalorder %s25, 1
      %p274 = scmp.ne.s32.totalorder %s269, %s271
      %p275 = scmp.eq.s32.totalorder %s25, 0
      %p276 = por %p274, %p275
      %p277 = scmp.ne.s32.totalorder %s269, %s271
      %p278 = scmp.eq.s32.totalorder %s30, 1
      %p279 = por %p277, %p278
      %p280 = scmp.ne.s32.totalorder %s271, %s272
      %p281 = scmp.eq.s32.totalorder %s30, 0
      %p282 = por %p280, %p281
      %p283 = scmp.ne.s32.totalorder %s271, %s272
      %p284 = scmp.eq.s32.totalorder %s31, 1
      %p285 = por %p283, %p284
      %p287 = scmp.ne.s32.totalorder %s272, %s286
      %p288 = scmp.eq.s32.totalorder %s31, 0
      %p289 = por %p287, %p288
      %s290 = ssub.s32 %s25, %s32
      %p291 = scmp.eq.s32.totalorder %s290, 0
      %s293 = sadd.s32 %s292, 1
      %s294 = scalar_select %p291, %s292, %s293
      %p297 = pneg %p291
      %p298 = scmp.eq.s32.totalorder %s25, 1
      %p299 = por %p297, %p298
      %p300 = scmp.ne.s32.totalorder %s292, %s295
      %p301 = scmp.eq.s32.totalorder %s25, 0
      %p302 = por %p300, %p301
      %p303 = scmp.ne.s32.totalorder %s292, %s295
      %p304 = scmp.eq.s32.totalorder %s30, 1
      %p305 = por %p303, %p304
      %p306 = scmp.ne.s32.totalorder %s295, %s296
      %p307 = scmp.eq.s32.totalorder %s30, 0
      %p308 = por %p306, %p307
      %p309 = scmp.ne.s32.totalorder %s295, %s296
      %p310 = scmp.eq.s32.totalorder %s31, 1
      %p311 = por %p309, %p310
      %p313 = scmp.ne.s32.totalorder %s296, %s312
      %p314 = scmp.eq.s32.totalorder %s31, 0
      %p315 = por %p313, %p314
      %p316 = scmp.le.s32.totalorder 1, %s25
      %p317 = scmp.lt.s32.totalorder %s25, 3
      %p318 = pnand %p316, %p317
      %p319 = pneg %p318
      // Predicated region
      $region9: #{tpu_custom_call.1} parent=5 // pred_check
        _
      $region10: #{tpu_custom_call.1} parent=5 // pred_check_branch
        %321 = sbr.rel (%p318) target = $region12
      $region11: #{tpu_custom_call.1} parent=5 // pred_region
        %s322 = ssub.s32 %s25, 1
        // Predicated region
        $region13: #{tpu_custom_call.1} parent=11 // pred_check
          %p323 = pneg %p72
        $region14: #{tpu_custom_call.1} parent=11 // pred_check_branch
          %325 = sbr.rel (%p323) target = $region16
        $region15: #{tpu_custom_call.1} parent=11 // pred_region
          _
        $region16: #{tpu_custom_call.1} parent=11 // pred_fallthru
          _
        // Predicated region
        $region17: #{tpu_custom_call.1} parent=11 // pred_check
          %p326 = pneg %p93
        $region18: #{tpu_custom_call.1} parent=11 // pred_check_branch
          %328 = sbr.rel (%p326) target = $region20
        $region19: #{tpu_custom_call.1} parent=11 // pred_region
          _
        $region20: #{tpu_custom_call.1} parent=11 // pred_fallthru
          _
        // Predicated region
        $region21: #{tpu_custom_call.1} parent=11 // pred_check
          %p329 = pneg %p114
        $region22: #{tpu_custom_call.1} parent=11 // pred_check_branch
          %331 = sbr.rel (%p329) target = $region24
        $region23: #{tpu_custom_call.1} parent=11 // pred_region
          _
        $region24: #{tpu_custom_call.1} parent=11 // pred_fallthru
          _
        // Predicated region
        $region25: #{tpu_custom_call.1} parent=11 // pred_check
          %p332 = pneg %p135
        $region26: #{tpu_custom_call.1} parent=11 // pred_check_branch
          %334 = sbr.rel (%p332) target = $region28
        $region27: #{tpu_custom_call.1} parent=11 // pred_region
          _
        $region28: #{tpu_custom_call.1} parent=11 // pred_fallthru
          _
        // Predicated region
        $region29: #{tpu_custom_call.1} parent=11 // pred_check
          %p335 = pneg %p156
        $region30: #{tpu_custom_call.1} parent=11 // pred_check_branch
          %337 = sbr.rel (%p335) target = $region32
        $region31: #{tpu_custom_call.1} parent=11 // pred_region
          %s339 = ssub.s32 16, 16
          %340 = vsyncadd [#allocation7], %s339
          %s342 = sshll.u32 [#allocation6], 4
          %s343 = int_to_ptr.vmem [resolvable:$true] %s342
          %345 = dma.hbm_to_vmem [thread:$0]  %s5, 16, %s343, [#allocation7]
        $region32: #{tpu_custom_call.1} parent=11 // pred_fallthru
          _
        // Predicated region
        $region33: #{tpu_custom_call.1} parent=11 // pred_check
          %p346 = pneg %p177
        $region34: #{tpu_custom_call.1} parent=11 // pred_check_branch
          %348 = sbr.rel (%p346) target = $region36
        $region35: #{tpu_custom_call.1} parent=11 // pred_region
          _
        $region36: #{tpu_custom_call.1} parent=11 // pred_fallthru
          _
        // Predicated region
        $region37: #{tpu_custom_call.1} parent=11 // pred_check
          %p349 = pneg %p198
        $region38: #{tpu_custom_call.1} parent=11 // pred_check_branch
          %351 = sbr.rel (%p349) target = $region40
        $region39: #{tpu_custom_call.1} parent=11 // pred_region
          _
        $region40: #{tpu_custom_call.1} parent=11 // pred_fallthru
          _
        // Predicated region
        $region41: #{tpu_custom_call.1} parent=11 // pred_check
          %p352 = pneg %p219
        $region42: #{tpu_custom_call.1} parent=11 // pred_check_branch
          %354 = sbr.rel (%p352) target = $region44
        $region43: #{tpu_custom_call.1} parent=11 // pred_region
          _
        $region44: #{tpu_custom_call.1} parent=11 // pred_fallthru
          _
        // Predicated region
        $region45: #{tpu_custom_call.1} parent=11 // pred_check
          %p355 = pneg %p240
        $region46: #{tpu_custom_call.1} parent=11 // pred_check_branch
          %357 = sbr.rel (%p355) target = $region48
        $region47: #{tpu_custom_call.1} parent=11 // pred_region
          _
        $region48: #{tpu_custom_call.1} parent=11 // pred_fallthru
          _
        // Predicated region
        $region49: #{tpu_custom_call.1} parent=11 // pred_check
          %p358 = pneg %p261
        $region50: #{tpu_custom_call.1} parent=11 // pred_check_branch
          %360 = sbr.rel (%p358) target = $region52
        $region51: #{tpu_custom_call.1} parent=11 // pred_region
          _
        $region52: #{tpu_custom_call.1} parent=11 // pred_fallthru
          _
        // Predicated region
        $region53: #{tpu_custom_call.1} parent=11 // pred_check
          %p361 = pneg %p282
        $region54: #{tpu_custom_call.1} parent=11 // pred_check_branch
          %363 = sbr.rel (%p361) target = $region56
        $region55: #{tpu_custom_call.1} parent=11 // pred_region
          _
        $region56: #{tpu_custom_call.1} parent=11 // pred_fallthru
          _
      $region12: #{tpu_custom_call.1} parent=5 // pred_fallthru
        _
      %p364 = scmp.lt.s32.totalorder %s25, 2
      // Predicated region
      $region57: #{tpu_custom_call.1} parent=5 // pred_check
        %p365 = pneg %p364
      $region58: #{tpu_custom_call.1} parent=5 // pred_check_branch
        %367 = sbr.rel (%p365) target = $region60
      $region59: #{tpu_custom_call.1} parent=5 // pred_region
        // Predicated region
        $region61: #{tpu_custom_call.1} parent=59 // pred_check
          %p368 = pneg %p45
        $region62: #{tpu_custom_call.1} parent=59 // pred_check_branch
          %370 = sbr.rel (%p368) target = $region64
        $region63: #{tpu_custom_call.1} parent=59 // pred_region
          %s371 = sand.u32 %s35, 1
          %s372 = scalar_lea.sflag [#allocation4], %s371
          %s373 = sand.u32 %s35, 1
          %s374 = smul.addr %s373, 256
          %s375 = scalar_lea.vmem [#allocation3], %s374
          %s377 = ssub.s32 4096, 4096
          %378 = vsyncadd %s372, %s377
          %s379 = smul.addr %s25, 32
          %s380 = smul.addr %s379, 128
          %s381 = scalar_lea.hbm %s0, %s380
          %s382 = sshll.u32 %s375, 4
          %s383 = int_to_ptr.vmem [resolvable:$true] %s382
          %388 = dma.hbm_to_vmem [thread:$0]  %s381, 4096, %s383, %s372, 128, 128, 8
        $region64: #{tpu_custom_call.1} parent=59 // pred_fallthru
          _
      $region60: #{tpu_custom_call.1} parent=5 // pred_fallthru
        _
      %p389 = scmp.le.s32.totalorder 1, %s25
      %p390 = scmp.lt.s32.totalorder %s25, 3
      %p391 = pnand %p389, %p390
      %p392 = pneg %p391
      // Predicated region
      $region65: #{tpu_custom_call.1} parent=5 // pred_check
        _
      $region66: #{tpu_custom_call.1} parent=5 // pred_check_branch
        %394 = sbr.rel (%p391) target = $region68
      $region67: #{tpu_custom_call.1} parent=5 // pred_region
        %s395 = ssub.s32 %s25, 1
        %s396 = sand.u32 %s38, 1
        %s397 = scalar_lea.sflag [#allocation4], %s396
        %s398 = sand.u32 %s38, 1
        %s399 = smul.addr %s398, 256
        %s400 = scalar_lea.vmem [#allocation3], %s399
        // Predicated region
        $region69: #{tpu_custom_call.1} parent=67 // pred_check
          %p401 = pneg %p51
        $region70: #{tpu_custom_call.1} parent=67 // pred_check_branch
          %403 = sbr.rel (%p401) target = $region72
        $region71: #{tpu_custom_call.1} parent=67 // pred_region
          %404 = dma.done %s397, 4096
        $region72: #{tpu_custom_call.1} parent=67 // pred_fallthru
          _
        // Predicated region
        $region73: #{tpu_custom_call.1} parent=67 // pred_check
          %p405 = pneg %p156
        $region74: #{tpu_custom_call.1} parent=67 // pred_check_branch
          %407 = sbr.rel (%p405) target = $region76
        $region75: #{tpu_custom_call.1} parent=67 // pred_region
          %408 = dma.done [#allocation7], 16
        $region76: #{tpu_custom_call.1} parent=67 // pred_fallthru
          _
        %s409 = sand.u32 %s38, 1
        %s410 = scalar_lea.sflag [#allocation4], %s409
        %s411 = sand.u32 %s38, 1
        %s412 = smul.addr %s411, 256
        %s413 = scalar_lea.vmem [#allocation3], %s412
        %p414 = pneg %p51
        %p415 = pneg %p48
        %p416 = pneg %p72
        %p417 = pneg %p69
        %p418 = pneg %p93
        %p419 = pneg %p90
        %p420 = pneg %p114
        %p421 = pneg %p111
        %p422 = pneg %p135
        %p423 = pneg %p132
        %p424 = pneg %p156
        %p425 = pneg %p153
        %p426 = pneg %p177
        %p427 = pneg %p174
        %p428 = pneg %p198
        %p429 = pneg %p195
        %p430 = pneg %p219
        %p431 = pneg %p216
        %p432 = pneg %p240
        %p433 = pneg %p237
        %p434 = pneg %p261
        %p435 = pneg %p258
        %p436 = pneg %p282
        %p437 = pneg %p279
        %p438 = pneg %p308
        %p439 = pneg %p305
        %s440 = sand.u32 %s295, 1
        %s441 = scalar_lea.sflag [#allocation5], %s440
        %s442 = sand.u32 %s295, 1
        %s443 = smul.addr %s442, 256
        %s444 = scalar_lea.vmem [#allocation8], %s443
        %v446 = vld [vmem:[%s400] sm:$0xff]
        %v447 = vld [vmem:[%s400 + $0x8] sm:$0xff]
        %v448 = vld [vmem:[%s400 + $0x10] sm:$0xff]
        %v449 = vld [vmem:[%s400 + $0x18] sm:$0xff]
        %v450 = vld [vmem:[%s400 + $0x20] sm:$0xff]
        %v451 = vld [vmem:[%s400 + $0x28] sm:$0xff]
        %v452 = vld [vmem:[%s400 + $0x30] sm:$0xff]
        %v453 = vld [vmem:[%s400 + $0x38] sm:$0xff]
        %v454 = vld [vmem:[%s400 + $0x40] sm:$0xff]
        %v455 = vld [vmem:[%s400 + $0x48] sm:$0xff]
        %v456 = vld [vmem:[%s400 + $0x50] sm:$0xff]
        %v457 = vld [vmem:[%s400 + $0x58] sm:$0xff]
        %v458 = vld [vmem:[%s400 + $0x60] sm:$0xff]
        %v459 = vld [vmem:[%s400 + $0x68] sm:$0xff]
        %v460 = vld [vmem:[%s400 + $0x70] sm:$0xff]
        %v461 = vld [vmem:[%s400 + $0x78] sm:$0xff]
        %v462 = vld [vmem:[%s400 + $0x80] sm:$0xff]
        %v463 = vld [vmem:[%s400 + $0x88] sm:$0xff]
        %v464 = vld [vmem:[%s400 + $0x90] sm:$0xff]
        %v465 = vld [vmem:[%s400 + $0x98] sm:$0xff]
        %v466 = vld [vmem:[%s400 + $0xa0] sm:$0xff]
        %v467 = vld [vmem:[%s400 + $0xa8] sm:$0xff]
        %v468 = vld [vmem:[%s400 + $0xb0] sm:$0xff]
        %v469 = vld [vmem:[%s400 + $0xb8] sm:$0xff]
        %v470 = vld [vmem:[%s400 + $0xc0] sm:$0xff]
        %v471 = vld [vmem:[%s400 + $0xc8] sm:$0xff]
        %v472 = vld [vmem:[%s400 + $0xd0] sm:$0xff]
        %v473 = vld [vmem:[%s400 + $0xd8] sm:$0xff]
        %v474 = vld [vmem:[%s400 + $0xe0] sm:$0xff]
        %v475 = vld [vmem:[%s400 + $0xe8] sm:$0xff]
        %v476 = vld [vmem:[%s400 + $0xf0] sm:$0xff]
        %v477 = vld [vmem:[%s400 + $0xf8] sm:$0xff]
        %v478 = vpack.c.bf16 %v447, %v446
        %v479 = vpack.c.bf16 %v449, %v448
        %v480 = vpack.c.bf16 %v451, %v450
        %v481 = vpack.c.bf16 %v453, %v452
        %v482 = vpack.c.bf16 %v455, %v454
        %v483 = vpack.c.bf16 %v457, %v456
        %v484 = vpack.c.bf16 %v459, %v458
        %v485 = vpack.c.bf16 %v461, %v460
        %v486 = vpack.c.bf16 %v463, %v462
        %v487 = vpack.c.bf16 %v465, %v464
        %v488 = vpack.c.bf16 %v467, %v466
        %v489 = vpack.c.bf16 %v469, %v468
        %v490 = vpack.c.bf16 %v471, %v470
        %v491 = vpack.c.bf16 %v473, %v472
        %v492 = vpack.c.bf16 %v475, %v474
        %v493 = vpack.c.bf16 %v477, %v476
        %v494 = vld [vmem:[%s1] sm:$0xf]
        %v495 = vld [vmem:[%s1 + $0x4] sm:$0xf]
        %v496 = vld [vmem:[%s1 + $0x8] sm:$0xf]
        %v497 = vld [vmem:[%s1 + $0xc] sm:$0xf]
        %v498 = vld [vmem:[%s1 + $0x10] sm:$0xf]
        %v499 = vld [vmem:[%s1 + $0x14] sm:$0xf]
        %v500 = vld [vmem:[%s1 + $0x18] sm:$0xf]
        %v501 = vld [vmem:[%s1 + $0x1c] sm:$0xf]
        %v502 = vld [vmem:[%s1 + $0x20] sm:$0xf]
        %v503 = vld [vmem:[%s1 + $0x24] sm:$0xf]
        %v504 = vld [vmem:[%s1 + $0x28] sm:$0xf]
        %v505 = vld [vmem:[%s1 + $0x2c] sm:$0xf]
        %v506 = vld [vmem:[%s1 + $0x30] sm:$0xf]
        %v507 = vld [vmem:[%s1 + $0x34] sm:$0xf]
        %v508 = vld [vmem:[%s1 + $0x38] sm:$0xf]
        %v509 = vld [vmem:[%s1 + $0x3c] sm:$0xf]
        %v526 = vunpack.c.l.b16 %v494
        %v527 = vunpack.c.l.b16 %v495
        %v528 = vunpack.c.l.b16 %v496
        %v529 = vunpack.c.l.b16 %v497
        %v530 = vunpack.c.l.b16 %v498
        %v531 = vunpack.c.l.b16 %v499
        %v532 = vunpack.c.l.b16 %v500
        %v533 = vunpack.c.l.b16 %v501
        %v534 = vunpack.c.l.b16 %v502
        %v535 = vunpack.c.l.b16 %v503
        %v536 = vunpack.c.l.b16 %v504
        %v537 = vunpack.c.l.b16 %v505
        %v538 = vunpack.c.l.b16 %v506
        %v539 = vunpack.c.l.b16 %v507
        %v540 = vunpack.c.l.b16 %v508
        %v541 = vunpack.c.l.b16 %v509
        %v542 = vpack.c.b16 %v527, %v526
        %v543 = vpack.c.b16 %v529, %v528
        %v544 = vpack.c.b16 %v531, %v530
        %v545 = vpack.c.b16 %v533, %v532
        %v546 = vpack.c.b16 %v535, %v534
        %v547 = vpack.c.b16 %v537, %v536
        %v548 = vpack.c.b16 %v539, %v538
        %v549 = vpack.c.b16 %v541, %v540
        %558 = vmatprep.subr.bf16.mxu0 0
        %559 = vmatpush1.bf16.msra.mxu0 %v542
        %560 = vmatprep.subr.bf16.mxu0 0
        %561 = vmatpush1.bf16.msra.mxu0 %v543
        %562 = vmatprep.subr.bf16.mxu0 0
        %563 = vmatpush1.bf16.msra.mxu0 %v544
        %564 = vmatprep.subr.bf16.mxu0 0
        %565 = vmatpush1.bf16.msra.mxu0 %v545
        %566 = vmatprep.subr.bf16.mxu0 0
        %567 = vmatpush1.bf16.msra.mxu0 %v546
        %568 = vmatprep.subr.bf16.mxu0 0
        %569 = vmatpush1.bf16.msra.mxu0 %v547
        %570 = vmatprep.subr.bf16.mxu0 0
        %571 = vmatpush1.bf16.msra.mxu0 %v548
        %572 = vmatprep.subr.bf16.mxu0 0
        %573 = vmatpush1.bf16.msra.mxu0 %v549
        %574 = vmatprep.subr.bf16.mxu0 0
        %575 = vmatpush1.bf16.msra.mxu0 0
        %576 = vmatprep.subr.bf16.mxu0 0
        %577 = vmatpush1.bf16.msra.mxu0 0
        %578 = vmatprep.subr.bf16.mxu0 0
        %579 = vmatpush1.bf16.msra.mxu0 0
        %580 = vmatprep.subr.bf16.mxu0 0
        %581 = vmatpush1.bf16.msra.mxu0 0
        %582 = vmatprep.subr.bf16.mxu0 0
        %583 = vmatpush1.bf16.msra.mxu0 0
        %584 = vmatprep.subr.bf16.mxu0 0
        %585 = vmatpush1.bf16.msra.mxu0 0
        %586 = vmatprep.subr.bf16.mxu0 0
        %587 = vmatpush1.bf16.msra.mxu0 0
        %588 = vmatprep.subr.bf16.mxu0 0
        %589 = vmatpush1.bf16.msra.mxu0 0
        %590 = vmatprep.mubr.bf16.mxu0 0
        %591 = vmatmul.mubr.bf16.gmra.mrb[0].mxu0 %v478
        %v592 = vpop.f32.mrb[0].mxu0
        %v593 = vadd.f32 0.0, %v592
        %v594 = vpop.f32.mrb[0].mxu0
        %v595 = vpop.f32.mrb[0].mxu0
        %v596 = vadd.f32 0.0, %v595
        %v597 = vpop.f32.mrb[0].mxu0
        %598 = vmatprep.mubr.bf16.mxu0 0
        %599 = vmatmul.mubr.bf16.gmra.mrb[0].mxu0 %v479
        %v600 = vpop.f32.mrb[0].mxu0
        %v601 = vadd.f32 0.0, %v600
        %v602 = vpop.f32.mrb[0].mxu0
        %v603 = vpop.f32.mrb[0].mxu0
        %v604 = vadd.f32 0.0, %v603
        %v605 = vpop.f32.mrb[0].mxu0
        %606 = vmatprep.mubr.bf16.mxu0 0
        %607 = vmatmul.mubr.bf16.gmra.mrb[0].mxu0 %v480
        %v608 = vpop.f32.mrb[0].mxu0
        %v609 = vadd.f32 0.0, %v608
        %v610 = vpop.f32.mrb[0].mxu0
        %v611 = vpop.f32.mrb[0].mxu0
        %v612 = vadd.f32 0.0, %v611
        %v613 = vpop.f32.mrb[0].mxu0
        %614 = vmatprep.mubr.bf16.mxu0 0
        %615 = vmatmul.mubr.bf16.gmra.mrb[0].mxu0 %v481
        %v616 = vpop.f32.mrb[0].mxu0
        %v617 = vadd.f32 0.0, %v616
        %v618 = vpop.f32.mrb[0].mxu0
        %v619 = vpop.f32.mrb[0].mxu0
        %v620 = vadd.f32 0.0, %v619
        %v621 = vpop.f32.mrb[0].mxu0
        %622 = vmatprep.mubr.bf16.mxu0 0
        %623 = vmatmul.mubr.bf16.gmra.mrb[0].mxu0 %v482
        %v624 = vpop.f32.mrb[0].mxu0
        %v625 = vadd.f32 0.0, %v624
        %v626 = vpop.f32.mrb[0].mxu0
        %v627 = vpop.f32.mrb[0].mxu0
        %v628 = vadd.f32 0.0, %v627
        %v629 = vpop.f32.mrb[0].mxu0
        %630 = vmatprep.mubr.bf16.mxu0 0
        %631 = vmatmul.mubr.bf16.gmra.mrb[0].mxu0 %v483
        %v632 = vpop.f32.mrb[0].mxu0
        %v633 = vadd.f32 0.0, %v632
        %v634 = vpop.f32.mrb[0].mxu0
        %v635 = vpop.f32.mrb[0].mxu0
        %v636 = vadd.f32 0.0, %v635
        %v637 = vpop.f32.mrb[0].mxu0
        %638 = vmatprep.mubr.bf16.mxu0 0
        %639 = vmatmul.mubr.bf16.gmra.mrb[0].mxu0 %v484
        %v640 = vpop.f32.mrb[0].mxu0
        %v641 = vadd.f32 0.0, %v640
        %v642 = vpop.f32.mrb[0].mxu0
        %v643 = vpop.f32.mrb[0].mxu0
        %v644 = vadd.f32 0.0, %v643
        %v645 = vpop.f32.mrb[0].mxu0
        %646 = vmatprep.mubr.bf16.mxu0 0
        %647 = vmatmul.mubr.bf16.gmra.mrb[0].mxu0 %v485
        %v648 = vpop.f32.mrb[0].mxu0
        %v649 = vadd.f32 0.0, %v648
        %v650 = vpop.f32.mrb[0].mxu0
        %v651 = vpop.f32.mrb[0].mxu0
        %v652 = vadd.f32 0.0, %v651
        %v653 = vpop.f32.mrb[0].mxu0
        %654 = vmatprep.mubr.bf16.mxu0 0
        %655 = vmatmul.mubr.bf16.gmra.mrb[0].mxu0 %v486
        %v656 = vpop.f32.mrb[0].mxu0
        %v657 = vadd.f32 0.0, %v656
        %v658 = vpop.f32.mrb[0].mxu0
        %v659 = vpop.f32.mrb[0].mxu0
        %v660 = vadd.f32 0.0, %v659
        %v661 = vpop.f32.mrb[0].mxu0
        %662 = vmatprep.mubr.bf16.mxu0 0
        %663 = vmatmul.mubr.bf16.gmra.mrb[0].mxu0 %v487
        %v664 = vpop.f32.mrb[0].mxu0
        %v665 = vadd.f32 0.0, %v664
        %v666 = vpop.f32.mrb[0].mxu0
        %v667 = vpop.f32.mrb[0].mxu0
        %v668 = vadd.f32 0.0, %v667
        %v669 = vpop.f32.mrb[0].mxu0
        %670 = vmatprep.mubr.bf16.mxu0 0
        %671 = vmatmul.mubr.bf16.gmra.mrb[0].mxu0 %v488
        %v672 = vpop.f32.mrb[0].mxu0
        %v673 = vadd.f32 0.0, %v672
        %v674 = vpop.f32.mrb[0].mxu0
        %v675 = vpop.f32.mrb[0].mxu0
        %v676 = vadd.f32 0.0, %v675
        %v677 = vpop.f32.mrb[0].mxu0
        %678 = vmatprep.mubr.bf16.mxu0 0
        %679 = vmatmul.mubr.bf16.gmra.mrb[0].mxu0 %v489
        %v680 = vpop.f32.mrb[0].mxu0
        %v681 = vadd.f32 0.0, %v680
        %v682 = vpop.f32.mrb[0].mxu0
        %v683 = vpop.f32.mrb[0].mxu0
        %v684 = vadd.f32 0.0, %v683
        %v685 = vpop.f32.mrb[0].mxu0
        %686 = vmatprep.mubr.bf16.mxu0 0
        %687 = vmatmul.mubr.bf16.gmra.mrb[0].mxu0 %v490
        %v688 = vpop.f32.mrb[0].mxu0
        %v689 = vadd.f32 0.0, %v688
        %v690 = vpop.f32.mrb[0].mxu0
        %v691 = vpop.f32.mrb[0].mxu0
        %v692 = vadd.f32 0.0, %v691
        %v693 = vpop.f32.mrb[0].mxu0
        %694 = vmatprep.mubr.bf16.mxu0 0
        %695 = vmatmul.mubr.bf16.gmra.mrb[0].mxu0 %v491
        %v696 = vpop.f32.mrb[0].mxu0
        %v697 = vadd.f32 0.0, %v696
        %v698 = vpop.f32.mrb[0].mxu0
        %v699 = vpop.f32.mrb[0].mxu0
        %v700 = vadd.f32 0.0, %v699
        %v701 = vpop.f32.mrb[0].mxu0
        %702 = vmatprep.mubr.bf16.mxu0 0
        %703 = vmatmul.mubr.bf16.gmra.mrb[0].mxu0 %v492
        %v704 = vpop.f32.mrb[0].mxu0
        %v705 = vadd.f32 0.0, %v704
        %v706 = vpop.f32.mrb[0].mxu0
        %v707 = vpop.f32.mrb[0].mxu0
        %v708 = vadd.f32 0.0, %v707
        %v709 = vpop.f32.mrb[0].mxu0
        %710 = vmatprep.mubr.bf16.mxu0 0
        %711 = vmatmul.mubr.bf16.gmra.mrb[0].mxu0 %v493
        %v712 = vpop.f32.mrb[0].mxu0
        %v713 = vadd.f32 0.0, %v712
        %v714 = vpop.f32.mrb[0].mxu0
        %v715 = vpop.f32.mrb[0].mxu0
        %v716 = vadd.f32 0.0, %v715
        %v717 = vpop.f32.mrb[0].mxu0
        %718 = vdwg.mxu0
        %v719 = vld [vmem:[%s2] sm:$0x1]
        %v720 = vld [vmem:[%s3] sm:$0x1]
        %v721 = vadd.f32 %v593, %v596
        %v722 = vadd.f32 %v721, %v601
        %v723 = vadd.f32 %v722, %v604
        %v724 = vadd.f32 %v723, %v609
        %v725 = vadd.f32 %v724, %v612
        %v726 = vadd.f32 %v725, %v617
        %v727 = vadd.f32 %v726, %v620
        %v728 = vadd.f32 %v727, %v625
        %v729 = vadd.f32 %v728, %v628
        %v730 = vadd.f32 %v729, %v633
        %v731 = vadd.f32 %v730, %v636
        %v732 = vadd.f32 %v731, %v641
        %v733 = vadd.f32 %v732, %v644
        %v734 = vadd.f32 %v733, %v649
        %v735 = vadd.f32 %v734, %v652
        %v736 = vadd.f32 %v735, %v657
        %v737 = vadd.f32 %v736, %v660
        %v738 = vadd.f32 %v737, %v665
        %v739 = vadd.f32 %v738, %v668
        %v740 = vadd.f32 %v739, %v673
        %v741 = vadd.f32 %v740, %v676
        %v742 = vadd.f32 %v741, %v681
        %v743 = vadd.f32 %v742, %v684
        %v744 = vadd.f32 %v743, %v689
        %v745 = vadd.f32 %v744, %v692
        %v746 = vadd.f32 %v745, %v697
        %v747 = vadd.f32 %v746, %v700
        %v748 = vadd.f32 %v747, %v705
        %v749 = vadd.f32 %v748, %v708
        %v750 = vadd.f32 %v749, %v713
        %v751 = vadd.f32 %v750, %v716
        %752 = vadd.xlane.f32.xlu0 %v751
        %v753 = vpop.xlane.xlu0 %752
        %v754 = vrot.slane %v753, 4
        %v755 = vadd.f32 %v753, %v754
        %v756 = vrot.slane %v755, 2
        %v757 = vadd.f32 %v755, %v756
        %v758 = vrot.slane %v757, 1
        %v759 = vadd.f32 %v757, %v758
        %s760 = vtos %v759
        %v761 = vmul.f32 %v593, %v593
        %v762 = vmul.f32 %v596, %v596
        %v763 = vmul.f32 %v601, %v601
        %v764 = vmul.f32 %v604, %v604
        %v765 = vmul.f32 %v609, %v609
        %v766 = vmul.f32 %v612, %v612
        %v767 = vmul.f32 %v617, %v617
        %v768 = vmul.f32 %v620, %v620
        %v769 = vmul.f32 %v625, %v625
        %v770 = vmul.f32 %v628, %v628
        %v771 = vmul.f32 %v633, %v633
        %v772 = vmul.f32 %v636, %v636
        %v773 = vmul.f32 %v641, %v641
        %v774 = vmul.f32 %v644, %v644
        %v775 = vmul.f32 %v649, %v649
        %v776 = vmul.f32 %v652, %v652
        %v777 = vmul.f32 %v657, %v657
        %v778 = vmul.f32 %v660, %v660
        %v779 = vmul.f32 %v665, %v665
        %v780 = vmul.f32 %v668, %v668
        %v781 = vmul.f32 %v673, %v673
        %v782 = vmul.f32 %v676, %v676
        %v783 = vmul.f32 %v681, %v681
        %v784 = vmul.f32 %v684, %v684
        %v785 = vmul.f32 %v689, %v689
        %v786 = vmul.f32 %v692, %v692
        %v787 = vmul.f32 %v697, %v697
        %v788 = vmul.f32 %v700, %v700
        %v789 = vmul.f32 %v705, %v705
        %v790 = vmul.f32 %v708, %v708
        %v791 = vmul.f32 %v713, %v713
        %v792 = vmul.f32 %v716, %v716
        %v793 = vadd.f32 %v761, %v762
        %v794 = vadd.f32 %v793, %v763
        %v795 = vadd.f32 %v794, %v764
        %v796 = vadd.f32 %v795, %v765
        %v797 = vadd.f32 %v796, %v766
        %v798 = vadd.f32 %v797, %v767
        %v799 = vadd.f32 %v798, %v768
        %v800 = vadd.f32 %v799, %v769
        %v801 = vadd.f32 %v800, %v770
        %v802 = vadd.f32 %v801, %v771
        %v803 = vadd.f32 %v802, %v772
        %v804 = vadd.f32 %v803, %v773
        %v805 = vadd.f32 %v804, %v774
        %v806 = vadd.f32 %v805, %v775
        %v807 = vadd.f32 %v806, %v776
        %v808 = vadd.f32 %v807, %v777
        %v809 = vadd.f32 %v808, %v778
        %v810 = vadd.f32 %v809, %v779
        %v811 = vadd.f32 %v810, %v780
        %v812 = vadd.f32 %v811, %v781
        %v813 = vadd.f32 %v812, %v782
        %v814 = vadd.f32 %v813, %v783
        %v815 = vadd.f32 %v814, %v784
        %v816 = vadd.f32 %v815, %v785
        %v817 = vadd.f32 %v816, %v786
        %v818 = vadd.f32 %v817, %v787
        %v819 = vadd.f32 %v818, %v788
        %v820 = vadd.f32 %v819, %v789
        %v821 = vadd.f32 %v820, %v790
        %v822 = vadd.f32 %v821, %v791
        %v823 = vadd.f32 %v822, %v792
        %824 = vadd.xlane.f32.xlu0 %v823
        %v825 = vpop.xlane.xlu0 %824
        %v826 = vrot.slane %v825, 4
        %v827 = vadd.f32 %v825, %v826
        %v828 = vrot.slane %v827, 2
        %v829 = vadd.f32 %v827, %v828
        %v830 = vrot.slane %v829, 1
        %v831 = vadd.f32 %v829, %v830
        %s832 = vtos %v831
        %s833 = smul.f32 %s760, 6.1035156e-05
        %s834 = smul.f32 %s832, 6.1035156e-05
        %s835 = smul.f32 %s833, %s833
        %s836 = ssub.f32 %s834, %s835
        %s837 = smax.f32 %s836, 0.0
        %v838 = vstv %s833
        %v839 = vsub.f32 %v593, %v838
        %v840 = vsub.f32 %v596, %v838
        %v841 = vsub.f32 %v601, %v838
        %v842 = vsub.f32 %v604, %v838
        %v843 = vsub.f32 %v609, %v838
        %v844 = vsub.f32 %v612, %v838
        %v845 = vsub.f32 %v617, %v838
        %v846 = vsub.f32 %v620, %v838
        %v847 = vsub.f32 %v625, %v838
        %v848 = vsub.f32 %v628, %v838
        %v849 = vsub.f32 %v633, %v838
        %v850 = vsub.f32 %v636, %v838
        %v851 = vsub.f32 %v641, %v838
        %v852 = vsub.f32 %v644, %v838
        %v853 = vsub.f32 %v649, %v838
        %v854 = vsub.f32 %v652, %v838
        %v855 = vsub.f32 %v657, %v838
        %v856 = vsub.f32 %v660, %v838
        %v857 = vsub.f32 %v665, %v838
        %v858 = vsub.f32 %v668, %v838
        %v859 = vsub.f32 %v673, %v838
        %v860 = vsub.f32 %v676, %v838
        %v861 = vsub.f32 %v681, %v838
        %v862 = vsub.f32 %v684, %v838
        %v863 = vsub.f32 %v689, %v838
        %v864 = vsub.f32 %v692, %v838
        %v865 = vsub.f32 %v697, %v838
        %v866 = vsub.f32 %v700, %v838
        %v867 = vsub.f32 %v705, %v838
        %v868 = vsub.f32 %v708, %v838
        %v869 = vsub.f32 %v713, %v838
        %v870 = vsub.f32 %v716, %v838
        %s871 = sadd.f32 %s837, 1e-05
        %v872 = vstv %s871
        %v873 = vrsqrt.pop %v872
        %s874 = vtos %v873
        %v875 = vstv %s874
        %v876 = vmul.f32 %v875, %v719
        %v878 = vlaneseq
        %v879 = vshrl.u32 %v878, 7
        %v880 = vsub.s32 0, %v879
        %v881 = vrot.slane %v876, %v880
        %v883 = vmul.f32 %v839, %v881
        %v884 = vmul.f32 %v840, %v881
        %v885 = vmul.f32 %v841, %v881
        %v886 = vmul.f32 %v842, %v881
        %v887 = vmul.f32 %v843, %v881
        %v888 = vmul.f32 %v844, %v881
        %v889 = vmul.f32 %v845, %v881
        %v890 = vmul.f32 %v846, %v881
        %v891 = vmul.f32 %v847, %v881
        %v892 = vmul.f32 %v848, %v881
        %v893 = vmul.f32 %v849, %v881
        %v894 = vmul.f32 %v850, %v881
        %v895 = vmul.f32 %v851, %v881
        %v896 = vmul.f32 %v852, %v881
        %v897 = vmul.f32 %v853, %v881
        %v898 = vmul.f32 %v854, %v881
        %v899 = vmul.f32 %v855, %v881
        %v900 = vmul.f32 %v856, %v881
        %v901 = vmul.f32 %v857, %v881
        %v902 = vmul.f32 %v858, %v881
        %v903 = vmul.f32 %v859, %v881
        %v904 = vmul.f32 %v860, %v881
        %v905 = vmul.f32 %v861, %v881
        %v906 = vmul.f32 %v862, %v881
        %v907 = vmul.f32 %v863, %v881
        %v908 = vmul.f32 %v864, %v881
        %v909 = vmul.f32 %v865, %v881
        %v910 = vmul.f32 %v866, %v881
        %v911 = vmul.f32 %v867, %v881
        %v912 = vmul.f32 %v868, %v881
        %v913 = vmul.f32 %v869, %v881
        %v914 = vmul.f32 %v870, %v881
        %v916 = vlaneseq
        %v917 = vshrl.u32 %v916, 7
        %v918 = vsub.s32 0, %v917
        %v919 = vrot.slane %v720, %v918
        %v921 = vadd.f32 %v883, %v919
        %v922 = vadd.f32 %v884, %v919
        %v923 = vadd.f32 %v885, %v919
        %v924 = vadd.f32 %v886, %v919
        %v925 = vadd.f32 %v887, %v919
        %v926 = vadd.f32 %v888, %v919
        %v927 = vadd.f32 %v889, %v919
        %v928 = vadd.f32 %v890, %v919
        %v929 = vadd.f32 %v891, %v919
        %v930 = vadd.f32 %v892, %v919
        %v931 = vadd.f32 %v893, %v919
        %v932 = vadd.f32 %v894, %v919
        %v933 = vadd.f32 %v895, %v919
        %v934 = vadd.f32 %v896, %v919
        %v935 = vadd.f32 %v897, %v919
        %v936 = vadd.f32 %v898, %v919
        %v937 = vadd.f32 %v899, %v919
        %v938 = vadd.f32 %v900, %v919
        %v939 = vadd.f32 %v901, %v919
        %v940 = vadd.f32 %v902, %v919
        %v941 = vadd.f32 %v903, %v919
        %v942 = vadd.f32 %v904, %v919
        %v943 = vadd.f32 %v905, %v919
        %v944 = vadd.f32 %v906, %v919
        %v945 = vadd.f32 %v907, %v919
        %v946 = vadd.f32 %v908, %v919
        %v947 = vadd.f32 %v909, %v919
        %v948 = vadd.f32 %v910, %v919
        %v949 = vadd.f32 %v911, %v919
        %v950 = vadd.f32 %v912, %v919
        %v951 = vadd.f32 %v913, %v919
        %v952 = vadd.f32 %v914, %v919
        %v953 = vmax.f32 %v921, 0.0
        %v954 = vmax.f32 %v922, 0.0
        %v955 = vmax.f32 %v923, 0.0
        %v956 = vmax.f32 %v924, 0.0
        %v957 = vmax.f32 %v925, 0.0
        %v958 = vmax.f32 %v926, 0.0
        %v959 = vmax.f32 %v927, 0.0
        %v960 = vmax.f32 %v928, 0.0
        %v961 = vmax.f32 %v929, 0.0
        %v962 = vmax.f32 %v930, 0.0
        %v963 = vmax.f32 %v931, 0.0
        %v964 = vmax.f32 %v932, 0.0
        %v965 = vmax.f32 %v933, 0.0
        %v966 = vmax.f32 %v934, 0.0
        %v967 = vmax.f32 %v935, 0.0
        %v968 = vmax.f32 %v936, 0.0
        %v969 = vmax.f32 %v937, 0.0
        %v970 = vmax.f32 %v938, 0.0
        %v971 = vmax.f32 %v939, 0.0
        %v972 = vmax.f32 %v940, 0.0
        %v973 = vmax.f32 %v941, 0.0
        %v974 = vmax.f32 %v942, 0.0
        %v975 = vmax.f32 %v943, 0.0
        %v976 = vmax.f32 %v944, 0.0
        %v977 = vmax.f32 %v945, 0.0
        %v978 = vmax.f32 %v946, 0.0
        %v979 = vmax.f32 %v947, 0.0
        %v980 = vmax.f32 %v948, 0.0
        %v981 = vmax.f32 %v949, 0.0
        %v982 = vmax.f32 %v950, 0.0
        %v983 = vmax.f32 %v951, 0.0
        %v984 = vmax.f32 %v952, 0.0
        %v985 = vmin.f32 %v953, 6.0
        %v986 = vmin.f32 %v954, 6.0
        %v987 = vmin.f32 %v955, 6.0
        %v988 = vmin.f32 %v956, 6.0
        %v989 = vmin.f32 %v957, 6.0
        %v990 = vmin.f32 %v958, 6.0
        %v991 = vmin.f32 %v959, 6.0
        %v992 = vmin.f32 %v960, 6.0
        %v993 = vmin.f32 %v961, 6.0
        %v994 = vmin.f32 %v962, 6.0
        %v995 = vmin.f32 %v963, 6.0
        %v996 = vmin.f32 %v964, 6.0
        %v997 = vmin.f32 %v965, 6.0
        %v998 = vmin.f32 %v966, 6.0
        %v999 = vmin.f32 %v967, 6.0
        %v1000 = vmin.f32 %v968, 6.0
        %v1001 = vmin.f32 %v969, 6.0
        %v1002 = vmin.f32 %v970, 6.0
        %v1003 = vmin.f32 %v971, 6.0
        %v1004 = vmin.f32 %v972, 6.0
        %v1005 = vmin.f32 %v973, 6.0
        %v1006 = vmin.f32 %v974, 6.0
        %v1007 = vmin.f32 %v975, 6.0
        %v1008 = vmin.f32 %v976, 6.0
        %v1009 = vmin.f32 %v977, 6.0
        %v1010 = vmin.f32 %v978, 6.0
        %v1011 = vmin.f32 %v979, 6.0
        %v1012 = vmin.f32 %v980, 6.0
        %v1013 = vmin.f32 %v981, 6.0
        %v1014 = vmin.f32 %v982, 6.0
        %v1015 = vmin.f32 %v983, 6.0
        %v1016 = vmin.f32 %v984, 6.0
        %1017 = vst [vmem:[#allocation2] sm:$0xff] 0.0
        %1018 = vst [vmem:[#allocation2 + $0x8] sm:$0xff] 0.0
        %1019 = vst [vmem:[#allocation2 + $0x10] sm:$0xff] 0.0
        %s1020 = scalar_lea.vmem [#allocation2], 408
        %1021 = vst [vmem:[%s1020] sm:$0xff] 0.0
        %1022 = vst [vmem:[%s1020 + $0x8] sm:$0xff] 0.0
        %1023 = vst [vmem:[%s1020 + $0x10] sm:$0xff] 0.0
        %1024 = vst [vmem:[#allocation2] sm:$0x1] 0.0
        %1025 = vst [vmem:[#allocation2 + $0x18] sm:$0x1] 0.0
        %1026 = vst [vmem:[#allocation2 + $0x30] sm:$0x1] 0.0
        %1027 = vst [vmem:[#allocation2 + $0x48] sm:$0x1] 0.0
        %1028 = vst [vmem:[#allocation2 + $0x60] sm:$0x1] 0.0
        %1029 = vst [vmem:[#allocation2 + $0x78] sm:$0x1] 0.0
        %1030 = vst [vmem:[#allocation2 + $0x90] sm:$0x1] 0.0
        %1031 = vst [vmem:[#allocation2 + $0xa8] sm:$0x1] 0.0
        %1032 = vst [vmem:[#allocation2 + $0xc0] sm:$0x1] 0.0
        %1033 = vst [vmem:[#allocation2 + $0xd8] sm:$0x1] 0.0
        %1034 = vst [vmem:[#allocation2 + $0xf0] sm:$0x1] 0.0
        %1035 = vst [vmem:[#allocation2 + $0x108] sm:$0x1] 0.0
        %1036 = vst [vmem:[#allocation2 + $0x120] sm:$0x1] 0.0
        %1037 = vst [vmem:[#allocation2 + $0x138] sm:$0x1] 0.0
        %1038 = vst [vmem:[#allocation2 + $0x150] sm:$0x1] 0.0
        %1039 = vst [vmem:[#allocation2 + $0x168] sm:$0x1] 0.0
        %1040 = vst [vmem:[#allocation2 + $0x180] sm:$0x1] 0.0
        %1041 = vst [vmem:[#allocation2 + $0x198] sm:$0x1] 0.0
        %1042 = vst [vmem:[#allocation2 + $0x11] sm:$0x1] 0.0
        %1043 = vst [vmem:[#allocation2 + $0x29] sm:$0x1] 0.0
        %1044 = vst [vmem:[#allocation2 + $0x41] sm:$0x1] 0.0
        %1045 = vst [vmem:[#allocation2 + $0x59] sm:$0x1] 0.0
        %1046 = vst [vmem:[#allocation2 + $0x71] sm:$0x1] 0.0
        %1047 = vst [vmem:[#allocation2 + $0x89] sm:$0x1] 0.0
        %1048 = vst [vmem:[#allocation2 + $0xa1] sm:$0x1] 0.0
        %1049 = vst [vmem:[#allocation2 + $0xb9] sm:$0x1] 0.0
        %1050 = vst [vmem:[#allocation2 + $0xd1] sm:$0x1] 0.0
        %1051 = vst [vmem:[#allocation2 + $0xe9] sm:$0x1] 0.0
        %1052 = vst [vmem:[#allocation2 + $0x101] sm:$0x1] 0.0
        %1053 = vst [vmem:[#allocation2 + $0x119] sm:$0x1] 0.0
        %1054 = vst [vmem:[#allocation2 + $0x131] sm:$0x1] 0.0
        %1055 = vst [vmem:[#allocation2 + $0x149] sm:$0x1] 0.0
        %1056 = vst [vmem:[#allocation2 + $0x161] sm:$0x1] 0.0
        %1057 = vst [vmem:[#allocation2 + $0x179] sm:$0x1] 0.0
        %1058 = vst [vmem:[#allocation2 + $0x191] sm:$0x1] 0.0
        %1059 = vst [vmem:[#allocation2 + $0x1a9] sm:$0x1] 0.0
        %s1060 = scalar_lea.vmem [#allocation2], 24
        %1061 = vst [vmem:[%s1060 + $0x1] sm:$0xff] %v985
        %1062 = vst [vmem:[%s1060 + $0x9] sm:$0xff] %v986
        %1063 = vst [vmem:[%s1060 + $0x19] sm:$0xff] %v987
        %1064 = vst [vmem:[%s1060 + $0x21] sm:$0xff] %v988
        %1065 = vst [vmem:[%s1060 + $0x31] sm:$0xff] %v989
        %1066 = vst [vmem:[%s1060 + $0x39] sm:$0xff] %v990
        %1067 = vst [vmem:[%s1060 + $0x49] sm:$0xff] %v991
        %1068 = vst [vmem:[%s1060 + $0x51] sm:$0xff] %v992
        %1069 = vst [vmem:[%s1060 + $0x61] sm:$0xff] %v993
        %1070 = vst [vmem:[%s1060 + $0x69] sm:$0xff] %v994
        %1071 = vst [vmem:[%s1060 + $0x79] sm:$0xff] %v995
        %1072 = vst [vmem:[%s1060 + $0x81] sm:$0xff] %v996
        %1073 = vst [vmem:[%s1060 + $0x91] sm:$0xff] %v997
        %1074 = vst [vmem:[%s1060 + $0x99] sm:$0xff] %v998
        %1075 = vst [vmem:[%s1060 + $0xa9] sm:$0xff] %v999
        %1076 = vst [vmem:[%s1060 + $0xb1] sm:$0xff] %v1000
        %1077 = vst [vmem:[%s1060 + $0xc1] sm:$0xff] %v1001
        %1078 = vst [vmem:[%s1060 + $0xc9] sm:$0xff] %v1002
        %1079 = vst [vmem:[%s1060 + $0xd9] sm:$0xff] %v1003
        %1080 = vst [vmem:[%s1060 + $0xe1] sm:$0xff] %v1004
        %1081 = vst [vmem:[%s1060 + $0xf1] sm:$0xff] %v1005
        %1082 = vst [vmem:[%s1060 + $0xf9] sm:$0xff] %v1006
        %1083 = vst [vmem:[%s1060 + $0x109] sm:$0xff] %v1007
        %1084 = vst [vmem:[%s1060 + $0x111] sm:$0xff] %v1008
        %1085 = vst [vmem:[%s1060 + $0x121] sm:$0xff] %v1009
        %1086 = vst [vmem:[%s1060 + $0x129] sm:$0xff] %v1010
        %1087 = vst [vmem:[%s1060 + $0x139] sm:$0xff] %v1011
        %1088 = vst [vmem:[%s1060 + $0x141] sm:$0xff] %v1012
        %1089 = vst [vmem:[%s1060 + $0x151] sm:$0xff] %v1013
        %1090 = vst [vmem:[%s1060 + $0x159] sm:$0xff] %v1014
        %1091 = vst [vmem:[%s1060 + $0x169] sm:$0xff] %v1015
        %1092 = vst [vmem:[%s1060 + $0x171] sm:$0xff] %v1016
        %v1093 = vld [vmem:[%s4] sm:$0x7]
        %v1094 = vld [vmem:[%s4 + $0x4] sm:$0x7]
        %v1095 = vld [vmem:[%s4 + $0x8] sm:$0x7]
        %v1096 = vld [vmem:[#allocation2] sm:$0xff]
        %v1097 = vld [vmem:[#allocation2 + $0x8] sm:$0xff]
        %v1098 = vld [vmem:[#allocation2 + $0x10] sm:$0xff]
        %v1099 = vld [vmem:[#allocation2 + $0x18] sm:$0xff]
        %v1100 = vld [vmem:[#allocation2 + $0x20] sm:$0xff]
        %v1101 = vld [vmem:[#allocation2 + $0x28] sm:$0xff]
        %v1102 = vld [vmem:[#allocation2 + $0x30] sm:$0xff]
        %v1103 = vld [vmem:[#allocation2 + $0x38] sm:$0xff]
        %v1104 = vld [vmem:[#allocation2 + $0x40] sm:$0xff]
        %v1105 = vld [vmem:[#allocation2 + $0x48] sm:$0xff]
        %v1106 = vld [vmem:[#allocation2 + $0x50] sm:$0xff]
        %v1107 = vld [vmem:[#allocation2 + $0x58] sm:$0xff]
        %v1108 = vld [vmem:[#allocation2 + $0x60] sm:$0xff]
        %v1109 = vld [vmem:[#allocation2 + $0x68] sm:$0xff]
        %v1110 = vld [vmem:[#allocation2 + $0x70] sm:$0xff]
        %v1111 = vld [vmem:[#allocation2 + $0x78] sm:$0xff]
        %v1112 = vld [vmem:[#allocation2 + $0x80] sm:$0xff]
        %v1113 = vld [vmem:[#allocation2 + $0x88] sm:$0xff]
        %v1114 = vld [vmem:[#allocation2 + $0x90] sm:$0xff]
        %v1115 = vld [vmem:[#allocation2 + $0x98] sm:$0xff]
        %v1116 = vld [vmem:[#allocation2 + $0xa0] sm:$0xff]
        %v1117 = vld [vmem:[#allocation2 + $0xa8] sm:$0xff]
        %v1118 = vld [vmem:[#allocation2 + $0xb0] sm:$0xff]
        %v1119 = vld [vmem:[#allocation2 + $0xb8] sm:$0xff]
        %v1120 = vld [vmem:[#allocation2 + $0xc0] sm:$0xff]
        %v1121 = vld [vmem:[#allocation2 + $0xc8] sm:$0xff]
        %v1122 = vld [vmem:[#allocation2 + $0xd0] sm:$0xff]
        %v1123 = vld [vmem:[#allocation2 + $0xd8] sm:$0xff]
        %v1124 = vld [vmem:[#allocation2 + $0xe0] sm:$0xff]
        %v1125 = vld [vmem:[#allocation2 + $0xe8] sm:$0xff]
        %v1126 = vld [vmem:[#allocation2 + $0xf0] sm:$0xff]
        %v1127 = vld [vmem:[#allocation2 + $0xf8] sm:$0xff]
        %v1128 = vld [vmem:[#allocation2 + $0x100] sm:$0xff]
        %v1129 = vld [vmem:[#allocation2 + $0x108] sm:$0xff]
        %v1130 = vld [vmem:[#allocation2 + $0x110] sm:$0xff]
        %v1131 = vld [vmem:[#allocation2 + $0x118] sm:$0xff]
        %v1132 = vld [vmem:[#allocation2 + $0x120] sm:$0xff]
        %v1133 = vld [vmem:[#allocation2 + $0x128] sm:$0xff]
        %v1134 = vld [vmem:[#allocation2 + $0x130] sm:$0xff]
        %v1135 = vld [vmem:[#allocation2 + $0x138] sm:$0xff]
        %v1136 = vld [vmem:[#allocation2 + $0x140] sm:$0xff]
        %v1137 = vld [vmem:[#allocation2 + $0x148] sm:$0xff]
        %v1138 = vld [vmem:[#allocation2 + $0x150] sm:$0xff]
        %v1139 = vld [vmem:[#allocation2 + $0x158] sm:$0xff]
        %v1140 = vld [vmem:[#allocation2 + $0x160] sm:$0xff]
        %v1141 = vld [vmem:[#allocation2 + $0x168] sm:$0xff]
        %v1142 = vld [vmem:[#allocation2 + $0x170] sm:$0xff]
        %v1143 = vld [vmem:[#allocation2 + $0x178] sm:$0xff]
        %v1144 = vlaneseq
        %v1145 = vshrl.u32 %v1144, 7
        %v1146 = vsub.s32 0, %v1145
        %v1147 = vrot.slane %v1093, %v1146
        %v1148 = vmul.f32 %v1096, %v1147
        %v1149 = vmul.f32 %v1097, %v1147
        %v1150 = vmul.f32 %v1099, %v1147
        %v1151 = vmul.f32 %v1100, %v1147
        %v1152 = vmul.f32 %v1102, %v1147
        %v1153 = vmul.f32 %v1103, %v1147
        %v1154 = vmul.f32 %v1105, %v1147
        %v1155 = vmul.f32 %v1106, %v1147
        %v1156 = vmul.f32 %v1108, %v1147
        %v1157 = vmul.f32 %v1109, %v1147
        %v1158 = vmul.f32 %v1111, %v1147
        %v1159 = vmul.f32 %v1112, %v1147
        %v1160 = vmul.f32 %v1114, %v1147
        %v1161 = vmul.f32 %v1115, %v1147
        %v1162 = vmul.f32 %v1117, %v1147
        %v1163 = vmul.f32 %v1118, %v1147
        %v1164 = vmul.f32 %v1120, %v1147
        %v1165 = vmul.f32 %v1121, %v1147
        %v1166 = vmul.f32 %v1123, %v1147
        %v1167 = vmul.f32 %v1124, %v1147
        %v1168 = vmul.f32 %v1126, %v1147
        %v1169 = vmul.f32 %v1127, %v1147
        %v1170 = vmul.f32 %v1129, %v1147
        %v1171 = vmul.f32 %v1130, %v1147
        %v1172 = vmul.f32 %v1132, %v1147
        %v1173 = vmul.f32 %v1133, %v1147
        %v1174 = vmul.f32 %v1135, %v1147
        %v1175 = vmul.f32 %v1136, %v1147
        %v1176 = vmul.f32 %v1138, %v1147
        %v1177 = vmul.f32 %v1139, %v1147
        %v1178 = vmul.f32 %v1141, %v1147
        %v1179 = vmul.f32 %v1142, %v1147
        %v1180 = vadd.f32 %v1148, 0.0
        %v1181 = vadd.f32 %v1149, 0.0
        %v1182 = vadd.f32 %v1150, 0.0
        %v1183 = vadd.f32 %v1151, 0.0
        %v1184 = vadd.f32 %v1152, 0.0
        %v1185 = vadd.f32 %v1153, 0.0
        %v1186 = vadd.f32 %v1154, 0.0
        %v1187 = vadd.f32 %v1155, 0.0
        %v1188 = vadd.f32 %v1156, 0.0
        %v1189 = vadd.f32 %v1157, 0.0
        %v1190 = vadd.f32 %v1158, 0.0
        %v1191 = vadd.f32 %v1159, 0.0
        %v1192 = vadd.f32 %v1160, 0.0
        %v1193 = vadd.f32 %v1161, 0.0
        %v1194 = vadd.f32 %v1162, 0.0
        %v1195 = vadd.f32 %v1163, 0.0
        %v1196 = vadd.f32 %v1164, 0.0
        %v1197 = vadd.f32 %v1165, 0.0
        %v1198 = vadd.f32 %v1166, 0.0
        %v1199 = vadd.f32 %v1167, 0.0
        %v1200 = vadd.f32 %v1168, 0.0
        %v1201 = vadd.f32 %v1169, 0.0
        %v1202 = vadd.f32 %v1170, 0.0
        %v1203 = vadd.f32 %v1171, 0.0
        %v1204 = vadd.f32 %v1172, 0.0
        %v1205 = vadd.f32 %v1173, 0.0
        %v1206 = vadd.f32 %v1174, 0.0
        %v1207 = vadd.f32 %v1175, 0.0
        %v1208 = vadd.f32 %v1176, 0.0
        %v1209 = vadd.f32 %v1177, 0.0
        %v1210 = vadd.f32 %v1178, 0.0
        %v1211 = vadd.f32 %v1179, 0.0
        %v1212 = vlaneseq
        %v1213 = vshrl.u32 %v1212, 7
        %v1214 = vsub.s32 1, %v1213
        %v1215 = vrot.slane %v1093, %v1214
        %v1216 = vmul.f32 %v1096, %v1215
        %v1217 = vmul.f32 %v1097, %v1215
        %v1218 = vmul.f32 %v1098, %v1215
        %v1219 = vmul.f32 %v1099, %v1215
        %v1220 = vmul.f32 %v1100, %v1215
        %v1221 = vmul.f32 %v1101, %v1215
        %v1222 = vmul.f32 %v1102, %v1215
        %v1223 = vmul.f32 %v1103, %v1215
        %v1224 = vmul.f32 %v1104, %v1215
        %v1225 = vmul.f32 %v1105, %v1215
        %v1226 = vmul.f32 %v1106, %v1215
        %v1227 = vmul.f32 %v1107, %v1215
        %v1228 = vmul.f32 %v1108, %v1215
        %v1229 = vmul.f32 %v1109, %v1215
        %v1230 = vmul.f32 %v1110, %v1215
        %v1231 = vmul.f32 %v1111, %v1215
        %v1232 = vmul.f32 %v1112, %v1215
        %v1233 = vmul.f32 %v1113, %v1215
        %v1234 = vmul.f32 %v1114, %v1215
        %v1235 = vmul.f32 %v1115, %v1215
        %v1236 = vmul.f32 %v1116, %v1215
        %v1237 = vmul.f32 %v1117, %v1215
        %v1238 = vmul.f32 %v1118, %v1215
        %v1239 = vmul.f32 %v1119, %v1215
        %v1240 = vmul.f32 %v1120, %v1215
        %v1241 = vmul.f32 %v1121, %v1215
        %v1242 = vmul.f32 %v1122, %v1215
        %v1243 = vmul.f32 %v1123, %v1215
        %v1244 = vmul.f32 %v1124, %v1215
        %v1245 = vmul.f32 %v1125, %v1215
        %v1246 = vmul.f32 %v1126, %v1215
        %v1247 = vmul.f32 %v1127, %v1215
        %v1248 = vmul.f32 %v1128, %v1215
        %v1249 = vmul.f32 %v1129, %v1215
        %v1250 = vmul.f32 %v1130, %v1215
        %v1251 = vmul.f32 %v1131, %v1215
        %v1252 = vmul.f32 %v1132, %v1215
        %v1253 = vmul.f32 %v1133, %v1215
        %v1254 = vmul.f32 %v1134, %v1215
        %v1255 = vmul.f32 %v1135, %v1215
        %v1256 = vmul.f32 %v1136, %v1215
        %v1257 = vmul.f32 %v1137, %v1215
        %v1258 = vmul.f32 %v1138, %v1215
        %v1259 = vmul.f32 %v1139, %v1215
        %v1260 = vmul.f32 %v1140, %v1215
        %v1261 = vmul.f32 %v1141, %v1215
        %v1262 = vmul.f32 %v1142, %v1215
        %v1263 = vmul.f32 %v1143, %v1215
        %vm1312 = vcmask 1046528
        %v1313 = vrot.slane %v1216, 1
        %v1314 = vrot.slane %v1217, 1
        %v1315 = vsel %vm1312, %v1313, %v1314
        %v1316 = vrot.slane %v1218, 1
        %v1317 = vsel %vm1312, %v1314, %v1316
        %v1318 = vrot.slane %v1219, 1
        %v1319 = vrot.slane %v1220, 1
        %v1320 = vsel %vm1312, %v1318, %v1319
        %v1321 = vrot.slane %v1221, 1
        %v1322 = vsel %vm1312, %v1319, %v1321
        %v1323 = vrot.slane %v1222, 1
        %v1324 = vrot.slane %v1223, 1
        %v1325 = vsel %vm1312, %v1323, %v1324
        %v1326 = vrot.slane %v1224, 1
        %v1327 = vsel %vm1312, %v1324, %v1326
        %v1328 = vrot.slane %v1225, 1
        %v1329 = vrot.slane %v1226, 1
        %v1330 = vsel %vm1312, %v1328, %v1329
        %v1331 = vrot.slane %v1227, 1
        %v1332 = vsel %vm1312, %v1329, %v1331
        %v1333 = vrot.slane %v1228, 1
        %v1334 = vrot.slane %v1229, 1
        %v1335 = vsel %vm1312, %v1333, %v1334
        %v1336 = vrot.slane %v1230, 1
        %v1337 = vsel %vm1312, %v1334, %v1336
        %v1338 = vrot.slane %v1231, 1
        %v1339 = vrot.slane %v1232, 1
        %v1340 = vsel %vm1312, %v1338, %v1339
        %v1341 = vrot.slane %v1233, 1
        %v1342 = vsel %vm1312, %v1339, %v1341
        %v1343 = vrot.slane %v1234, 1
        %v1344 = vrot.slane %v1235, 1
        %v1345 = vsel %vm1312, %v1343, %v1344
        %v1346 = vrot.slane %v1236, 1
        %v1347 = vsel %vm1312, %v1344, %v1346
        %v1348 = vrot.slane %v1237, 1
        %v1349 = vrot.slane %v1238, 1
        %v1350 = vsel %vm1312, %v1348, %v1349
        %v1351 = vrot.slane %v1239, 1
        %v1352 = vsel %vm1312, %v1349, %v1351
        %v1353 = vrot.slane %v1240, 1
        %v1354 = vrot.slane %v1241, 1
        %v1355 = vsel %vm1312, %v1353, %v1354
        %v1356 = vrot.slane %v1242, 1
        %v1357 = vsel %vm1312, %v1354, %v1356
        %v1358 = vrot.slane %v1243, 1
        %v1359 = vrot.slane %v1244, 1
        %v1360 = vsel %vm1312, %v1358, %v1359
        %v1361 = vrot.slane %v1245, 1
        %v1362 = vsel %vm1312, %v1359, %v1361
        %v1363 = vrot.slane %v1246, 1
        %v1364 = vrot.slane %v1247, 1
        %v1365 = vsel %vm1312, %v1363, %v1364
        %v1366 = vrot.slane %v1248, 1
        %v1367 = vsel %vm1312, %v1364, %v1366
        %v1368 = vrot.slane %v1249, 1
        %v1369 = vrot.slane %v1250, 1
        %v1370 = vsel %vm1312, %v1368, %v1369
        %v1371 = vrot.slane %v1251, 1
        %v1372 = vsel %vm1312, %v1369, %v1371
        %v1373 = vrot.slane %v1252, 1
        %v1374 = vrot.slane %v1253, 1
        %v1375 = vsel %vm1312, %v1373, %v1374
        %v1376 = vrot.slane %v1254, 1
        %v1377 = vsel %vm1312, %v1374, %v1376
        %v1378 = vrot.slane %v1255, 1
        %v1379 = vrot.slane %v1256, 1
        %v1380 = vsel %vm1312, %v1378, %v1379
        %v1381 = vrot.slane %v1257, 1
        %v1382 = vsel %vm1312, %v1379, %v1381
        %v1383 = vrot.slane %v1258, 1
        %v1384 = vrot.slane %v1259, 1
        %v1385 = vsel %vm1312, %v1383, %v1384
        %v1386 = vrot.slane %v1260, 1
        %v1387 = vsel %vm1312, %v1384, %v1386
        %v1388 = vrot.slane %v1261, 1
        %v1389 = vrot.slane %v1262, 1
        %v1390 = vsel %vm1312, %v1388, %v1389
        %v1391 = vrot.slane %v1263, 1
        %v1392 = vsel %vm1312, %v1389, %v1391
        %v1425 = vadd.f32 %v1180, %v1315
        %v1426 = vadd.f32 %v1181, %v1317
        %v1427 = vadd.f32 %v1182, %v1320
        %v1428 = vadd.f32 %v1183, %v1322
        %v1429 = vadd.f32 %v1184, %v1325
        %v1430 = vadd.f32 %v1185, %v1327
        %v1431 = vadd.f32 %v1186, %v1330
        %v1432 = vadd.f32 %v1187, %v1332
        %v1433 = vadd.f32 %v1188, %v1335
        %v1434 = vadd.f32 %v1189, %v1337
        %v1435 = vadd.f32 %v1190, %v1340
        %v1436 = vadd.f32 %v1191, %v1342
        %v1437 = vadd.f32 %v1192, %v1345
        %v1438 = vadd.f32 %v1193, %v1347
        %v1439 = vadd.f32 %v1194, %v1350
        %v1440 = vadd.f32 %v1195, %v1352
        %v1441 = vadd.f32 %v1196, %v1355
        %v1442 = vadd.f32 %v1197, %v1357
        %v1443 = vadd.f32 %v1198, %v1360
        %v1444 = vadd.f32 %v1199, %v1362
        %v1445 = vadd.f32 %v1200, %v1365
        %v1446 = vadd.f32 %v1201, %v1367
        %v1447 = vadd.f32 %v1202, %v1370
        %v1448 = vadd.f32 %v1203, %v1372
        %v1449 = vadd.f32 %v1204, %v1375
        %v1450 = vadd.f32 %v1205, %v1377
        %v1451 = vadd.f32 %v1206, %v1380
        %v1452 = vadd.f32 %v1207, %v1382
        %v1453 = vadd.f32 %v1208, %v1385
        %v1454 = vadd.f32 %v1209, %v1387
        %v1455 = vadd.f32 %v1210, %v1390
        %v1456 = vadd.f32 %v1211, %v1392
        %v1457 = vlaneseq
        %v1458 = vshrl.u32 %v1457, 7
        %v1459 = vsub.s32 2, %v1458
        %v1460 = vrot.slane %v1093, %v1459
        %v1461 = vmul.f32 %v1096, %v1460
        %v1462 = vmul.f32 %v1097, %v1460
        %v1463 = vmul.f32 %v1098, %v1460
        %v1464 = vmul.f32 %v1099, %v1460
        %v1465 = vmul.f32 %v1100, %v1460
        %v1466 = vmul.f32 %v1101, %v1460
        %v1467 = vmul.f32 %v1102, %v1460
        %v1468 = vmul.f32 %v1103, %v1460
        %v1469 = vmul.f32 %v1104, %v1460
        %v1470 = vmul.f32 %v1105, %v1460
        %v1471 = vmul.f32 %v1106, %v1460
        %v1472 = vmul.f32 %v1107, %v1460
        %v1473 = vmul.f32 %v1108, %v1460
        %v1474 = vmul.f32 %v1109, %v1460
        %v1475 = vmul.f32 %v1110, %v1460
        %v1476 = vmul.f32 %v1111, %v1460
        %v1477 = vmul.f32 %v1112, %v1460
        %v1478 = vmul.f32 %v1113, %v1460
        %v1479 = vmul.f32 %v1114, %v1460
        %v1480 = vmul.f32 %v1115, %v1460
        %v1481 = vmul.f32 %v1116, %v1460
        %v1482 = vmul.f32 %v1117, %v1460
        %v1483 = vmul.f32 %v1118, %v1460
        %v1484 = vmul.f32 %v1119, %v1460
        %v1485 = vmul.f32 %v1120, %v1460
        %v1486 = vmul.f32 %v1121, %v1460
        %v1487 = vmul.f32 %v1122, %v1460
        %v1488 = vmul.f32 %v1123, %v1460
        %v1489 = vmul.f32 %v1124, %v1460
        %v1490 = vmul.f32 %v1125, %v1460
        %v1491 = vmul.f32 %v1126, %v1460
        %v1492 = vmul.f32 %v1127, %v1460
        %v1493 = vmul.f32 %v1128, %v1460
        %v1494 = vmul.f32 %v1129, %v1460
        %v1495 = vmul.f32 %v1130, %v1460
        %v1496 = vmul.f32 %v1131, %v1460
        %v1497 = vmul.f32 %v1132, %v1460
        %v1498 = vmul.f32 %v1133, %v1460
        %v1499 = vmul.f32 %v1134, %v1460
        %v1500 = vmul.f32 %v1135, %v1460
        %v1501 = vmul.f32 %v1136, %v1460
        %v1502 = vmul.f32 %v1137, %v1460
        %v1503 = vmul.f32 %v1138, %v1460
        %v1504 = vmul.f32 %v1139, %v1460
        %v1505 = vmul.f32 %v1140, %v1460
        %v1506 = vmul.f32 %v1141, %v1460
        %v1507 = vmul.f32 %v1142, %v1460
        %v1508 = vmul.f32 %v1143, %v1460
        %vm1557 = vcmask 1045504
        %v1558 = vrot.slane %v1461, 2
        %v1559 = vrot.slane %v1462, 2
        %v1560 = vsel %vm1557, %v1558, %v1559
        %v1561 = vrot.slane %v1463, 2
        %v1562 = vsel %vm1557, %v1559, %v1561
        %v1563 = vrot.slane %v1464, 2
        %v1564 = vrot.slane %v1465, 2
        %v1565 = vsel %vm1557, %v1563, %v1564
        %v1566 = vrot.slane %v1466, 2
        %v1567 = vsel %vm1557, %v1564, %v1566
        %v1568 = vrot.slane %v1467, 2
        %v1569 = vrot.slane %v1468, 2
        %v1570 = vsel %vm1557, %v1568, %v1569
        %v1571 = vrot.slane %v1469, 2
        %v1572 = vsel %vm1557, %v1569, %v1571
        %v1573 = vrot.slane %v1470, 2
        %v1574 = vrot.slane %v1471, 2
        %v1575 = vsel %vm1557, %v1573, %v1574
        %v1576 = vrot.slane %v1472, 2
        %v1577 = vsel %vm1557, %v1574, %v1576
        %v1578 = vrot.slane %v1473, 2
        %v1579 = vrot.slane %v1474, 2
        %v1580 = vsel %vm1557, %v1578, %v1579
        %v1581 = vrot.slane %v1475, 2
        %v1582 = vsel %vm1557, %v1579, %v1581
        %v1583 = vrot.slane %v1476, 2
        %v1584 = vrot.slane %v1477, 2
        %v1585 = vsel %vm1557, %v1583, %v1584
        %v1586 = vrot.slane %v1478, 2
        %v1587 = vsel %vm1557, %v1584, %v1586
        %v1588 = vrot.slane %v1479, 2
        %v1589 = vrot.slane %v1480, 2
        %v1590 = vsel %vm1557, %v1588, %v1589
        %v1591 = vrot.slane %v1481, 2
        %v1592 = vsel %vm1557, %v1589, %v1591
        %v1593 = vrot.slane %v1482, 2
        %v1594 = vrot.slane %v1483, 2
        %v1595 = vsel %vm1557, %v1593, %v1594
        %v1596 = vrot.slane %v1484, 2
        %v1597 = vsel %vm1557, %v1594, %v1596
        %v1598 = vrot.slane %v1485, 2
        %v1599 = vrot.slane %v1486, 2
        %v1600 = vsel %vm1557, %v1598, %v1599
        %v1601 = vrot.slane %v1487, 2
        %v1602 = vsel %vm1557, %v1599, %v1601
        %v1603 = vrot.slane %v1488, 2
        %v1604 = vrot.slane %v1489, 2
        %v1605 = vsel %vm1557, %v1603, %v1604
        %v1606 = vrot.slane %v1490, 2
        %v1607 = vsel %vm1557, %v1604, %v1606
        %v1608 = vrot.slane %v1491, 2
        %v1609 = vrot.slane %v1492, 2
        %v1610 = vsel %vm1557, %v1608, %v1609
        %v1611 = vrot.slane %v1493, 2
        %v1612 = vsel %vm1557, %v1609, %v1611
        %v1613 = vrot.slane %v1494, 2
        %v1614 = vrot.slane %v1495, 2
        %v1615 = vsel %vm1557, %v1613, %v1614
        %v1616 = vrot.slane %v1496, 2
        %v1617 = vsel %vm1557, %v1614, %v1616
        %v1618 = vrot.slane %v1497, 2
        %v1619 = vrot.slane %v1498, 2
        %v1620 = vsel %vm1557, %v1618, %v1619
        %v1621 = vrot.slane %v1499, 2
        %v1622 = vsel %vm1557, %v1619, %v1621
        %v1623 = vrot.slane %v1500, 2
        %v1624 = vrot.slane %v1501, 2
        %v1625 = vsel %vm1557, %v1623, %v1624
        %v1626 = vrot.slane %v1502, 2
        %v1627 = vsel %vm1557, %v1624, %v1626
        %v1628 = vrot.slane %v1503, 2
        %v1629 = vrot.slane %v1504, 2
        %v1630 = vsel %vm1557, %v1628, %v1629
        %v1631 = vrot.slane %v1505, 2
        %v1632 = vsel %vm1557, %v1629, %v1631
        %v1633 = vrot.slane %v1506, 2
        %v1634 = vrot.slane %v1507, 2
        %v1635 = vsel %vm1557, %v1633, %v1634
        %v1636 = vrot.slane %v1508, 2
        %v1637 = vsel %vm1557, %v1634, %v1636
        %v1670 = vadd.f32 %v1425, %v1560
        %v1671 = vadd.f32 %v1426, %v1562
        %v1672 = vadd.f32 %v1427, %v1565
        %v1673 = vadd.f32 %v1428, %v1567
        %v1674 = vadd.f32 %v1429, %v1570
        %v1675 = vadd.f32 %v1430, %v1572
        %v1676 = vadd.f32 %v1431, %v1575
        %v1677 = vadd.f32 %v1432, %v1577
        %v1678 = vadd.f32 %v1433, %v1580
        %v1679 = vadd.f32 %v1434, %v1582
        %v1680 = vadd.f32 %v1435, %v1585
        %v1681 = vadd.f32 %v1436, %v1587
        %v1682 = vadd.f32 %v1437, %v1590
        %v1683 = vadd.f32 %v1438, %v1592
        %v1684 = vadd.f32 %v1439, %v1595
        %v1685 = vadd.f32 %v1440, %v1597
        %v1686 = vadd.f32 %v1441, %v1600
        %v1687 = vadd.f32 %v1442, %v1602
        %v1688 = vadd.f32 %v1443, %v1605
        %v1689 = vadd.f32 %v1444, %v1607
        %v1690 = vadd.f32 %v1445, %v1610
        %v1691 = vadd.f32 %v1446, %v1612
        %v1692 = vadd.f32 %v1447, %v1615
        %v1693 = vadd.f32 %v1448, %v1617
        %v1694 = vadd.f32 %v1449, %v1620
        %v1695 = vadd.f32 %v1450, %v1622
        %v1696 = vadd.f32 %v1451, %v1625
        %v1697 = vadd.f32 %v1452, %v1627
        %v1698 = vadd.f32 %v1453, %v1630
        %v1699 = vadd.f32 %v1454, %v1632
        %v1700 = vadd.f32 %v1455, %v1635
        %v1701 = vadd.f32 %v1456, %v1637
        %v1702 = vld [vmem:[%s1060] sm:$0xff]
        %v1703 = vld [vmem:[%s1060 + $0x8] sm:$0xff]
        %v1704 = vld [vmem:[%s1060 + $0x10] sm:$0xff]
        %v1705 = vld [vmem:[%s1060 + $0x18] sm:$0xff]
        %v1706 = vld [vmem:[%s1060 + $0x20] sm:$0xff]
        %v1707 = vld [vmem:[%s1060 + $0x28] sm:$0xff]
        %v1708 = vld [vmem:[%s1060 + $0x30] sm:$0xff]
        %v1709 = vld [vmem:[%s1060 + $0x38] sm:$0xff]
        %v1710 = vld [vmem:[%s1060 + $0x40] sm:$0xff]
        %v1711 = vld [vmem:[%s1060 + $0x48] sm:$0xff]
        %v1712 = vld [vmem:[%s1060 + $0x50] sm:$0xff]
        %v1713 = vld [vmem:[%s1060 + $0x58] sm:$0xff]
        %v1714 = vld [vmem:[%s1060 + $0x60] sm:$0xff]
        %v1715 = vld [vmem:[%s1060 + $0x68] sm:$0xff]
        %v1716 = vld [vmem:[%s1060 + $0x70] sm:$0xff]
        %v1717 = vld [vmem:[%s1060 + $0x78] sm:$0xff]
        %v1718 = vld [vmem:[%s1060 + $0x80] sm:$0xff]
        %v1719 = vld [vmem:[%s1060 + $0x88] sm:$0xff]
        %v1720 = vld [vmem:[%s1060 + $0x90] sm:$0xff]
        %v1721 = vld [vmem:[%s1060 + $0x98] sm:$0xff]
        %v1722 = vld [vmem:[%s1060 + $0xa0] sm:$0xff]
        %v1723 = vld [vmem:[%s1060 + $0xa8] sm:$0xff]
        %v1724 = vld [vmem:[%s1060 + $0xb0] sm:$0xff]
        %v1725 = vld [vmem:[%s1060 + $0xb8] sm:$0xff]
        %v1726 = vld [vmem:[%s1060 + $0xc0] sm:$0xff]
        %v1727 = vld [vmem:[%s1060 + $0xc8] sm:$0xff]
        %v1728 = vld [vmem:[%s1060 + $0xd0] sm:$0xff]
        %v1729 = vld [vmem:[%s1060 + $0xd8] sm:$0xff]
        %v1730 = vld [vmem:[%s1060 + $0xe0] sm:$0xff]
        %v1731 = vld [vmem:[%s1060 + $0xe8] sm:$0xff]
        %v1732 = vld [vmem:[%s1060 + $0xf0] sm:$0xff]
        %v1733 = vld [vmem:[%s1060 + $0xf8] sm:$0xff]
        %v1734 = vld [vmem:[%s1060 + $0x100] sm:$0xff]
        %v1735 = vld [vmem:[%s1060 + $0x108] sm:$0xff]
        %v1736 = vld [vmem:[%s1060 + $0x110] sm:$0xff]
        %v1737 = vld [vmem:[%s1060 + $0x118] sm:$0xff]
        %v1738 = vld [vmem:[%s1060 + $0x120] sm:$0xff]
        %v1739 = vld [vmem:[%s1060 + $0x128] sm:$0xff]
        %v1740 = vld [vmem:[%s1060 + $0x130] sm:$0xff]
        %v1741 = vld [vmem:[%s1060 + $0x138] sm:$0xff]
        %v1742 = vld [vmem:[%s1060 + $0x140] sm:$0xff]
        %v1743 = vld [vmem:[%s1060 + $0x148] sm:$0xff]
        %v1744 = vld [vmem:[%s1060 + $0x150] sm:$0xff]
        %v1745 = vld [vmem:[%s1060 + $0x158] sm:$0xff]
        %v1746 = vld [vmem:[%s1060 + $0x160] sm:$0xff]
        %v1747 = vld [vmem:[%s1060 + $0x168] sm:$0xff]
        %v1748 = vld [vmem:[%s1060 + $0x170] sm:$0xff]
        %v1749 = vld [vmem:[%s1060 + $0x178] sm:$0xff]
        %v1750 = vlaneseq
        %v1751 = vshrl.u32 %v1750, 7
        %v1752 = vsub.s32 0, %v1751
        %v1753 = vrot.slane %v1094, %v1752
        %v1754 = vmul.f32 %v1702, %v1753
        %v1755 = vmul.f32 %v1703, %v1753
        %v1756 = vmul.f32 %v1705, %v1753
        %v1757 = vmul.f32 %v1706, %v1753
        %v1758 = vmul.f32 %v1708, %v1753
        %v1759 = vmul.f32 %v1709, %v1753
        %v1760 = vmul.f32 %v1711, %v1753
        %v1761 = vmul.f32 %v1712, %v1753
        %v1762 = vmul.f32 %v1714, %v1753
        %v1763 = vmul.f32 %v1715, %v1753
        %v1764 = vmul.f32 %v1717, %v1753
        %v1765 = vmul.f32 %v1718, %v1753
        %v1766 = vmul.f32 %v1720, %v1753
        %v1767 = vmul.f32 %v1721, %v1753
        %v1768 = vmul.f32 %v1723, %v1753
        %v1769 = vmul.f32 %v1724, %v1753
        %v1770 = vmul.f32 %v1726, %v1753
        %v1771 = vmul.f32 %v1727, %v1753
        %v1772 = vmul.f32 %v1729, %v1753
        %v1773 = vmul.f32 %v1730, %v1753
        %v1774 = vmul.f32 %v1732, %v1753
        %v1775 = vmul.f32 %v1733, %v1753
        %v1776 = vmul.f32 %v1735, %v1753
        %v1777 = vmul.f32 %v1736, %v1753
        %v1778 = vmul.f32 %v1738, %v1753
        %v1779 = vmul.f32 %v1739, %v1753
        %v1780 = vmul.f32 %v1741, %v1753
        %v1781 = vmul.f32 %v1742, %v1753
        %v1782 = vmul.f32 %v1744, %v1753
        %v1783 = vmul.f32 %v1745, %v1753
        %v1784 = vmul.f32 %v1747, %v1753
        %v1785 = vmul.f32 %v1748, %v1753
        %v1786 = vadd.f32 %v1670, %v1754
        %v1787 = vadd.f32 %v1671, %v1755
        %v1788 = vadd.f32 %v1672, %v1756
        %v1789 = vadd.f32 %v1673, %v1757
        %v1790 = vadd.f32 %v1674, %v1758
        %v1791 = vadd.f32 %v1675, %v1759
        %v1792 = vadd.f32 %v1676, %v1760
        %v1793 = vadd.f32 %v1677, %v1761
        %v1794 = vadd.f32 %v1678, %v1762
        %v1795 = vadd.f32 %v1679, %v1763
        %v1796 = vadd.f32 %v1680, %v1764
        %v1797 = vadd.f32 %v1681, %v1765
        %v1798 = vadd.f32 %v1682, %v1766
        %v1799 = vadd.f32 %v1683, %v1767
        %v1800 = vadd.f32 %v1684, %v1768
        %v1801 = vadd.f32 %v1685, %v1769
        %v1802 = vadd.f32 %v1686, %v1770
        %v1803 = vadd.f32 %v1687, %v1771
        %v1804 = vadd.f32 %v1688, %v1772
        %v1805 = vadd.f32 %v1689, %v1773
        %v1806 = vadd.f32 %v1690, %v1774
        %v1807 = vadd.f32 %v1691, %v1775
        %v1808 = vadd.f32 %v1692, %v1776
        %v1809 = vadd.f32 %v1693, %v1777
        %v1810 = vadd.f32 %v1694, %v1778
        %v1811 = vadd.f32 %v1695, %v1779
        %v1812 = vadd.f32 %v1696, %v1780
        %v1813 = vadd.f32 %v1697, %v1781
        %v1814 = vadd.f32 %v1698, %v1782
        %v1815 = vadd.f32 %v1699, %v1783
        %v1816 = vadd.f32 %v1700, %v1784
        %v1817 = vadd.f32 %v1701, %v1785
        %v1818 = vlaneseq
        %v1819 = vshrl.u32 %v1818, 7
        %v1820 = vsub.s32 1, %v1819
        %v1821 = vrot.slane %v1094, %v1820
        %v1822 = vmul.f32 %v1702, %v1821
        %v1823 = vmul.f32 %v1703, %v1821
        %v1824 = vmul.f32 %v1704, %v1821
        %v1825 = vmul.f32 %v1705, %v1821
        %v1826 = vmul.f32 %v1706, %v1821
        %v1827 = vmul.f32 %v1707, %v1821
        %v1828 = vmul.f32 %v1708, %v1821
        %v1829 = vmul.f32 %v1709, %v1821
        %v1830 = vmul.f32 %v1710, %v1821
        %v1831 = vmul.f32 %v1711, %v1821
        %v1832 = vmul.f32 %v1712, %v1821
        %v1833 = vmul.f32 %v1713, %v1821
        %v1834 = vmul.f32 %v1714, %v1821
        %v1835 = vmul.f32 %v1715, %v1821
        %v1836 = vmul.f32 %v1716, %v1821
        %v1837 = vmul.f32 %v1717, %v1821
        %v1838 = vmul.f32 %v1718, %v1821
        %v1839 = vmul.f32 %v1719, %v1821
        %v1840 = vmul.f32 %v1720, %v1821
        %v1841 = vmul.f32 %v1721, %v1821
        %v1842 = vmul.f32 %v1722, %v1821
        %v1843 = vmul.f32 %v1723, %v1821
        %v1844 = vmul.f32 %v1724, %v1821
        %v1845 = vmul.f32 %v1725, %v1821
        %v1846 = vmul.f32 %v1726, %v1821
        %v1847 = vmul.f32 %v1727, %v1821
        %v1848 = vmul.f32 %v1728, %v1821
        %v1849 = vmul.f32 %v1729, %v1821
        %v1850 = vmul.f32 %v1730, %v1821
        %v1851 = vmul.f32 %v1731, %v1821
        %v1852 = vmul.f32 %v1732, %v1821
        %v1853 = vmul.f32 %v1733, %v1821
        %v1854 = vmul.f32 %v1734, %v1821
        %v1855 = vmul.f32 %v1735, %v1821
        %v1856 = vmul.f32 %v1736, %v1821
        %v1857 = vmul.f32 %v1737, %v1821
        %v1858 = vmul.f32 %v1738, %v1821
        %v1859 = vmul.f32 %v1739, %v1821
        %v1860 = vmul.f32 %v1740, %v1821
        %v1861 = vmul.f32 %v1741, %v1821
        %v1862 = vmul.f32 %v1742, %v1821
        %v1863 = vmul.f32 %v1743, %v1821
        %v1864 = vmul.f32 %v1744, %v1821
        %v1865 = vmul.f32 %v1745, %v1821
        %v1866 = vmul.f32 %v1746, %v1821
        %v1867 = vmul.f32 %v1747, %v1821
        %v1868 = vmul.f32 %v1748, %v1821
        %v1869 = vmul.f32 %v1749, %v1821
        %v1918 = vrot.slane %v1822, 1
        %v1919 = vrot.slane %v1823, 1
        %v1920 = vsel %vm1312, %v1918, %v1919
        %v1921 = vrot.slane %v1824, 1
        %v1922 = vsel %vm1312, %v1919, %v1921
        %v1923 = vrot.slane %v1825, 1
        %v1924 = vrot.slane %v1826, 1
        %v1925 = vsel %vm1312, %v1923, %v1924
        %v1926 = vrot.slane %v1827, 1
        %v1927 = vsel %vm1312, %v1924, %v1926
        %v1928 = vrot.slane %v1828, 1
        %v1929 = vrot.slane %v1829, 1
        %v1930 = vsel %vm1312, %v1928, %v1929
        %v1931 = vrot.slane %v1830, 1
        %v1932 = vsel %vm1312, %v1929, %v1931
        %v1933 = vrot.slane %v1831, 1
        %v1934 = vrot.slane %v1832, 1
        %v1935 = vsel %vm1312, %v1933, %v1934
        %v1936 = vrot.slane %v1833, 1
        %v1937 = vsel %vm1312, %v1934, %v1936
        %v1938 = vrot.slane %v1834, 1
        %v1939 = vrot.slane %v1835, 1
        %v1940 = vsel %vm1312, %v1938, %v1939
        %v1941 = vrot.slane %v1836, 1
        %v1942 = vsel %vm1312, %v1939, %v1941
        %v1943 = vrot.slane %v1837, 1
        %v1944 = vrot.slane %v1838, 1
        %v1945 = vsel %vm1312, %v1943, %v1944
        %v1946 = vrot.slane %v1839, 1
        %v1947 = vsel %vm1312, %v1944, %v1946
        %v1948 = vrot.slane %v1840, 1
        %v1949 = vrot.slane %v1841, 1
        %v1950 = vsel %vm1312, %v1948, %v1949
        %v1951 = vrot.slane %v1842, 1
        %v1952 = vsel %vm1312, %v1949, %v1951
        %v1953 = vrot.slane %v1843, 1
        %v1954 = vrot.slane %v1844, 1
        %v1955 = vsel %vm1312, %v1953, %v1954
        %v1956 = vrot.slane %v1845, 1
        %v1957 = vsel %vm1312, %v1954, %v1956
        %v1958 = vrot.slane %v1846, 1
        %v1959 = vrot.slane %v1847, 1
        %v1960 = vsel %vm1312, %v1958, %v1959
        %v1961 = vrot.slane %v1848, 1
        %v1962 = vsel %vm1312, %v1959, %v1961
        %v1963 = vrot.slane %v1849, 1
        %v1964 = vrot.slane %v1850, 1
        %v1965 = vsel %vm1312, %v1963, %v1964
        %v1966 = vrot.slane %v1851, 1
        %v1967 = vsel %vm1312, %v1964, %v1966
        %v1968 = vrot.slane %v1852, 1
        %v1969 = vrot.slane %v1853, 1
        %v1970 = vsel %vm1312, %v1968, %v1969
        %v1971 = vrot.slane %v1854, 1
        %v1972 = vsel %vm1312, %v1969, %v1971
        %v1973 = vrot.slane %v1855, 1
        %v1974 = vrot.slane %v1856, 1
        %v1975 = vsel %vm1312, %v1973, %v1974
        %v1976 = vrot.slane %v1857, 1
        %v1977 = vsel %vm1312, %v1974, %v1976
        %v1978 = vrot.slane %v1858, 1
        %v1979 = vrot.slane %v1859, 1
        %v1980 = vsel %vm1312, %v1978, %v1979
        %v1981 = vrot.slane %v1860, 1
        %v1982 = vsel %vm1312, %v1979, %v1981
        %v1983 = vrot.slane %v1861, 1
        %v1984 = vrot.slane %v1862, 1
        %v1985 = vsel %vm1312, %v1983, %v1984
        %v1986 = vrot.slane %v1863, 1
        %v1987 = vsel %vm1312, %v1984, %v1986
        %v1988 = vrot.slane %v1864, 1
        %v1989 = vrot.slane %v1865, 1
        %v1990 = vsel %vm1312, %v1988, %v1989
        %v1991 = vrot.slane %v1866, 1
        %v1992 = vsel %vm1312, %v1989, %v1991
        %v1993 = vrot.slane %v1867, 1
        %v1994 = vrot.slane %v1868, 1
        %v1995 = vsel %vm1312, %v1993, %v1994
        %v1996 = vrot.slane %v1869, 1
        %v1997 = vsel %vm1312, %v1994, %v1996
        %v2030 = vadd.f32 %v1786, %v1920
        %v2031 = vadd.f32 %v1787, %v1922
        %v2032 = vadd.f32 %v1788, %v1925
        %v2033 = vadd.f32 %v1789, %v1927
        %v2034 = vadd.f32 %v1790, %v1930
        %v2035 = vadd.f32 %v1791, %v1932
        %v2036 = vadd.f32 %v1792, %v1935
        %v2037 = vadd.f32 %v1793, %v1937
        %v2038 = vadd.f32 %v1794, %v1940
        %v2039 = vadd.f32 %v1795, %v1942
        %v2040 = vadd.f32 %v1796, %v1945
        %v2041 = vadd.f32 %v1797, %v1947
        %v2042 = vadd.f32 %v1798, %v1950
        %v2043 = vadd.f32 %v1799, %v1952
        %v2044 = vadd.f32 %v1800, %v1955
        %v2045 = vadd.f32 %v1801, %v1957
        %v2046 = vadd.f32 %v1802, %v1960
        %v2047 = vadd.f32 %v1803, %v1962
        %v2048 = vadd.f32 %v1804, %v1965
        %v2049 = vadd.f32 %v1805, %v1967
        %v2050 = vadd.f32 %v1806, %v1970
        %v2051 = vadd.f32 %v1807, %v1972
        %v2052 = vadd.f32 %v1808, %v1975
        %v2053 = vadd.f32 %v1809, %v1977
        %v2054 = vadd.f32 %v1810, %v1980
        %v2055 = vadd.f32 %v1811, %v1982
        %v2056 = vadd.f32 %v1812, %v1985
        %v2057 = vadd.f32 %v1813, %v1987
        %v2058 = vadd.f32 %v1814, %v1990
        %v2059 = vadd.f32 %v1815, %v1992
        %v2060 = vadd.f32 %v1816, %v1995
        %v2061 = vadd.f32 %v1817, %v1997
        %v2062 = vlaneseq
        %v2063 = vshrl.u32 %v2062, 7
        %v2064 = vsub.s32 2, %v2063
        %v2065 = vrot.slane %v1094, %v2064
        %v2066 = vmul.f32 %v1702, %v2065
        %v2067 = vmul.f32 %v1703, %v2065
        %v2068 = vmul.f32 %v1704, %v2065
        %v2069 = vmul.f32 %v1705, %v2065
        %v2070 = vmul.f32 %v1706, %v2065
        %v2071 = vmul.f32 %v1707, %v2065
        %v2072 = vmul.f32 %v1708, %v2065
        %v2073 = vmul.f32 %v1709, %v2065
        %v2074 = vmul.f32 %v1710, %v2065
        %v2075 = vmul.f32 %v1711, %v2065
        %v2076 = vmul.f32 %v1712, %v2065
        %v2077 = vmul.f32 %v1713, %v2065
        %v2078 = vmul.f32 %v1714, %v2065
        %v2079 = vmul.f32 %v1715, %v2065
        %v2080 = vmul.f32 %v1716, %v2065
        %v2081 = vmul.f32 %v1717, %v2065
        %v2082 = vmul.f32 %v1718, %v2065
        %v2083 = vmul.f32 %v1719, %v2065
        %v2084 = vmul.f32 %v1720, %v2065
        %v2085 = vmul.f32 %v1721, %v2065
        %v2086 = vmul.f32 %v1722, %v2065
        %v2087 = vmul.f32 %v1723, %v2065
        %v2088 = vmul.f32 %v1724, %v2065
        %v2089 = vmul.f32 %v1725, %v2065
        %v2090 = vmul.f32 %v1726, %v2065
        %v2091 = vmul.f32 %v1727, %v2065
        %v2092 = vmul.f32 %v1728, %v2065
        %v2093 = vmul.f32 %v1729, %v2065
        %v2094 = vmul.f32 %v1730, %v2065
        %v2095 = vmul.f32 %v1731, %v2065
        %v2096 = vmul.f32 %v1732, %v2065
        %v2097 = vmul.f32 %v1733, %v2065
        %v2098 = vmul.f32 %v1734, %v2065
        %v2099 = vmul.f32 %v1735, %v2065
        %v2100 = vmul.f32 %v1736, %v2065
        %v2101 = vmul.f32 %v1737, %v2065
        %v2102 = vmul.f32 %v1738, %v2065
        %v2103 = vmul.f32 %v1739, %v2065
        %v2104 = vmul.f32 %v1740, %v2065
        %v2105 = vmul.f32 %v1741, %v2065
        %v2106 = vmul.f32 %v1742, %v2065
        %v2107 = vmul.f32 %v1743, %v2065
        %v2108 = vmul.f32 %v1744, %v2065
        %v2109 = vmul.f32 %v1745, %v2065
        %v2110 = vmul.f32 %v1746, %v2065
        %v2111 = vmul.f32 %v1747, %v2065
        %v2112 = vmul.f32 %v1748, %v2065
        %v2113 = vmul.f32 %v1749, %v2065
        %v2162 = vrot.slane %v2066, 2
        %v2163 = vrot.slane %v2067, 2
        %v2164 = vsel %vm1557, %v2162, %v2163
        %v2165 = vrot.slane %v2068, 2
        %v2166 = vsel %vm1557, %v2163, %v2165
        %v2167 = vrot.slane %v2069, 2
        %v2168 = vrot.slane %v2070, 2
        %v2169 = vsel %vm1557, %v2167, %v2168
        %v2170 = vrot.slane %v2071, 2
        %v2171 = vsel %vm1557, %v2168, %v2170
        %v2172 = vrot.slane %v2072, 2
        %v2173 = vrot.slane %v2073, 2
        %v2174 = vsel %vm1557, %v2172, %v2173
        %v2175 = vrot.slane %v2074, 2
        %v2176 = vsel %vm1557, %v2173, %v2175
        %v2177 = vrot.slane %v2075, 2
        %v2178 = vrot.slane %v2076, 2
        %v2179 = vsel %vm1557, %v2177, %v2178
        %v2180 = vrot.slane %v2077, 2
        %v2181 = vsel %vm1557, %v2178, %v2180
        %v2182 = vrot.slane %v2078, 2
        %v2183 = vrot.slane %v2079, 2
        %v2184 = vsel %vm1557, %v2182, %v2183
        %v2185 = vrot.slane %v2080, 2
        %v2186 = vsel %vm1557, %v2183, %v2185
        %v2187 = vrot.slane %v2081, 2
        %v2188 = vrot.slane %v2082, 2
        %v2189 = vsel %vm1557, %v2187, %v2188
        %v2190 = vrot.slane %v2083, 2
        %v2191 = vsel %vm1557, %v2188, %v2190
        %v2192 = vrot.slane %v2084, 2
        %v2193 = vrot.slane %v2085, 2
        %v2194 = vsel %vm1557, %v2192, %v2193
        %v2195 = vrot.slane %v2086, 2
        %v2196 = vsel %vm1557, %v2193, %v2195
        %v2197 = vrot.slane %v2087, 2
        %v2198 = vrot.slane %v2088, 2
        %v2199 = vsel %vm1557, %v2197, %v2198
        %v2200 = vrot.slane %v2089, 2
        %v2201 = vsel %vm1557, %v2198, %v2200
        %v2202 = vrot.slane %v2090, 2
        %v2203 = vrot.slane %v2091, 2
        %v2204 = vsel %vm1557, %v2202, %v2203
        %v2205 = vrot.slane %v2092, 2
        %v2206 = vsel %vm1557, %v2203, %v2205
        %v2207 = vrot.slane %v2093, 2
        %v2208 = vrot.slane %v2094, 2
        %v2209 = vsel %vm1557, %v2207, %v2208
        %v2210 = vrot.slane %v2095, 2
        %v2211 = vsel %vm1557, %v2208, %v2210
        %v2212 = vrot.slane %v2096, 2
        %v2213 = vrot.slane %v2097, 2
        %v2214 = vsel %vm1557, %v2212, %v2213
        %v2215 = vrot.slane %v2098, 2
        %v2216 = vsel %vm1557, %v2213, %v2215
        %v2217 = vrot.slane %v2099, 2
        %v2218 = vrot.slane %v2100, 2
        %v2219 = vsel %vm1557, %v2217, %v2218
        %v2220 = vrot.slane %v2101, 2
        %v2221 = vsel %vm1557, %v2218, %v2220
        %v2222 = vrot.slane %v2102, 2
        %v2223 = vrot.slane %v2103, 2
        %v2224 = vsel %vm1557, %v2222, %v2223
        %v2225 = vrot.slane %v2104, 2
        %v2226 = vsel %vm1557, %v2223, %v2225
        %v2227 = vrot.slane %v2105, 2
        %v2228 = vrot.slane %v2106, 2
        %v2229 = vsel %vm1557, %v2227, %v2228
        %v2230 = vrot.slane %v2107, 2
        %v2231 = vsel %vm1557, %v2228, %v2230
        %v2232 = vrot.slane %v2108, 2
        %v2233 = vrot.slane %v2109, 2
        %v2234 = vsel %vm1557, %v2232, %v2233
        %v2235 = vrot.slane %v2110, 2
        %v2236 = vsel %vm1557, %v2233, %v2235
        %v2237 = vrot.slane %v2111, 2
        %v2238 = vrot.slane %v2112, 2
        %v2239 = vsel %vm1557, %v2237, %v2238
        %v2240 = vrot.slane %v2113, 2
        %v2241 = vsel %vm1557, %v2238, %v2240
        %v2274 = vadd.f32 %v2030, %v2164
        %v2275 = vadd.f32 %v2031, %v2166
        %v2276 = vadd.f32 %v2032, %v2169
        %v2277 = vadd.f32 %v2033, %v2171
        %v2278 = vadd.f32 %v2034, %v2174
        %v2279 = vadd.f32 %v2035, %v2176
        %v2280 = vadd.f32 %v2036, %v2179
        %v2281 = vadd.f32 %v2037, %v2181
        %v2282 = vadd.f32 %v2038, %v2184
        %v2283 = vadd.f32 %v2039, %v2186
        %v2284 = vadd.f32 %v2040, %v2189
        %v2285 = vadd.f32 %v2041, %v2191
        %v2286 = vadd.f32 %v2042, %v2194
        %v2287 = vadd.f32 %v2043, %v2196
        %v2288 = vadd.f32 %v2044, %v2199
        %v2289 = vadd.f32 %v2045, %v2201
        %v2290 = vadd.f32 %v2046, %v2204
        %v2291 = vadd.f32 %v2047, %v2206
        %v2292 = vadd.f32 %v2048, %v2209
        %v2293 = vadd.f32 %v2049, %v2211
        %v2294 = vadd.f32 %v2050, %v2214
        %v2295 = vadd.f32 %v2051, %v2216
        %v2296 = vadd.f32 %v2052, %v2219
        %v2297 = vadd.f32 %v2053, %v2221
        %v2298 = vadd.f32 %v2054, %v2224
        %v2299 = vadd.f32 %v2055, %v2226
        %v2300 = vadd.f32 %v2056, %v2229
        %v2301 = vadd.f32 %v2057, %v2231
        %v2302 = vadd.f32 %v2058, %v2234
        %v2303 = vadd.f32 %v2059, %v2236
        %v2304 = vadd.f32 %v2060, %v2239
        %v2305 = vadd.f32 %v2061, %v2241
        %s2306 = scalar_lea.vmem [#allocation2], 48
        %v2307 = vld [vmem:[%s2306] sm:$0xff]
        %v2308 = vld [vmem:[%s2306 + $0x8] sm:$0xff]
        %v2309 = vld [vmem:[%s2306 + $0x10] sm:$0xff]
        %v2310 = vld [vmem:[%s2306 + $0x18] sm:$0xff]
        %v2311 = vld [vmem:[%s2306 + $0x20] sm:$0xff]
        %v2312 = vld [vmem:[%s2306 + $0x28] sm:$0xff]
        %v2313 = vld [vmem:[%s2306 + $0x30] sm:$0xff]
        %v2314 = vld [vmem:[%s2306 + $0x38] sm:$0xff]
        %v2315 = vld [vmem:[%s2306 + $0x40] sm:$0xff]
        %v2316 = vld [vmem:[%s2306 + $0x48] sm:$0xff]
        %v2317 = vld [vmem:[%s2306 + $0x50] sm:$0xff]
        %v2318 = vld [vmem:[%s2306 + $0x58] sm:$0xff]
        %v2319 = vld [vmem:[%s2306 + $0x60] sm:$0xff]
        %v2320 = vld [vmem:[%s2306 + $0x68] sm:$0xff]
        %v2321 = vld [vmem:[%s2306 + $0x70] sm:$0xff]
        %v2322 = vld [vmem:[%s2306 + $0x78] sm:$0xff]
        %v2323 = vld [vmem:[%s2306 + $0x80] sm:$0xff]
        %v2324 = vld [vmem:[%s2306 + $0x88] sm:$0xff]
        %v2325 = vld [vmem:[%s2306 + $0x90] sm:$0xff]
        %v2326 = vld [vmem:[%s2306 + $0x98] sm:$0xff]
        %v2327 = vld [vmem:[%s2306 + $0xa0] sm:$0xff]
        %v2328 = vld [vmem:[%s2306 + $0xa8] sm:$0xff]
        %v2329 = vld [vmem:[%s2306 + $0xb0] sm:$0xff]
        %v2330 = vld [vmem:[%s2306 + $0xb8] sm:$0xff]
        %v2331 = vld [vmem:[%s2306 + $0xc0] sm:$0xff]
        %v2332 = vld [vmem:[%s2306 + $0xc8] sm:$0xff]
        %v2333 = vld [vmem:[%s2306 + $0xd0] sm:$0xff]
        %v2334 = vld [vmem:[%s2306 + $0xd8] sm:$0xff]
        %v2335 = vld [vmem:[%s2306 + $0xe0] sm:$0xff]
        %v2336 = vld [vmem:[%s2306 + $0xe8] sm:$0xff]
        %v2337 = vld [vmem:[%s2306 + $0xf0] sm:$0xff]
        %v2338 = vld [vmem:[%s2306 + $0xf8] sm:$0xff]
        %v2339 = vld [vmem:[%s2306 + $0x100] sm:$0xff]
        %v2340 = vld [vmem:[%s2306 + $0x108] sm:$0xff]
        %v2341 = vld [vmem:[%s2306 + $0x110] sm:$0xff]
        %v2342 = vld [vmem:[%s2306 + $0x118] sm:$0xff]
        %v2343 = vld [vmem:[%s2306 + $0x120] sm:$0xff]
        %v2344 = vld [vmem:[%s2306 + $0x128] sm:$0xff]
        %v2345 = vld [vmem:[%s2306 + $0x130] sm:$0xff]
        %v2346 = vld [vmem:[%s2306 + $0x138] sm:$0xff]
        %v2347 = vld [vmem:[%s2306 + $0x140] sm:$0xff]
        %v2348 = vld [vmem:[%s2306 + $0x148] sm:$0xff]
        %v2349 = vld [vmem:[%s2306 + $0x150] sm:$0xff]
        %v2350 = vld [vmem:[%s2306 + $0x158] sm:$0xff]
        %v2351 = vld [vmem:[%s2306 + $0x160] sm:$0xff]
        %v2352 = vld [vmem:[%s2306 + $0x168] sm:$0xff]
        %v2353 = vld [vmem:[%s2306 + $0x170] sm:$0xff]
        %v2354 = vld [vmem:[%s2306 + $0x178] sm:$0xff]
        %v2355 = vlaneseq
        %v2356 = vshrl.u32 %v2355, 7
        %v2357 = vsub.s32 0, %v2356
        %v2358 = vrot.slane %v1095, %v2357
        %v2359 = vmul.f32 %v2307, %v2358
        %v2360 = vmul.f32 %v2308, %v2358
        %v2361 = vmul.f32 %v2310, %v2358
        %v2362 = vmul.f32 %v2311, %v2358
        %v2363 = vmul.f32 %v2313, %v2358
        %v2364 = vmul.f32 %v2314, %v2358
        %v2365 = vmul.f32 %v2316, %v2358
        %v2366 = vmul.f32 %v2317, %v2358
        %v2367 = vmul.f32 %v2319, %v2358
        %v2368 = vmul.f32 %v2320, %v2358
        %v2369 = vmul.f32 %v2322, %v2358
        %v2370 = vmul.f32 %v2323, %v2358
        %v2371 = vmul.f32 %v2325, %v2358
        %v2372 = vmul.f32 %v2326, %v2358
        %v2373 = vmul.f32 %v2328, %v2358
        %v2374 = vmul.f32 %v2329, %v2358
        %v2375 = vmul.f32 %v2331, %v2358
        %v2376 = vmul.f32 %v2332, %v2358
        %v2377 = vmul.f32 %v2334, %v2358
        %v2378 = vmul.f32 %v2335, %v2358
        %v2379 = vmul.f32 %v2337, %v2358
        %v2380 = vmul.f32 %v2338, %v2358
        %v2381 = vmul.f32 %v2340, %v2358
        %v2382 = vmul.f32 %v2341, %v2358
        %v2383 = vmul.f32 %v2343, %v2358
        %v2384 = vmul.f32 %v2344, %v2358
        %v2385 = vmul.f32 %v2346, %v2358
        %v2386 = vmul.f32 %v2347, %v2358
        %v2387 = vmul.f32 %v2349, %v2358
        %v2388 = vmul.f32 %v2350, %v2358
        %v2389 = vmul.f32 %v2352, %v2358
        %v2390 = vmul.f32 %v2353, %v2358
        %v2391 = vadd.f32 %v2274, %v2359
        %v2392 = vadd.f32 %v2275, %v2360
        %v2393 = vadd.f32 %v2276, %v2361
        %v2394 = vadd.f32 %v2277, %v2362
        %v2395 = vadd.f32 %v2278, %v2363
        %v2396 = vadd.f32 %v2279, %v2364
        %v2397 = vadd.f32 %v2280, %v2365
        %v2398 = vadd.f32 %v2281, %v2366
        %v2399 = vadd.f32 %v2282, %v2367
        %v2400 = vadd.f32 %v2283, %v2368
        %v2401 = vadd.f32 %v2284, %v2369
        %v2402 = vadd.f32 %v2285, %v2370
        %v2403 = vadd.f32 %v2286, %v2371
        %v2404 = vadd.f32 %v2287, %v2372
        %v2405 = vadd.f32 %v2288, %v2373
        %v2406 = vadd.f32 %v2289, %v2374
        %v2407 = vadd.f32 %v2290, %v2375
        %v2408 = vadd.f32 %v2291, %v2376
        %v2409 = vadd.f32 %v2292, %v2377
        %v2410 = vadd.f32 %v2293, %v2378
        %v2411 = vadd.f32 %v2294, %v2379
        %v2412 = vadd.f32 %v2295, %v2380
        %v2413 = vadd.f32 %v2296, %v2381
        %v2414 = vadd.f32 %v2297, %v2382
        %v2415 = vadd.f32 %v2298, %v2383
        %v2416 = vadd.f32 %v2299, %v2384
        %v2417 = vadd.f32 %v2300, %v2385
        %v2418 = vadd.f32 %v2301, %v2386
        %v2419 = vadd.f32 %v2302, %v2387
        %v2420 = vadd.f32 %v2303, %v2388
        %v2421 = vadd.f32 %v2304, %v2389
        %v2422 = vadd.f32 %v2305, %v2390
        %v2423 = vlaneseq
        %v2424 = vshrl.u32 %v2423, 7
        %v2425 = vsub.s32 1, %v2424
        %v2426 = vrot.slane %v1095, %v2425
        %v2427 = vmul.f32 %v2307, %v2426
        %v2428 = vmul.f32 %v2308, %v2426
        %v2429 = vmul.f32 %v2309, %v2426
        %v2430 = vmul.f32 %v2310, %v2426
        %v2431 = vmul.f32 %v2311, %v2426
        %v2432 = vmul.f32 %v2312, %v2426
        %v2433 = vmul.f32 %v2313, %v2426
        %v2434 = vmul.f32 %v2314, %v2426
        %v2435 = vmul.f32 %v2315, %v2426
        %v2436 = vmul.f32 %v2316, %v2426
        %v2437 = vmul.f32 %v2317, %v2426
        %v2438 = vmul.f32 %v2318, %v2426
        %v2439 = vmul.f32 %v2319, %v2426
        %v2440 = vmul.f32 %v2320, %v2426
        %v2441 = vmul.f32 %v2321, %v2426
        %v2442 = vmul.f32 %v2322, %v2426
        %v2443 = vmul.f32 %v2323, %v2426
        %v2444 = vmul.f32 %v2324, %v2426
        %v2445 = vmul.f32 %v2325, %v2426
        %v2446 = vmul.f32 %v2326, %v2426
        %v2447 = vmul.f32 %v2327, %v2426
        %v2448 = vmul.f32 %v2328, %v2426
        %v2449 = vmul.f32 %v2329, %v2426
        %v2450 = vmul.f32 %v2330, %v2426
        %v2451 = vmul.f32 %v2331, %v2426
        %v2452 = vmul.f32 %v2332, %v2426
        %v2453 = vmul.f32 %v2333, %v2426
        %v2454 = vmul.f32 %v2334, %v2426
        %v2455 = vmul.f32 %v2335, %v2426
        %v2456 = vmul.f32 %v2336, %v2426
        %v2457 = vmul.f32 %v2337, %v2426
        %v2458 = vmul.f32 %v2338, %v2426
        %v2459 = vmul.f32 %v2339, %v2426
        %v2460 = vmul.f32 %v2340, %v2426
        %v2461 = vmul.f32 %v2341, %v2426
        %v2462 = vmul.f32 %v2342, %v2426
        %v2463 = vmul.f32 %v2343, %v2426
        %v2464 = vmul.f32 %v2344, %v2426
        %v2465 = vmul.f32 %v2345, %v2426
        %v2466 = vmul.f32 %v2346, %v2426
        %v2467 = vmul.f32 %v2347, %v2426
        %v2468 = vmul.f32 %v2348, %v2426
        %v2469 = vmul.f32 %v2349, %v2426
        %v2470 = vmul.f32 %v2350, %v2426
        %v2471 = vmul.f32 %v2351, %v2426
        %v2472 = vmul.f32 %v2352, %v2426
        %v2473 = vmul.f32 %v2353, %v2426
        %v2474 = vmul.f32 %v2354, %v2426
        %v2523 = vrot.slane %v2427, 1
        %v2524 = vrot.slane %v2428, 1
        %v2525 = vsel %vm1312, %v2523, %v2524
        %v2526 = vrot.slane %v2429, 1
        %v2527 = vsel %vm1312, %v2524, %v2526
        %v2528 = vrot.slane %v2430, 1
        %v2529 = vrot.slane %v2431, 1
        %v2530 = vsel %vm1312, %v2528, %v2529
        %v2531 = vrot.slane %v2432, 1
        %v2532 = vsel %vm1312, %v2529, %v2531
        %v2533 = vrot.slane %v2433, 1
        %v2534 = vrot.slane %v2434, 1
        %v2535 = vsel %vm1312, %v2533, %v2534
        %v2536 = vrot.slane %v2435, 1
        %v2537 = vsel %vm1312, %v2534, %v2536
        %v2538 = vrot.slane %v2436, 1
        %v2539 = vrot.slane %v2437, 1
        %v2540 = vsel %vm1312, %v2538, %v2539
        %v2541 = vrot.slane %v2438, 1
        %v2542 = vsel %vm1312, %v2539, %v2541
        %v2543 = vrot.slane %v2439, 1
        %v2544 = vrot.slane %v2440, 1
        %v2545 = vsel %vm1312, %v2543, %v2544
        %v2546 = vrot.slane %v2441, 1
        %v2547 = vsel %vm1312, %v2544, %v2546
        %v2548 = vrot.slane %v2442, 1
        %v2549 = vrot.slane %v2443, 1
        %v2550 = vsel %vm1312, %v2548, %v2549
        %v2551 = vrot.slane %v2444, 1
        %v2552 = vsel %vm1312, %v2549, %v2551
        %v2553 = vrot.slane %v2445, 1
        %v2554 = vrot.slane %v2446, 1
        %v2555 = vsel %vm1312, %v2553, %v2554
        %v2556 = vrot.slane %v2447, 1
        %v2557 = vsel %vm1312, %v2554, %v2556
        %v2558 = vrot.slane %v2448, 1
        %v2559 = vrot.slane %v2449, 1
        %v2560 = vsel %vm1312, %v2558, %v2559
        %v2561 = vrot.slane %v2450, 1
        %v2562 = vsel %vm1312, %v2559, %v2561
        %v2563 = vrot.slane %v2451, 1
        %v2564 = vrot.slane %v2452, 1
        %v2565 = vsel %vm1312, %v2563, %v2564
        %v2566 = vrot.slane %v2453, 1
        %v2567 = vsel %vm1312, %v2564, %v2566
        %v2568 = vrot.slane %v2454, 1
        %v2569 = vrot.slane %v2455, 1
        %v2570 = vsel %vm1312, %v2568, %v2569
        %v2571 = vrot.slane %v2456, 1
        %v2572 = vsel %vm1312, %v2569, %v2571
        %v2573 = vrot.slane %v2457, 1
        %v2574 = vrot.slane %v2458, 1
        %v2575 = vsel %vm1312, %v2573, %v2574
        %v2576 = vrot.slane %v2459, 1
        %v2577 = vsel %vm1312, %v2574, %v2576
        %v2578 = vrot.slane %v2460, 1
        %v2579 = vrot.slane %v2461, 1
        %v2580 = vsel %vm1312, %v2578, %v2579
        %v2581 = vrot.slane %v2462, 1
        %v2582 = vsel %vm1312, %v2579, %v2581
        %v2583 = vrot.slane %v2463, 1
        %v2584 = vrot.slane %v2464, 1
        %v2585 = vsel %vm1312, %v2583, %v2584
        %v2586 = vrot.slane %v2465, 1
        %v2587 = vsel %vm1312, %v2584, %v2586
        %v2588 = vrot.slane %v2466, 1
        %v2589 = vrot.slane %v2467, 1
        %v2590 = vsel %vm1312, %v2588, %v2589
        %v2591 = vrot.slane %v2468, 1
        %v2592 = vsel %vm1312, %v2589, %v2591
        %v2593 = vrot.slane %v2469, 1
        %v2594 = vrot.slane %v2470, 1
        %v2595 = vsel %vm1312, %v2593, %v2594
        %v2596 = vrot.slane %v2471, 1
        %v2597 = vsel %vm1312, %v2594, %v2596
        %v2598 = vrot.slane %v2472, 1
        %v2599 = vrot.slane %v2473, 1
        %v2600 = vsel %vm1312, %v2598, %v2599
        %v2601 = vrot.slane %v2474, 1
        %v2602 = vsel %vm1312, %v2599, %v2601
        %v2635 = vadd.f32 %v2391, %v2525
        %v2636 = vadd.f32 %v2392, %v2527
        %v2637 = vadd.f32 %v2393, %v2530
        %v2638 = vadd.f32 %v2394, %v2532
        %v2639 = vadd.f32 %v2395, %v2535
        %v2640 = vadd.f32 %v2396, %v2537
        %v2641 = vadd.f32 %v2397, %v2540
        %v2642 = vadd.f32 %v2398, %v2542
        %v2643 = vadd.f32 %v2399, %v2545
        %v2644 = vadd.f32 %v2400, %v2547
        %v2645 = vadd.f32 %v2401, %v2550
        %v2646 = vadd.f32 %v2402, %v2552
        %v2647 = vadd.f32 %v2403, %v2555
        %v2648 = vadd.f32 %v2404, %v2557
        %v2649 = vadd.f32 %v2405, %v2560
        %v2650 = vadd.f32 %v2406, %v2562
        %v2651 = vadd.f32 %v2407, %v2565
        %v2652 = vadd.f32 %v2408, %v2567
        %v2653 = vadd.f32 %v2409, %v2570
        %v2654 = vadd.f32 %v2410, %v2572
        %v2655 = vadd.f32 %v2411, %v2575
        %v2656 = vadd.f32 %v2412, %v2577
        %v2657 = vadd.f32 %v2413, %v2580
        %v2658 = vadd.f32 %v2414, %v2582
        %v2659 = vadd.f32 %v2415, %v2585
        %v2660 = vadd.f32 %v2416, %v2587
        %v2661 = vadd.f32 %v2417, %v2590
        %v2662 = vadd.f32 %v2418, %v2592
        %v2663 = vadd.f32 %v2419, %v2595
        %v2664 = vadd.f32 %v2420, %v2597
        %v2665 = vadd.f32 %v2421, %v2600
        %v2666 = vadd.f32 %v2422, %v2602
        %v2667 = vlaneseq
        %v2668 = vshrl.u32 %v2667, 7
        %v2669 = vsub.s32 2, %v2668
        %v2670 = vrot.slane %v1095, %v2669
        %v2671 = vmul.f32 %v2307, %v2670
        %v2672 = vmul.f32 %v2308, %v2670
        %v2673 = vmul.f32 %v2309, %v2670
        %v2674 = vmul.f32 %v2310, %v2670
        %v2675 = vmul.f32 %v2311, %v2670
        %v2676 = vmul.f32 %v2312, %v2670
        %v2677 = vmul.f32 %v2313, %v2670
        %v2678 = vmul.f32 %v2314, %v2670
        %v2679 = vmul.f32 %v2315, %v2670
        %v2680 = vmul.f32 %v2316, %v2670
        %v2681 = vmul.f32 %v2317, %v2670
        %v2682 = vmul.f32 %v2318, %v2670
        %v2683 = vmul.f32 %v2319, %v2670
        %v2684 = vmul.f32 %v2320, %v2670
        %v2685 = vmul.f32 %v2321, %v2670
        %v2686 = vmul.f32 %v2322, %v2670
        %v2687 = vmul.f32 %v2323, %v2670
        %v2688 = vmul.f32 %v2324, %v2670
        %v2689 = vmul.f32 %v2325, %v2670
        %v2690 = vmul.f32 %v2326, %v2670
        %v2691 = vmul.f32 %v2327, %v2670
        %v2692 = vmul.f32 %v2328, %v2670
        %v2693 = vmul.f32 %v2329, %v2670
        %v2694 = vmul.f32 %v2330, %v2670
        %v2695 = vmul.f32 %v2331, %v2670
        %v2696 = vmul.f32 %v2332, %v2670
        %v2697 = vmul.f32 %v2333, %v2670
        %v2698 = vmul.f32 %v2334, %v2670
        %v2699 = vmul.f32 %v2335, %v2670
        %v2700 = vmul.f32 %v2336, %v2670
        %v2701 = vmul.f32 %v2337, %v2670
        %v2702 = vmul.f32 %v2338, %v2670
        %v2703 = vmul.f32 %v2339, %v2670
        %v2704 = vmul.f32 %v2340, %v2670
        %v2705 = vmul.f32 %v2341, %v2670
        %v2706 = vmul.f32 %v2342, %v2670
        %v2707 = vmul.f32 %v2343, %v2670
        %v2708 = vmul.f32 %v2344, %v2670
        %v2709 = vmul.f32 %v2345, %v2670
        %v2710 = vmul.f32 %v2346, %v2670
        %v2711 = vmul.f32 %v2347, %v2670
        %v2712 = vmul.f32 %v2348, %v2670
        %v2713 = vmul.f32 %v2349, %v2670
        %v2714 = vmul.f32 %v2350, %v2670
        %v2715 = vmul.f32 %v2351, %v2670
        %v2716 = vmul.f32 %v2352, %v2670
        %v2717 = vmul.f32 %v2353, %v2670
        %v2718 = vmul.f32 %v2354, %v2670
        %v2767 = vrot.slane %v2671, 2
        %v2768 = vrot.slane %v2672, 2
        %v2769 = vsel %vm1557, %v2767, %v2768
        %v2770 = vrot.slane %v2673, 2
        %v2771 = vsel %vm1557, %v2768, %v2770
        %v2772 = vrot.slane %v2674, 2
        %v2773 = vrot.slane %v2675, 2
        %v2774 = vsel %vm1557, %v2772, %v2773
        %v2775 = vrot.slane %v2676, 2
        %v2776 = vsel %vm1557, %v2773, %v2775
        %v2777 = vrot.slane %v2677, 2
        %v2778 = vrot.slane %v2678, 2
        %v2779 = vsel %vm1557, %v2777, %v2778
        %v2780 = vrot.slane %v2679, 2
        %v2781 = vsel %vm1557, %v2778, %v2780
        %v2782 = vrot.slane %v2680, 2
        %v2783 = vrot.slane %v2681, 2
        %v2784 = vsel %vm1557, %v2782, %v2783
        %v2785 = vrot.slane %v2682, 2
        %v2786 = vsel %vm1557, %v2783, %v2785
        %v2787 = vrot.slane %v2683, 2
        %v2788 = vrot.slane %v2684, 2
        %v2789 = vsel %vm1557, %v2787, %v2788
        %v2790 = vrot.slane %v2685, 2
        %v2791 = vsel %vm1557, %v2788, %v2790
        %v2792 = vrot.slane %v2686, 2
        %v2793 = vrot.slane %v2687, 2
        %v2794 = vsel %vm1557, %v2792, %v2793
        %v2795 = vrot.slane %v2688, 2
        %v2796 = vsel %vm1557, %v2793, %v2795
        %v2797 = vrot.slane %v2689, 2
        %v2798 = vrot.slane %v2690, 2
        %v2799 = vsel %vm1557, %v2797, %v2798
        %v2800 = vrot.slane %v2691, 2
        %v2801 = vsel %vm1557, %v2798, %v2800
        %v2802 = vrot.slane %v2692, 2
        %v2803 = vrot.slane %v2693, 2
        %v2804 = vsel %vm1557, %v2802, %v2803
        %v2805 = vrot.slane %v2694, 2
        %v2806 = vsel %vm1557, %v2803, %v2805
        %v2807 = vrot.slane %v2695, 2
        %v2808 = vrot.slane %v2696, 2
        %v2809 = vsel %vm1557, %v2807, %v2808
        %v2810 = vrot.slane %v2697, 2
        %v2811 = vsel %vm1557, %v2808, %v2810
        %v2812 = vrot.slane %v2698, 2
        %v2813 = vrot.slane %v2699, 2
        %v2814 = vsel %vm1557, %v2812, %v2813
        %v2815 = vrot.slane %v2700, 2
        %v2816 = vsel %vm1557, %v2813, %v2815
        %v2817 = vrot.slane %v2701, 2
        %v2818 = vrot.slane %v2702, 2
        %v2819 = vsel %vm1557, %v2817, %v2818
        %v2820 = vrot.slane %v2703, 2
        %v2821 = vsel %vm1557, %v2818, %v2820
        %v2822 = vrot.slane %v2704, 2
        %v2823 = vrot.slane %v2705, 2
        %v2824 = vsel %vm1557, %v2822, %v2823
        %v2825 = vrot.slane %v2706, 2
        %v2826 = vsel %vm1557, %v2823, %v2825
        %v2827 = vrot.slane %v2707, 2
        %v2828 = vrot.slane %v2708, 2
        %v2829 = vsel %vm1557, %v2827, %v2828
        %v2830 = vrot.slane %v2709, 2
        %v2831 = vsel %vm1557, %v2828, %v2830
        %v2832 = vrot.slane %v2710, 2
        %v2833 = vrot.slane %v2711, 2
        %v2834 = vsel %vm1557, %v2832, %v2833
        %v2835 = vrot.slane %v2712, 2
        %v2836 = vsel %vm1557, %v2833, %v2835
        %v2837 = vrot.slane %v2713, 2
        %v2838 = vrot.slane %v2714, 2
        %v2839 = vsel %vm1557, %v2837, %v2838
        %v2840 = vrot.slane %v2715, 2
        %v2841 = vsel %vm1557, %v2838, %v2840
        %v2842 = vrot.slane %v2716, 2
        %v2843 = vrot.slane %v2717, 2
        %v2844 = vsel %vm1557, %v2842, %v2843
        %v2845 = vrot.slane %v2718, 2
        %v2846 = vsel %vm1557, %v2843, %v2845
        %v2879 = vadd.f32 %v2635, %v2769
        %v2880 = vadd.f32 %v2636, %v2771
        %v2881 = vadd.f32 %v2637, %v2774
        %v2882 = vadd.f32 %v2638, %v2776
        %v2883 = vadd.f32 %v2639, %v2779
        %v2884 = vadd.f32 %v2640, %v2781
        %v2885 = vadd.f32 %v2641, %v2784
        %v2886 = vadd.f32 %v2642, %v2786
        %v2887 = vadd.f32 %v2643, %v2789
        %v2888 = vadd.f32 %v2644, %v2791
        %v2889 = vadd.f32 %v2645, %v2794
        %v2890 = vadd.f32 %v2646, %v2796
        %v2891 = vadd.f32 %v2647, %v2799
        %v2892 = vadd.f32 %v2648, %v2801
        %v2893 = vadd.f32 %v2649, %v2804
        %v2894 = vadd.f32 %v2650, %v2806
        %v2895 = vadd.f32 %v2651, %v2809
        %v2896 = vadd.f32 %v2652, %v2811
        %v2897 = vadd.f32 %v2653, %v2814
        %v2898 = vadd.f32 %v2654, %v2816
        %v2899 = vadd.f32 %v2655, %v2819
        %v2900 = vadd.f32 %v2656, %v2821
        %v2901 = vadd.f32 %v2657, %v2824
        %v2902 = vadd.f32 %v2658, %v2826
        %v2903 = vadd.f32 %v2659, %v2829
        %v2904 = vadd.f32 %v2660, %v2831
        %v2905 = vadd.f32 %v2661, %v2834
        %v2906 = vadd.f32 %v2662, %v2836
        %v2907 = vadd.f32 %v2663, %v2839
        %v2908 = vadd.f32 %v2664, %v2841
        %v2909 = vadd.f32 %v2665, %v2844
        %v2910 = vadd.f32 %v2666, %v2846
        %v2911 = vld [vmem:[#allocation6] sm:$0x1]
        %v2912 = vld [vmem:[%s6] sm:$0x1]
        %v2913 = vadd.f32 %v2879, %v2880
        %v2914 = vadd.f32 %v2913, %v2881
        %v2915 = vadd.f32 %v2914, %v2882
        %v2916 = vadd.f32 %v2915, %v2883
        %v2917 = vadd.f32 %v2916, %v2884
        %v2918 = vadd.f32 %v2917, %v2885
        %v2919 = vadd.f32 %v2918, %v2886
        %v2920 = vadd.f32 %v2919, %v2887
        %v2921 = vadd.f32 %v2920, %v2888
        %v2922 = vadd.f32 %v2921, %v2889
        %v2923 = vadd.f32 %v2922, %v2890
        %v2924 = vadd.f32 %v2923, %v2891
        %v2925 = vadd.f32 %v2924, %v2892
        %v2926 = vadd.f32 %v2925, %v2893
        %v2927 = vadd.f32 %v2926, %v2894
        %v2928 = vadd.f32 %v2927, %v2895
        %v2929 = vadd.f32 %v2928, %v2896
        %v2930 = vadd.f32 %v2929, %v2897
        %v2931 = vadd.f32 %v2930, %v2898
        %v2932 = vadd.f32 %v2931, %v2899
        %v2933 = vadd.f32 %v2932, %v2900
        %v2934 = vadd.f32 %v2933, %v2901
        %v2935 = vadd.f32 %v2934, %v2902
        %v2936 = vadd.f32 %v2935, %v2903
        %v2937 = vadd.f32 %v2936, %v2904
        %v2938 = vadd.f32 %v2937, %v2905
        %v2939 = vadd.f32 %v2938, %v2906
        %v2940 = vadd.f32 %v2939, %v2907
        %v2941 = vadd.f32 %v2940, %v2908
        %v2942 = vadd.f32 %v2941, %v2909
        %v2943 = vadd.f32 %v2942, %v2910
        %2944 = vadd.xlane.f32.xlu0 %v2943
        %v2945 = vpop.xlane.xlu0 %2944
        %v2946 = vrot.slane %v2945, 4
        %v2947 = vadd.f32 %v2945, %v2946
        %v2948 = vrot.slane %v2947, 2
        %v2949 = vadd.f32 %v2947, %v2948
        %v2950 = vrot.slane %v2949, 1
        %v2951 = vadd.f32 %v2949, %v2950
        %s2952 = vtos %v2951
        %v2953 = vmul.f32 %v2879, %v2879
        %v2954 = vmul.f32 %v2880, %v2880
        %v2955 = vmul.f32 %v2881, %v2881
        %v2956 = vmul.f32 %v2882, %v2882
        %v2957 = vmul.f32 %v2883, %v2883
        %v2958 = vmul.f32 %v2884, %v2884
        %v2959 = vmul.f32 %v2885, %v2885
        %v2960 = vmul.f32 %v2886, %v2886
        %v2961 = vmul.f32 %v2887, %v2887
        %v2962 = vmul.f32 %v2888, %v2888
        %v2963 = vmul.f32 %v2889, %v2889
        %v2964 = vmul.f32 %v2890, %v2890
        %v2965 = vmul.f32 %v2891, %v2891
        %v2966 = vmul.f32 %v2892, %v2892
        %v2967 = vmul.f32 %v2893, %v2893
        %v2968 = vmul.f32 %v2894, %v2894
        %v2969 = vmul.f32 %v2895, %v2895
        %v2970 = vmul.f32 %v2896, %v2896
        %v2971 = vmul.f32 %v2897, %v2897
        %v2972 = vmul.f32 %v2898, %v2898
        %v2973 = vmul.f32 %v2899, %v2899
        %v2974 = vmul.f32 %v2900, %v2900
        %v2975 = vmul.f32 %v2901, %v2901
        %v2976 = vmul.f32 %v2902, %v2902
        %v2977 = vmul.f32 %v2903, %v2903
        %v2978 = vmul.f32 %v2904, %v2904
        %v2979 = vmul.f32 %v2905, %v2905
        %v2980 = vmul.f32 %v2906, %v2906
        %v2981 = vmul.f32 %v2907, %v2907
        %v2982 = vmul.f32 %v2908, %v2908
        %v2983 = vmul.f32 %v2909, %v2909
        %v2984 = vmul.f32 %v2910, %v2910
        %v2985 = vadd.f32 %v2953, %v2954
        %v2986 = vadd.f32 %v2985, %v2955
        %v2987 = vadd.f32 %v2986, %v2956
        %v2988 = vadd.f32 %v2987, %v2957
        %v2989 = vadd.f32 %v2988, %v2958
        %v2990 = vadd.f32 %v2989, %v2959
        %v2991 = vadd.f32 %v2990, %v2960
        %v2992 = vadd.f32 %v2991, %v2961
        %v2993 = vadd.f32 %v2992, %v2962
        %v2994 = vadd.f32 %v2993, %v2963
        %v2995 = vadd.f32 %v2994, %v2964
        %v2996 = vadd.f32 %v2995, %v2965
        %v2997 = vadd.f32 %v2996, %v2966
        %v2998 = vadd.f32 %v2997, %v2967
        %v2999 = vadd.f32 %v2998, %v2968
        %v3000 = vadd.f32 %v2999, %v2969
        %v3001 = vadd.f32 %v3000, %v2970
        %v3002 = vadd.f32 %v3001, %v2971
        %v3003 = vadd.f32 %v3002, %v2972
        %v3004 = vadd.f32 %v3003, %v2973
        %v3005 = vadd.f32 %v3004, %v2974
        %v3006 = vadd.f32 %v3005, %v2975
        %v3007 = vadd.f32 %v3006, %v2976
        %v3008 = vadd.f32 %v3007, %v2977
        %v3009 = vadd.f32 %v3008, %v2978
        %v3010 = vadd.f32 %v3009, %v2979
        %v3011 = vadd.f32 %v3010, %v2980
        %v3012 = vadd.f32 %v3011, %v2981
        %v3013 = vadd.f32 %v3012, %v2982
        %v3014 = vadd.f32 %v3013, %v2983
        %v3015 = vadd.f32 %v3014, %v2984
        %3016 = vadd.xlane.f32.xlu0 %v3015
        %v3017 = vpop.xlane.xlu0 %3016
        %v3018 = vrot.slane %v3017, 4
        %v3019 = vadd.f32 %v3017, %v3018
        %v3020 = vrot.slane %v3019, 2
        %v3021 = vadd.f32 %v3019, %v3020
        %v3022 = vrot.slane %v3021, 1
        %v3023 = vadd.f32 %v3021, %v3022
        %s3024 = vtos %v3023
        %s3025 = smul.f32 %s2952, 6.1035156e-05
        %s3026 = smul.f32 %s3024, 6.1035156e-05
        %s3027 = smul.f32 %s3025, %s3025
        %s3028 = ssub.f32 %s3026, %s3027
        %s3029 = smax.f32 %s3028, 0.0
        %v3030 = vstv %s3025
        %v3031 = vsub.f32 %v2879, %v3030
        %v3032 = vsub.f32 %v2880, %v3030
        %v3033 = vsub.f32 %v2881, %v3030
        %v3034 = vsub.f32 %v2882, %v3030
        %v3035 = vsub.f32 %v2883, %v3030
        %v3036 = vsub.f32 %v2884, %v3030
        %v3037 = vsub.f32 %v2885, %v3030
        %v3038 = vsub.f32 %v2886, %v3030
        %v3039 = vsub.f32 %v2887, %v3030
        %v3040 = vsub.f32 %v2888, %v3030
        %v3041 = vsub.f32 %v2889, %v3030
        %v3042 = vsub.f32 %v2890, %v3030
        %v3043 = vsub.f32 %v2891, %v3030
        %v3044 = vsub.f32 %v2892, %v3030
        %v3045 = vsub.f32 %v2893, %v3030
        %v3046 = vsub.f32 %v2894, %v3030
        %v3047 = vsub.f32 %v2895, %v3030
        %v3048 = vsub.f32 %v2896, %v3030
        %v3049 = vsub.f32 %v2897, %v3030
        %v3050 = vsub.f32 %v2898, %v3030
        %v3051 = vsub.f32 %v2899, %v3030
        %v3052 = vsub.f32 %v2900, %v3030
        %v3053 = vsub.f32 %v2901, %v3030
        %v3054 = vsub.f32 %v2902, %v3030
        %v3055 = vsub.f32 %v2903, %v3030
        %v3056 = vsub.f32 %v2904, %v3030
        %v3057 = vsub.f32 %v2905, %v3030
        %v3058 = vsub.f32 %v2906, %v3030
        %v3059 = vsub.f32 %v2907, %v3030
        %v3060 = vsub.f32 %v2908, %v3030
        %v3061 = vsub.f32 %v2909, %v3030
        %v3062 = vsub.f32 %v2910, %v3030
        %s3063 = sadd.f32 %s3029, 1e-05
        %v3064 = vstv %s3063
        %v3065 = vrsqrt.pop %v3064
        %s3066 = vtos %v3065
        %v3067 = vstv %s3066
        %v3068 = vmul.f32 %v3067, %v2911
        %v3070 = vlaneseq
        %v3071 = vshrl.u32 %v3070, 7
        %v3072 = vsub.s32 0, %v3071
        %v3073 = vrot.slane %v3068, %v3072
        %v3075 = vmul.f32 %v3031, %v3073
        %v3076 = vmul.f32 %v3032, %v3073
        %v3077 = vmul.f32 %v3033, %v3073
        %v3078 = vmul.f32 %v3034, %v3073
        %v3079 = vmul.f32 %v3035, %v3073
        %v3080 = vmul.f32 %v3036, %v3073
        %v3081 = vmul.f32 %v3037, %v3073
        %v3082 = vmul.f32 %v3038, %v3073
        %v3083 = vmul.f32 %v3039, %v3073
        %v3084 = vmul.f32 %v3040, %v3073
        %v3085 = vmul.f32 %v3041, %v3073
        %v3086 = vmul.f32 %v3042, %v3073
        %v3087 = vmul.f32 %v3043, %v3073
        %v3088 = vmul.f32 %v3044, %v3073
        %v3089 = vmul.f32 %v3045, %v3073
        %v3090 = vmul.f32 %v3046, %v3073
        %v3091 = vmul.f32 %v3047, %v3073
        %v3092 = vmul.f32 %v3048, %v3073
        %v3093 = vmul.f32 %v3049, %v3073
        %v3094 = vmul.f32 %v3050, %v3073
        %v3095 = vmul.f32 %v3051, %v3073
        %v3096 = vmul.f32 %v3052, %v3073
        %v3097 = vmul.f32 %v3053, %v3073
        %v3098 = vmul.f32 %v3054, %v3073
        %v3099 = vmul.f32 %v3055, %v3073
        %v3100 = vmul.f32 %v3056, %v3073
        %v3101 = vmul.f32 %v3057, %v3073
        %v3102 = vmul.f32 %v3058, %v3073
        %v3103 = vmul.f32 %v3059, %v3073
        %v3104 = vmul.f32 %v3060, %v3073
        %v3105 = vmul.f32 %v3061, %v3073
        %v3106 = vmul.f32 %v3062, %v3073
        %v3108 = vlaneseq
        %v3109 = vshrl.u32 %v3108, 7
        %v3110 = vsub.s32 0, %v3109
        %v3111 = vrot.slane %v2912, %v3110
        %v3113 = vadd.f32 %v3075, %v3111
        %v3114 = vadd.f32 %v3076, %v3111
        %v3115 = vadd.f32 %v3077, %v3111
        %v3116 = vadd.f32 %v3078, %v3111
        %v3117 = vadd.f32 %v3079, %v3111
        %v3118 = vadd.f32 %v3080, %v3111
        %v3119 = vadd.f32 %v3081, %v3111
        %v3120 = vadd.f32 %v3082, %v3111
        %v3121 = vadd.f32 %v3083, %v3111
        %v3122 = vadd.f32 %v3084, %v3111
        %v3123 = vadd.f32 %v3085, %v3111
        %v3124 = vadd.f32 %v3086, %v3111
        %v3125 = vadd.f32 %v3087, %v3111
        %v3126 = vadd.f32 %v3088, %v3111
        %v3127 = vadd.f32 %v3089, %v3111
        %v3128 = vadd.f32 %v3090, %v3111
        %v3129 = vadd.f32 %v3091, %v3111
        %v3130 = vadd.f32 %v3092, %v3111
        %v3131 = vadd.f32 %v3093, %v3111
        %v3132 = vadd.f32 %v3094, %v3111
        %v3133 = vadd.f32 %v3095, %v3111
        %v3134 = vadd.f32 %v3096, %v3111
        %v3135 = vadd.f32 %v3097, %v3111
        %v3136 = vadd.f32 %v3098, %v3111
        %v3137 = vadd.f32 %v3099, %v3111
        %v3138 = vadd.f32 %v3100, %v3111
        %v3139 = vadd.f32 %v3101, %v3111
        %v3140 = vadd.f32 %v3102, %v3111
        %v3141 = vadd.f32 %v3103, %v3111
        %v3142 = vadd.f32 %v3104, %v3111
        %v3143 = vadd.f32 %v3105, %v3111
        %v3144 = vadd.f32 %v3106, %v3111
        %v3145 = vmax.f32 %v3113, 0.0
        %v3146 = vmax.f32 %v3114, 0.0
        %v3147 = vmax.f32 %v3115, 0.0
        %v3148 = vmax.f32 %v3116, 0.0
        %v3149 = vmax.f32 %v3117, 0.0
        %v3150 = vmax.f32 %v3118, 0.0
        %v3151 = vmax.f32 %v3119, 0.0
        %v3152 = vmax.f32 %v3120, 0.0
        %v3153 = vmax.f32 %v3121, 0.0
        %v3154 = vmax.f32 %v3122, 0.0
        %v3155 = vmax.f32 %v3123, 0.0
        %v3156 = vmax.f32 %v3124, 0.0
        %v3157 = vmax.f32 %v3125, 0.0
        %v3158 = vmax.f32 %v3126, 0.0
        %v3159 = vmax.f32 %v3127, 0.0
        %v3160 = vmax.f32 %v3128, 0.0
        %v3161 = vmax.f32 %v3129, 0.0
        %v3162 = vmax.f32 %v3130, 0.0
        %v3163 = vmax.f32 %v3131, 0.0
        %v3164 = vmax.f32 %v3132, 0.0
        %v3165 = vmax.f32 %v3133, 0.0
        %v3166 = vmax.f32 %v3134, 0.0
        %v3167 = vmax.f32 %v3135, 0.0
        %v3168 = vmax.f32 %v3136, 0.0
        %v3169 = vmax.f32 %v3137, 0.0
        %v3170 = vmax.f32 %v3138, 0.0
        %v3171 = vmax.f32 %v3139, 0.0
        %v3172 = vmax.f32 %v3140, 0.0
        %v3173 = vmax.f32 %v3141, 0.0
        %v3174 = vmax.f32 %v3142, 0.0
        %v3175 = vmax.f32 %v3143, 0.0
        %v3176 = vmax.f32 %v3144, 0.0
        %v3177 = vmin.f32 %v3145, 6.0
        %v3178 = vmin.f32 %v3146, 6.0
        %v3179 = vmin.f32 %v3147, 6.0
        %v3180 = vmin.f32 %v3148, 6.0
        %v3181 = vmin.f32 %v3149, 6.0
        %v3182 = vmin.f32 %v3150, 6.0
        %v3183 = vmin.f32 %v3151, 6.0
        %v3184 = vmin.f32 %v3152, 6.0
        %v3185 = vmin.f32 %v3153, 6.0
        %v3186 = vmin.f32 %v3154, 6.0
        %v3187 = vmin.f32 %v3155, 6.0
        %v3188 = vmin.f32 %v3156, 6.0
        %v3189 = vmin.f32 %v3157, 6.0
        %v3190 = vmin.f32 %v3158, 6.0
        %v3191 = vmin.f32 %v3159, 6.0
        %v3192 = vmin.f32 %v3160, 6.0
        %v3193 = vmin.f32 %v3161, 6.0
        %v3194 = vmin.f32 %v3162, 6.0
        %v3195 = vmin.f32 %v3163, 6.0
        %v3196 = vmin.f32 %v3164, 6.0
        %v3197 = vmin.f32 %v3165, 6.0
        %v3198 = vmin.f32 %v3166, 6.0
        %v3199 = vmin.f32 %v3167, 6.0
        %v3200 = vmin.f32 %v3168, 6.0
        %v3201 = vmin.f32 %v3169, 6.0
        %v3202 = vmin.f32 %v3170, 6.0
        %v3203 = vmin.f32 %v3171, 6.0
        %v3204 = vmin.f32 %v3172, 6.0
        %v3205 = vmin.f32 %v3173, 6.0
        %v3206 = vmin.f32 %v3174, 6.0
        %v3207 = vmin.f32 %v3175, 6.0
        %v3208 = vmin.f32 %v3176, 6.0
        %v3209 = vadd.f32 %v3177, %v3178
        %v3210 = vadd.f32 %v3209, %v3179
        %v3211 = vadd.f32 %v3210, %v3180
        %v3212 = vadd.f32 %v3211, %v3181
        %v3213 = vadd.f32 %v3212, %v3182
        %v3214 = vadd.f32 %v3213, %v3183
        %v3215 = vadd.f32 %v3214, %v3184
        %v3216 = vadd.f32 %v3215, %v3185
        %v3217 = vadd.f32 %v3216, %v3186
        %v3218 = vadd.f32 %v3217, %v3187
        %v3219 = vadd.f32 %v3218, %v3188
        %v3220 = vadd.f32 %v3219, %v3189
        %v3221 = vadd.f32 %v3220, %v3190
        %v3222 = vadd.f32 %v3221, %v3191
        %v3223 = vadd.f32 %v3222, %v3192
        %v3224 = vadd.f32 %v3223, %v3193
        %v3225 = vadd.f32 %v3224, %v3194
        %v3226 = vadd.f32 %v3225, %v3195
        %v3227 = vadd.f32 %v3226, %v3196
        %v3228 = vadd.f32 %v3227, %v3197
        %v3229 = vadd.f32 %v3228, %v3198
        %v3230 = vadd.f32 %v3229, %v3199
        %v3231 = vadd.f32 %v3230, %v3200
        %v3232 = vadd.f32 %v3231, %v3201
        %v3233 = vadd.f32 %v3232, %v3202
        %v3234 = vadd.f32 %v3233, %v3203
        %v3235 = vadd.f32 %v3234, %v3204
        %v3236 = vadd.f32 %v3235, %v3205
        %v3237 = vadd.f32 %v3236, %v3206
        %v3238 = vadd.f32 %v3237, %v3207
        %v3239 = vadd.f32 %v3238, %v3208
        %v3240 = vrot.slane %v3239, 4
        %v3241 = vadd.f32 %v3239, %v3240
        %v3242 = vrot.slane %v3241, 2
        %v3243 = vadd.f32 %v3241, %v3242
        %v3244 = vrot.slane %v3243, 1
        %v3245 = vadd.f32 %v3243, %v3244
        %v3246 = vrcp.pop 256.0
        %v3247 = vmul.f32 %v3245, %v3246
        %v3248 = vld [vmem:[%s7] sm:$0xff]
        %v3249 = vld [vmem:[%s7 + $0x8] sm:$0xff]
        %v3250 = vld [vmem:[%s7 + $0x10] sm:$0xff]
        %v3251 = vld [vmem:[%s7 + $0x18] sm:$0xff]
        %v3252 = vld [vmem:[%s7 + $0x20] sm:$0xff]
        %v3253 = vld [vmem:[%s7 + $0x28] sm:$0xff]
        %v3254 = vld [vmem:[%s7 + $0x30] sm:$0xff]
        %v3255 = vld [vmem:[%s7 + $0x38] sm:$0xff]
        %v3256 = vld [vmem:[%s7 + $0x40] sm:$0xff]
        %v3257 = vld [vmem:[%s7 + $0x48] sm:$0xff]
        %v3258 = vld [vmem:[%s7 + $0x50] sm:$0xff]
        %v3259 = vld [vmem:[%s7 + $0x58] sm:$0xff]
        %v3260 = vld [vmem:[%s7 + $0x60] sm:$0xff]
        %v3261 = vld [vmem:[%s7 + $0x68] sm:$0xff]
        %v3262 = vld [vmem:[%s7 + $0x70] sm:$0xff]
        %v3263 = vld [vmem:[%s7 + $0x78] sm:$0xff]
        %3264 = vmatprep.subr.mxu0 0.0
        %3265 = vmatpush1.msra.mxu0 %v3248
        %3266 = vmatprep.subr.mxu0 0.0
        %3267 = vmatpush1.msra.mxu0 %v3249
        %3268 = vmatprep.subr.mxu0 0.0
        %3269 = vmatpush1.msra.mxu0 %v3250
        %3270 = vmatprep.subr.mxu0 0.0
        %3271 = vmatpush1.msra.mxu0 %v3251
        %3272 = vmatprep.subr.mxu0 0.0
        %3273 = vmatpush1.msra.mxu0 %v3252
        %3274 = vmatprep.subr.mxu0 0.0
        %3275 = vmatpush1.msra.mxu0 %v3253
        %3276 = vmatprep.subr.mxu0 0.0
        %3277 = vmatpush1.msra.mxu0 %v3254
        %3278 = vmatprep.subr.mxu0 0.0
        %3279 = vmatpush1.msra.mxu0 %v3255
        %3280 = vmatprep.subr.mxu0 0.0
        %3281 = vmatpush1.msra.mxu0 %v3256
        %3282 = vmatprep.subr.mxu0 0.0
        %3283 = vmatpush1.msra.mxu0 %v3257
        %3284 = vmatprep.subr.mxu0 0.0
        %3285 = vmatpush1.msra.mxu0 %v3258
        %3286 = vmatprep.subr.mxu0 0.0
        %3287 = vmatpush1.msra.mxu0 %v3259
        %3288 = vmatprep.subr.mxu0 0.0
        %3289 = vmatpush1.msra.mxu0 %v3260
        %3290 = vmatprep.subr.mxu0 0.0
        %3291 = vmatpush1.msra.mxu0 %v3261
        %3292 = vmatprep.subr.mxu0 0.0
        %3293 = vmatpush1.msra.mxu0 %v3262
        %3294 = vmatprep.subr.mxu0 0.0
        %3295 = vmatpush1.msra.mxu0 %v3263
        %3296 = vmatprep.subr.mxu0 0.0
        %3297 = vmatpush1.msra.mxu0 0.0
        %3298 = vmatprep.subr.mxu0 0.0
        %3299 = vmatpush1.msra.mxu0 0.0
        %3300 = vmatprep.subr.mxu0 0.0
        %3301 = vmatpush1.msra.mxu0 0.0
        %3302 = vmatprep.subr.mxu0 0.0
        %3303 = vmatpush1.msra.mxu0 0.0
        %3304 = vmatprep.subr.mxu0 0.0
        %3305 = vmatpush1.msra.mxu0 0.0
        %3306 = vmatprep.subr.mxu0 0.0
        %3307 = vmatpush1.msra.mxu0 0.0
        %3308 = vmatprep.subr.mxu0 0.0
        %3309 = vmatpush1.msra.mxu0 0.0
        %3310 = vmatprep.subr.mxu0 0.0
        %3311 = vmatpush1.msra.mxu0 0.0
        %3312 = vmatprep.subr.mxu0 0.0
        %3313 = vmatpush1.msra.mxu0 0.0
        %3314 = vmatprep.subr.mxu0 0.0
        %3315 = vmatpush1.msra.mxu0 0.0
        %3316 = vmatprep.subr.mxu0 0.0
        %3317 = vmatpush1.msra.mxu0 0.0
        %3318 = vmatprep.subr.mxu0 0.0
        %3319 = vmatpush1.msra.mxu0 0.0
        %3320 = vmatprep.subr.mxu0 0.0
        %3321 = vmatpush1.msra.mxu0 0.0
        %3322 = vmatprep.subr.mxu0 0.0
        %3323 = vmatpush1.msra.mxu0 0.0
        %3324 = vmatprep.subr.mxu0 0.0
        %3325 = vmatpush1.msra.mxu0 0.0
        %3326 = vmatprep.subr.mxu0 0.0
        %3327 = vmatpush1.msra.mxu0 0.0
        %3328 = vmatprep.mubr.f32.mxu0 0.0
        %3329 = vmatmul.mubr.f32.gmra.mrb[0].mxu0 %v3247
        %v3330 = vpop.f32.mrb[0].mxu0
        %v3331 = vadd.f32 0.0, %v3330
        %v3332 = vpop.f32.mrb[0].mxu0
        %3333 = vdwg.mxu0
        %v3334 = vmax.f32 %v3331, 0.0
        %v3335 = vld [vmem:[%s8] sm:$0xf]
        %vm3336 = vcmask 31744
        %v3338 = vsel %vm3336, %v3334, 0
        %vm3340 = vcmask 1043456
        %v3342 = vsel %vm3340, %v3335, 0
        %3344 = vmatprep.subr.mxu0 0.0
        %3345 = vmatpush1.msra.mxu0 %v3342
        %3346 = vmatprep.subr.mxu0 0.0
        %3347 = vmatpush1.msra.mxu0 0.0
        %3348 = vmatprep.subr.mxu0 0.0
        %3349 = vmatpush1.msra.mxu0 0.0
        %3350 = vmatprep.subr.mxu0 0.0
        %3351 = vmatpush1.msra.mxu0 0.0
        %3352 = vmatprep.subr.mxu0 0.0
        %3353 = vmatpush1.msra.mxu0 0.0
        %3354 = vmatprep.subr.mxu0 0.0
        %3355 = vmatpush1.msra.mxu0 0.0
        %3356 = vmatprep.subr.mxu0 0.0
        %3357 = vmatpush1.msra.mxu0 0.0
        %3358 = vmatprep.subr.mxu0 0.0
        %3359 = vmatpush1.msra.mxu0 0.0
        %3360 = vmatprep.subr.mxu0 0.0
        %3361 = vmatpush1.msra.mxu0 0.0
        %3362 = vmatprep.subr.mxu0 0.0
        %3363 = vmatpush1.msra.mxu0 0.0
        %3364 = vmatprep.subr.mxu0 0.0
        %3365 = vmatpush1.msra.mxu0 0.0
        %3366 = vmatprep.subr.mxu0 0.0
        %3367 = vmatpush1.msra.mxu0 0.0
        %3368 = vmatprep.subr.mxu0 0.0
        %3369 = vmatpush1.msra.mxu0 0.0
        %3370 = vmatprep.subr.mxu0 0.0
        %3371 = vmatpush1.msra.mxu0 0.0
        %3372 = vmatprep.subr.mxu0 0.0
        %3373 = vmatpush1.msra.mxu0 0.0
        %3374 = vmatprep.subr.mxu0 0.0
        %3375 = vmatpush1.msra.mxu0 0.0
        %3376 = vmatprep.subr.mxu0 0.0
        %3377 = vmatpush1.msra.mxu0 0.0
        %3378 = vmatprep.subr.mxu0 0.0
        %3379 = vmatpush1.msra.mxu0 0.0
        %3380 = vmatprep.subr.mxu0 0.0
        %3381 = vmatpush1.msra.mxu0 0.0
        %3382 = vmatprep.subr.mxu0 0.0
        %3383 = vmatpush1.msra.mxu0 0.0
        %3384 = vmatprep.subr.mxu0 0.0
        %3385 = vmatpush1.msra.mxu0 0.0
        %3386 = vmatprep.subr.mxu0 0.0
        %3387 = vmatpush1.msra.mxu0 0.0
        %3388 = vmatprep.subr.mxu0 0.0
        %3389 = vmatpush1.msra.mxu0 0.0
        %3390 = vmatprep.subr.mxu0 0.0
        %3391 = vmatpush1.msra.mxu0 0.0
        %3392 = vmatprep.subr.mxu0 0.0
        %3393 = vmatpush1.msra.mxu0 0.0
        %3394 = vmatprep.subr.mxu0 0.0
        %3395 = vmatpush1.msra.mxu0 0.0
        %3396 = vmatprep.subr.mxu0 0.0
        %3397 = vmatpush1.msra.mxu0 0.0
        %3398 = vmatprep.subr.mxu0 0.0
        %3399 = vmatpush1.msra.mxu0 0.0
        %3400 = vmatprep.subr.mxu0 0.0
        %3401 = vmatpush1.msra.mxu0 0.0
        %3402 = vmatprep.subr.mxu0 0.0
        %3403 = vmatpush1.msra.mxu0 0.0
        %3404 = vmatprep.subr.mxu0 0.0
        %3405 = vmatpush1.msra.mxu0 0.0
        %3406 = vmatprep.subr.mxu0 0.0
        %3407 = vmatpush1.msra.mxu0 0.0
        %3408 = vmatprep.mubr.f32.mxu0 0.0
        %3409 = vmatmul.mubr.f32.gmra.mrb[0].mxu0 %v3338
        %v3410 = vpop.f32.mrb[0].mxu0
        %v3411 = vadd.f32 0.0, %v3410
        %v3412 = vpop.f32.mrb[0].mxu0
        %3413 = vdwg.mxu0
        %v3414 = vsub.f32 0.0, %v3411
        %v3415 = vmul.f32 %v3414, 1.442695
        %v3416 = vpow.pop %v3415
        %v3417 = vadd.f32 %v3416, 1.0
        %v3418 = vrcp.pop %v3417
        %v3419 = vmul.f32 1.0, %v3418
        %v3420 = vlaneseq
        %v3421 = vshrl.u32 %v3420, 7
        %v3422 = vsub.s32 0, %v3421
        %v3423 = vrot.slane %v3419, %v3422
        %v3424 = vmul.f32 %v3177, %v3423
        %v3425 = vmul.f32 %v3178, %v3423
        %v3426 = vmul.f32 %v3179, %v3423
        %v3427 = vmul.f32 %v3180, %v3423
        %v3428 = vmul.f32 %v3181, %v3423
        %v3429 = vmul.f32 %v3182, %v3423
        %v3430 = vmul.f32 %v3183, %v3423
        %v3431 = vmul.f32 %v3184, %v3423
        %v3432 = vmul.f32 %v3185, %v3423
        %v3433 = vmul.f32 %v3186, %v3423
        %v3434 = vmul.f32 %v3187, %v3423
        %v3435 = vmul.f32 %v3188, %v3423
        %v3436 = vmul.f32 %v3189, %v3423
        %v3437 = vmul.f32 %v3190, %v3423
        %v3438 = vmul.f32 %v3191, %v3423
        %v3439 = vmul.f32 %v3192, %v3423
        %v3440 = vmul.f32 %v3193, %v3423
        %v3441 = vmul.f32 %v3194, %v3423
        %v3442 = vmul.f32 %v3195, %v3423
        %v3443 = vmul.f32 %v3196, %v3423
        %v3444 = vmul.f32 %v3197, %v3423
        %v3445 = vmul.f32 %v3198, %v3423
        %v3446 = vmul.f32 %v3199, %v3423
        %v3447 = vmul.f32 %v3200, %v3423
        %v3448 = vmul.f32 %v3201, %v3423
        %v3449 = vmul.f32 %v3202, %v3423
        %v3450 = vmul.f32 %v3203, %v3423
        %v3451 = vmul.f32 %v3204, %v3423
        %v3452 = vmul.f32 %v3205, %v3423
        %v3453 = vmul.f32 %v3206, %v3423
        %v3454 = vmul.f32 %v3207, %v3423
        %v3455 = vmul.f32 %v3208, %v3423
        %v3456 = vpack.c.bf16 %v3425, %v3424
        %v3457 = vpack.c.bf16 %v3427, %v3426
        %v3458 = vpack.c.bf16 %v3429, %v3428
        %v3459 = vpack.c.bf16 %v3431, %v3430
        %v3460 = vpack.c.bf16 %v3433, %v3432
        %v3461 = vpack.c.bf16 %v3435, %v3434
        %v3462 = vpack.c.bf16 %v3437, %v3436
        %v3463 = vpack.c.bf16 %v3439, %v3438
        %v3464 = vpack.c.bf16 %v3441, %v3440
        %v3465 = vpack.c.bf16 %v3443, %v3442
        %v3466 = vpack.c.bf16 %v3445, %v3444
        %v3467 = vpack.c.bf16 %v3447, %v3446
        %v3468 = vpack.c.bf16 %v3449, %v3448
        %v3469 = vpack.c.bf16 %v3451, %v3450
        %v3470 = vpack.c.bf16 %v3453, %v3452
        %v3471 = vpack.c.bf16 %v3455, %v3454
        %v3472 = vld [vmem:[%s9] sm:$0xf]
        %v3473 = vld [vmem:[%s9 + $0x4] sm:$0xf]
        %v3474 = vld [vmem:[%s9 + $0x8] sm:$0xf]
        %v3475 = vld [vmem:[%s9 + $0xc] sm:$0xf]
        %v3476 = vld [vmem:[%s9 + $0x10] sm:$0xf]
        %v3477 = vld [vmem:[%s9 + $0x14] sm:$0xf]
        %v3478 = vld [vmem:[%s9 + $0x18] sm:$0xf]
        %v3479 = vld [vmem:[%s9 + $0x1c] sm:$0xf]
        %v3480 = vld [vmem:[%s9 + $0x20] sm:$0xf]
        %v3481 = vld [vmem:[%s9 + $0x24] sm:$0xf]
        %v3482 = vld [vmem:[%s9 + $0x28] sm:$0xf]
        %v3483 = vld [vmem:[%s9 + $0x2c] sm:$0xf]
        %v3484 = vld [vmem:[%s9 + $0x30] sm:$0xf]
        %v3485 = vld [vmem:[%s9 + $0x34] sm:$0xf]
        %v3486 = vld [vmem:[%s9 + $0x38] sm:$0xf]
        %v3487 = vld [vmem:[%s9 + $0x3c] sm:$0xf]
        %v3504 = vunpack.c.l.b16 %v3472
        %v3505 = vunpack.c.l.b16 %v3473
        %v3506 = vunpack.c.l.b16 %v3474
        %v3507 = vunpack.c.l.b16 %v3475
        %v3508 = vunpack.c.l.b16 %v3476
        %v3509 = vunpack.c.l.b16 %v3477
        %v3510 = vunpack.c.l.b16 %v3478
        %v3511 = vunpack.c.l.b16 %v3479
        %v3512 = vunpack.c.l.b16 %v3480
        %v3513 = vunpack.c.l.b16 %v3481
        %v3514 = vunpack.c.l.b16 %v3482
        %v3515 = vunpack.c.l.b16 %v3483
        %v3516 = vunpack.c.l.b16 %v3484
        %v3517 = vunpack.c.l.b16 %v3485
        %v3518 = vunpack.c.l.b16 %v3486
        %v3519 = vunpack.c.l.b16 %v3487
        %v3520 = vpack.c.b16 %v3505, %v3504
        %v3521 = vpack.c.b16 %v3507, %v3506
        %v3522 = vpack.c.b16 %v3509, %v3508
        %v3523 = vpack.c.b16 %v3511, %v3510
        %v3524 = vpack.c.b16 %v3513, %v3512
        %v3525 = vpack.c.b16 %v3515, %v3514
        %v3526 = vpack.c.b16 %v3517, %v3516
        %v3527 = vpack.c.b16 %v3519, %v3518
        %3536 = vmatprep.subr.bf16.mxu0 0
        %3537 = vmatpush1.bf16.msra.mxu0 %v3520
        %3538 = vmatprep.subr.bf16.mxu0 0
        %3539 = vmatpush1.bf16.msra.mxu0 %v3521
        %3540 = vmatprep.subr.bf16.mxu0 0
        %3541 = vmatpush1.bf16.msra.mxu0 %v3522
        %3542 = vmatprep.subr.bf16.mxu0 0
        %3543 = vmatpush1.bf16.msra.mxu0 %v3523
        %3544 = vmatprep.subr.bf16.mxu0 0
        %3545 = vmatpush1.bf16.msra.mxu0 %v3524
        %3546 = vmatprep.subr.bf16.mxu0 0
        %3547 = vmatpush1.bf16.msra.mxu0 %v3525
        %3548 = vmatprep.subr.bf16.mxu0 0
        %3549 = vmatpush1.bf16.msra.mxu0 %v3526
        %3550 = vmatprep.subr.bf16.mxu0 0
        %3551 = vmatpush1.bf16.msra.mxu0 %v3527
        %3552 = vmatprep.subr.bf16.mxu0 0
        %3553 = vmatpush1.bf16.msra.mxu0 0
        %3554 = vmatprep.subr.bf16.mxu0 0
        %3555 = vmatpush1.bf16.msra.mxu0 0
        %3556 = vmatprep.subr.bf16.mxu0 0
        %3557 = vmatpush1.bf16.msra.mxu0 0
        %3558 = vmatprep.subr.bf16.mxu0 0
        %3559 = vmatpush1.bf16.msra.mxu0 0
        %3560 = vmatprep.subr.bf16.mxu0 0
        %3561 = vmatpush1.bf16.msra.mxu0 0
        %3562 = vmatprep.subr.bf16.mxu0 0
        %3563 = vmatpush1.bf16.msra.mxu0 0
        %3564 = vmatprep.subr.bf16.mxu0 0
        %3565 = vmatpush1.bf16.msra.mxu0 0
        %3566 = vmatprep.subr.bf16.mxu0 0
        %3567 = vmatpush1.bf16.msra.mxu0 0
        %3568 = vmatprep.mubr.bf16.mxu0 0
        %3569 = vmatmul.mubr.bf16.gmra.mrb[0].mxu0 %v3456
        %v3570 = vpop.f32.mrb[0].mxu0
        %v3571 = vadd.f32 0.0, %v3570
        %v3572 = vpop.f32.mrb[0].mxu0
        %v3573 = vpop.f32.mrb[0].mxu0
        %v3574 = vadd.f32 0.0, %v3573
        %v3575 = vpop.f32.mrb[0].mxu0
        %3576 = vmatprep.mubr.bf16.mxu0 0
        %3577 = vmatmul.mubr.bf16.gmra.mrb[0].mxu0 %v3457
        %v3578 = vpop.f32.mrb[0].mxu0
        %v3579 = vadd.f32 0.0, %v3578
        %v3580 = vpop.f32.mrb[0].mxu0
        %v3581 = vpop.f32.mrb[0].mxu0
        %v3582 = vadd.f32 0.0, %v3581
        %v3583 = vpop.f32.mrb[0].mxu0
        %3584 = vmatprep.mubr.bf16.mxu0 0
        %3585 = vmatmul.mubr.bf16.gmra.mrb[0].mxu0 %v3458
        %v3586 = vpop.f32.mrb[0].mxu0
        %v3587 = vadd.f32 0.0, %v3586
        %v3588 = vpop.f32.mrb[0].mxu0
        %v3589 = vpop.f32.mrb[0].mxu0
        %v3590 = vadd.f32 0.0, %v3589
        %v3591 = vpop.f32.mrb[0].mxu0
        %3592 = vmatprep.mubr.bf16.mxu0 0
        %3593 = vmatmul.mubr.bf16.gmra.mrb[0].mxu0 %v3459
        %v3594 = vpop.f32.mrb[0].mxu0
        %v3595 = vadd.f32 0.0, %v3594
        %v3596 = vpop.f32.mrb[0].mxu0
        %v3597 = vpop.f32.mrb[0].mxu0
        %v3598 = vadd.f32 0.0, %v3597
        %v3599 = vpop.f32.mrb[0].mxu0
        %3600 = vmatprep.mubr.bf16.mxu0 0
        %3601 = vmatmul.mubr.bf16.gmra.mrb[0].mxu0 %v3460
        %v3602 = vpop.f32.mrb[0].mxu0
        %v3603 = vadd.f32 0.0, %v3602
        %v3604 = vpop.f32.mrb[0].mxu0
        %v3605 = vpop.f32.mrb[0].mxu0
        %v3606 = vadd.f32 0.0, %v3605
        %v3607 = vpop.f32.mrb[0].mxu0
        %3608 = vmatprep.mubr.bf16.mxu0 0
        %3609 = vmatmul.mubr.bf16.gmra.mrb[0].mxu0 %v3461
        %v3610 = vpop.f32.mrb[0].mxu0
        %v3611 = vadd.f32 0.0, %v3610
        %v3612 = vpop.f32.mrb[0].mxu0
        %v3613 = vpop.f32.mrb[0].mxu0
        %v3614 = vadd.f32 0.0, %v3613
        %v3615 = vpop.f32.mrb[0].mxu0
        %3616 = vmatprep.mubr.bf16.mxu0 0
        %3617 = vmatmul.mubr.bf16.gmra.mrb[0].mxu0 %v3462
        %v3618 = vpop.f32.mrb[0].mxu0
        %v3619 = vadd.f32 0.0, %v3618
        %v3620 = vpop.f32.mrb[0].mxu0
        %v3621 = vpop.f32.mrb[0].mxu0
        %v3622 = vadd.f32 0.0, %v3621
        %v3623 = vpop.f32.mrb[0].mxu0
        %3624 = vmatprep.mubr.bf16.mxu0 0
        %3625 = vmatmul.mubr.bf16.gmra.mrb[0].mxu0 %v3463
        %v3626 = vpop.f32.mrb[0].mxu0
        %v3627 = vadd.f32 0.0, %v3626
        %v3628 = vpop.f32.mrb[0].mxu0
        %v3629 = vpop.f32.mrb[0].mxu0
        %v3630 = vadd.f32 0.0, %v3629
        %v3631 = vpop.f32.mrb[0].mxu0
        %3632 = vmatprep.mubr.bf16.mxu0 0
        %3633 = vmatmul.mubr.bf16.gmra.mrb[0].mxu0 %v3464
        %v3634 = vpop.f32.mrb[0].mxu0
        %v3635 = vadd.f32 0.0, %v3634
        %v3636 = vpop.f32.mrb[0].mxu0
        %v3637 = vpop.f32.mrb[0].mxu0
        %v3638 = vadd.f32 0.0, %v3637
        %v3639 = vpop.f32.mrb[0].mxu0
        %3640 = vmatprep.mubr.bf16.mxu0 0
        %3641 = vmatmul.mubr.bf16.gmra.mrb[0].mxu0 %v3465
        %v3642 = vpop.f32.mrb[0].mxu0
        %v3643 = vadd.f32 0.0, %v3642
        %v3644 = vpop.f32.mrb[0].mxu0
        %v3645 = vpop.f32.mrb[0].mxu0
        %v3646 = vadd.f32 0.0, %v3645
        %v3647 = vpop.f32.mrb[0].mxu0
        %3648 = vmatprep.mubr.bf16.mxu0 0
        %3649 = vmatmul.mubr.bf16.gmra.mrb[0].mxu0 %v3466
        %v3650 = vpop.f32.mrb[0].mxu0
        %v3651 = vadd.f32 0.0, %v3650
        %v3652 = vpop.f32.mrb[0].mxu0
        %v3653 = vpop.f32.mrb[0].mxu0
        %v3654 = vadd.f32 0.0, %v3653
        %v3655 = vpop.f32.mrb[0].mxu0
        %3656 = vmatprep.mubr.bf16.mxu0 0
        %3657 = vmatmul.mubr.bf16.gmra.mrb[0].mxu0 %v3467
        %v3658 = vpop.f32.mrb[0].mxu0
        %v3659 = vadd.f32 0.0, %v3658
        %v3660 = vpop.f32.mrb[0].mxu0
        %v3661 = vpop.f32.mrb[0].mxu0
        %v3662 = vadd.f32 0.0, %v3661
        %v3663 = vpop.f32.mrb[0].mxu0
        %3664 = vmatprep.mubr.bf16.mxu0 0
        %3665 = vmatmul.mubr.bf16.gmra.mrb[0].mxu0 %v3468
        %v3666 = vpop.f32.mrb[0].mxu0
        %v3667 = vadd.f32 0.0, %v3666
        %v3668 = vpop.f32.mrb[0].mxu0
        %v3669 = vpop.f32.mrb[0].mxu0
        %v3670 = vadd.f32 0.0, %v3669
        %v3671 = vpop.f32.mrb[0].mxu0
        %3672 = vmatprep.mubr.bf16.mxu0 0
        %3673 = vmatmul.mubr.bf16.gmra.mrb[0].mxu0 %v3469
        %v3674 = vpop.f32.mrb[0].mxu0
        %v3675 = vadd.f32 0.0, %v3674
        %v3676 = vpop.f32.mrb[0].mxu0
        %v3677 = vpop.f32.mrb[0].mxu0
        %v3678 = vadd.f32 0.0, %v3677
        %v3679 = vpop.f32.mrb[0].mxu0
        %3680 = vmatprep.mubr.bf16.mxu0 0
        %3681 = vmatmul.mubr.bf16.gmra.mrb[0].mxu0 %v3470
        %v3682 = vpop.f32.mrb[0].mxu0
        %v3683 = vadd.f32 0.0, %v3682
        %v3684 = vpop.f32.mrb[0].mxu0
        %v3685 = vpop.f32.mrb[0].mxu0
        %v3686 = vadd.f32 0.0, %v3685
        %v3687 = vpop.f32.mrb[0].mxu0
        %3688 = vmatprep.mubr.bf16.mxu0 0
        %3689 = vmatmul.mubr.bf16.gmra.mrb[0].mxu0 %v3471
        %v3690 = vpop.f32.mrb[0].mxu0
        %v3691 = vadd.f32 0.0, %v3690
        %v3692 = vpop.f32.mrb[0].mxu0
        %v3693 = vpop.f32.mrb[0].mxu0
        %v3694 = vadd.f32 0.0, %v3693
        %v3695 = vpop.f32.mrb[0].mxu0
        %3696 = vdwg.mxu0
        %v3697 = vld [vmem:[%s10] sm:$0x1]
        %v3698 = vld [vmem:[%s11] sm:$0x1]
        %v3699 = vadd.f32 %v3571, %v3574
        %v3700 = vadd.f32 %v3699, %v3579
        %v3701 = vadd.f32 %v3700, %v3582
        %v3702 = vadd.f32 %v3701, %v3587
        %v3703 = vadd.f32 %v3702, %v3590
        %v3704 = vadd.f32 %v3703, %v3595
        %v3705 = vadd.f32 %v3704, %v3598
        %v3706 = vadd.f32 %v3705, %v3603
        %v3707 = vadd.f32 %v3706, %v3606
        %v3708 = vadd.f32 %v3707, %v3611
        %v3709 = vadd.f32 %v3708, %v3614
        %v3710 = vadd.f32 %v3709, %v3619
        %v3711 = vadd.f32 %v3710, %v3622
        %v3712 = vadd.f32 %v3711, %v3627
        %v3713 = vadd.f32 %v3712, %v3630
        %v3714 = vadd.f32 %v3713, %v3635
        %v3715 = vadd.f32 %v3714, %v3638
        %v3716 = vadd.f32 %v3715, %v3643
        %v3717 = vadd.f32 %v3716, %v3646
        %v3718 = vadd.f32 %v3717, %v3651
        %v3719 = vadd.f32 %v3718, %v3654
        %v3720 = vadd.f32 %v3719, %v3659
        %v3721 = vadd.f32 %v3720, %v3662
        %v3722 = vadd.f32 %v3721, %v3667
        %v3723 = vadd.f32 %v3722, %v3670
        %v3724 = vadd.f32 %v3723, %v3675
        %v3725 = vadd.f32 %v3724, %v3678
        %v3726 = vadd.f32 %v3725, %v3683
        %v3727 = vadd.f32 %v3726, %v3686
        %v3728 = vadd.f32 %v3727, %v3691
        %v3729 = vadd.f32 %v3728, %v3694
        %3730 = vadd.xlane.f32.xlu0 %v3729
        %v3731 = vpop.xlane.xlu0 %3730
        %v3732 = vrot.slane %v3731, 4
        %v3733 = vadd.f32 %v3731, %v3732
        %v3734 = vrot.slane %v3733, 2
        %v3735 = vadd.f32 %v3733, %v3734
        %v3736 = vrot.slane %v3735, 1
        %v3737 = vadd.f32 %v3735, %v3736
        %s3738 = vtos %v3737
        %v3739 = vmul.f32 %v3571, %v3571
        %v3740 = vmul.f32 %v3574, %v3574
        %v3741 = vmul.f32 %v3579, %v3579
        %v3742 = vmul.f32 %v3582, %v3582
        %v3743 = vmul.f32 %v3587, %v3587
        %v3744 = vmul.f32 %v3590, %v3590
        %v3745 = vmul.f32 %v3595, %v3595
        %v3746 = vmul.f32 %v3598, %v3598
        %v3747 = vmul.f32 %v3603, %v3603
        %v3748 = vmul.f32 %v3606, %v3606
        %v3749 = vmul.f32 %v3611, %v3611
        %v3750 = vmul.f32 %v3614, %v3614
        %v3751 = vmul.f32 %v3619, %v3619
        %v3752 = vmul.f32 %v3622, %v3622
        %v3753 = vmul.f32 %v3627, %v3627
        %v3754 = vmul.f32 %v3630, %v3630
        %v3755 = vmul.f32 %v3635, %v3635
        %v3756 = vmul.f32 %v3638, %v3638
        %v3757 = vmul.f32 %v3643, %v3643
        %v3758 = vmul.f32 %v3646, %v3646
        %v3759 = vmul.f32 %v3651, %v3651
        %v3760 = vmul.f32 %v3654, %v3654
        %v3761 = vmul.f32 %v3659, %v3659
        %v3762 = vmul.f32 %v3662, %v3662
        %v3763 = vmul.f32 %v3667, %v3667
        %v3764 = vmul.f32 %v3670, %v3670
        %v3765 = vmul.f32 %v3675, %v3675
        %v3766 = vmul.f32 %v3678, %v3678
        %v3767 = vmul.f32 %v3683, %v3683
        %v3768 = vmul.f32 %v3686, %v3686
        %v3769 = vmul.f32 %v3691, %v3691
        %v3770 = vmul.f32 %v3694, %v3694
        %v3771 = vadd.f32 %v3739, %v3740
        %v3772 = vadd.f32 %v3771, %v3741
        %v3773 = vadd.f32 %v3772, %v3742
        %v3774 = vadd.f32 %v3773, %v3743
        %v3775 = vadd.f32 %v3774, %v3744
        %v3776 = vadd.f32 %v3775, %v3745
        %v3777 = vadd.f32 %v3776, %v3746
        %v3778 = vadd.f32 %v3777, %v3747
        %v3779 = vadd.f32 %v3778, %v3748
        %v3780 = vadd.f32 %v3779, %v3749
        %v3781 = vadd.f32 %v3780, %v3750
        %v3782 = vadd.f32 %v3781, %v3751
        %v3783 = vadd.f32 %v3782, %v3752
        %v3784 = vadd.f32 %v3783, %v3753
        %v3785 = vadd.f32 %v3784, %v3754
        %v3786 = vadd.f32 %v3785, %v3755
        %v3787 = vadd.f32 %v3786, %v3756
        %v3788 = vadd.f32 %v3787, %v3757
        %v3789 = vadd.f32 %v3788, %v3758
        %v3790 = vadd.f32 %v3789, %v3759
        %v3791 = vadd.f32 %v3790, %v3760
        %v3792 = vadd.f32 %v3791, %v3761
        %v3793 = vadd.f32 %v3792, %v3762
        %v3794 = vadd.f32 %v3793, %v3763
        %v3795 = vadd.f32 %v3794, %v3764
        %v3796 = vadd.f32 %v3795, %v3765
        %v3797 = vadd.f32 %v3796, %v3766
        %v3798 = vadd.f32 %v3797, %v3767
        %v3799 = vadd.f32 %v3798, %v3768
        %v3800 = vadd.f32 %v3799, %v3769
        %v3801 = vadd.f32 %v3800, %v3770
        %3802 = vadd.xlane.f32.xlu0 %v3801
        %v3803 = vpop.xlane.xlu0 %3802
        %v3804 = vrot.slane %v3803, 4
        %v3805 = vadd.f32 %v3803, %v3804
        %v3806 = vrot.slane %v3805, 2
        %v3807 = vadd.f32 %v3805, %v3806
        %v3808 = vrot.slane %v3807, 1
        %v3809 = vadd.f32 %v3807, %v3808
        %s3810 = vtos %v3809
        %s3811 = smul.f32 %s3738, 0.00024414063
        %s3812 = smul.f32 %s3810, 0.00024414063
        %s3813 = smul.f32 %s3811, %s3811
        %s3814 = ssub.f32 %s3812, %s3813
        %s3815 = smax.f32 %s3814, 0.0
        %v3816 = vstv %s3811
        %v3817 = vsub.f32 %v3571, %v3816
        %v3818 = vsub.f32 %v3574, %v3816
        %v3819 = vsub.f32 %v3579, %v3816
        %v3820 = vsub.f32 %v3582, %v3816
        %v3821 = vsub.f32 %v3587, %v3816
        %v3822 = vsub.f32 %v3590, %v3816
        %v3823 = vsub.f32 %v3595, %v3816
        %v3824 = vsub.f32 %v3598, %v3816
        %v3825 = vsub.f32 %v3603, %v3816
        %v3826 = vsub.f32 %v3606, %v3816
        %v3827 = vsub.f32 %v3611, %v3816
        %v3828 = vsub.f32 %v3614, %v3816
        %v3829 = vsub.f32 %v3619, %v3816
        %v3830 = vsub.f32 %v3622, %v3816
        %v3831 = vsub.f32 %v3627, %v3816
        %v3832 = vsub.f32 %v3630, %v3816
        %v3833 = vsub.f32 %v3635, %v3816
        %v3834 = vsub.f32 %v3638, %v3816
        %v3835 = vsub.f32 %v3643, %v3816
        %v3836 = vsub.f32 %v3646, %v3816
        %v3837 = vsub.f32 %v3651, %v3816
        %v3838 = vsub.f32 %v3654, %v3816
        %v3839 = vsub.f32 %v3659, %v3816
        %v3840 = vsub.f32 %v3662, %v3816
        %v3841 = vsub.f32 %v3667, %v3816
        %v3842 = vsub.f32 %v3670, %v3816
        %v3843 = vsub.f32 %v3675, %v3816
        %v3844 = vsub.f32 %v3678, %v3816
        %v3845 = vsub.f32 %v3683, %v3816
        %v3846 = vsub.f32 %v3686, %v3816
        %v3847 = vsub.f32 %v3691, %v3816
        %v3848 = vsub.f32 %v3694, %v3816
        %s3849 = sadd.f32 %s3815, 1e-05
        %v3850 = vstv %s3849
        %v3851 = vrsqrt.pop %v3850
        %s3852 = vtos %v3851
        %v3853 = vstv %s3852
        %v3854 = vmul.f32 %v3853, %v3697
        %v3856 = vlaneseq
        %v3857 = vshrl.u32 %v3856, 7
        %v3858 = vsub.s32 0, %v3857
        %v3859 = vrot.slane %v3854, %v3858
        %v3861 = vmul.f32 %v3817, %v3859
        %v3862 = vmul.f32 %v3818, %v3859
        %v3863 = vmul.f32 %v3819, %v3859
        %v3864 = vmul.f32 %v3820, %v3859
        %v3865 = vmul.f32 %v3821, %v3859
        %v3866 = vmul.f32 %v3822, %v3859
        %v3867 = vmul.f32 %v3823, %v3859
        %v3868 = vmul.f32 %v3824, %v3859
        %v3869 = vmul.f32 %v3825, %v3859
        %v3870 = vmul.f32 %v3826, %v3859
        %v3871 = vmul.f32 %v3827, %v3859
        %v3872 = vmul.f32 %v3828, %v3859
        %v3873 = vmul.f32 %v3829, %v3859
        %v3874 = vmul.f32 %v3830, %v3859
        %v3875 = vmul.f32 %v3831, %v3859
        %v3876 = vmul.f32 %v3832, %v3859
        %v3877 = vmul.f32 %v3833, %v3859
        %v3878 = vmul.f32 %v3834, %v3859
        %v3879 = vmul.f32 %v3835, %v3859
        %v3880 = vmul.f32 %v3836, %v3859
        %v3881 = vmul.f32 %v3837, %v3859
        %v3882 = vmul.f32 %v3838, %v3859
        %v3883 = vmul.f32 %v3839, %v3859
        %v3884 = vmul.f32 %v3840, %v3859
        %v3885 = vmul.f32 %v3841, %v3859
        %v3886 = vmul.f32 %v3842, %v3859
        %v3887 = vmul.f32 %v3843, %v3859
        %v3888 = vmul.f32 %v3844, %v3859
        %v3889 = vmul.f32 %v3845, %v3859
        %v3890 = vmul.f32 %v3846, %v3859
        %v3891 = vmul.f32 %v3847, %v3859
        %v3892 = vmul.f32 %v3848, %v3859
        %v3894 = vlaneseq
        %v3895 = vshrl.u32 %v3894, 7
        %v3896 = vsub.s32 0, %v3895
        %v3897 = vrot.slane %v3698, %v3896
        %v3899 = vadd.f32 %v3861, %v3897
        %v3900 = vadd.f32 %v3862, %v3897
        %v3901 = vadd.f32 %v3863, %v3897
        %v3902 = vadd.f32 %v3864, %v3897
        %v3903 = vadd.f32 %v3865, %v3897
        %v3904 = vadd.f32 %v3866, %v3897
        %v3905 = vadd.f32 %v3867, %v3897
        %v3906 = vadd.f32 %v3868, %v3897
        %v3907 = vadd.f32 %v3869, %v3897
        %v3908 = vadd.f32 %v3870, %v3897
        %v3909 = vadd.f32 %v3871, %v3897
        %v3910 = vadd.f32 %v3872, %v3897
        %v3911 = vadd.f32 %v3873, %v3897
        %v3912 = vadd.f32 %v3874, %v3897
        %v3913 = vadd.f32 %v3875, %v3897
        %v3914 = vadd.f32 %v3876, %v3897
        %v3915 = vadd.f32 %v3877, %v3897
        %v3916 = vadd.f32 %v3878, %v3897
        %v3917 = vadd.f32 %v3879, %v3897
        %v3918 = vadd.f32 %v3880, %v3897
        %v3919 = vadd.f32 %v3881, %v3897
        %v3920 = vadd.f32 %v3882, %v3897
        %v3921 = vadd.f32 %v3883, %v3897
        %v3922 = vadd.f32 %v3884, %v3897
        %v3923 = vadd.f32 %v3885, %v3897
        %v3924 = vadd.f32 %v3886, %v3897
        %v3925 = vadd.f32 %v3887, %v3897
        %v3926 = vadd.f32 %v3888, %v3897
        %v3927 = vadd.f32 %v3889, %v3897
        %v3928 = vadd.f32 %v3890, %v3897
        %v3929 = vadd.f32 %v3891, %v3897
        %v3930 = vadd.f32 %v3892, %v3897
        %v3931 = vadd.f32 %v446, %v3899
        %v3932 = vadd.f32 %v447, %v3900
        %v3933 = vadd.f32 %v448, %v3901
        %v3934 = vadd.f32 %v449, %v3902
        %v3935 = vadd.f32 %v450, %v3903
        %v3936 = vadd.f32 %v451, %v3904
        %v3937 = vadd.f32 %v452, %v3905
        %v3938 = vadd.f32 %v453, %v3906
        %v3939 = vadd.f32 %v454, %v3907
        %v3940 = vadd.f32 %v455, %v3908
        %v3941 = vadd.f32 %v456, %v3909
        %v3942 = vadd.f32 %v457, %v3910
        %v3943 = vadd.f32 %v458, %v3911
        %v3944 = vadd.f32 %v459, %v3912
        %v3945 = vadd.f32 %v460, %v3913
        %v3946 = vadd.f32 %v461, %v3914
        %v3947 = vadd.f32 %v462, %v3915
        %v3948 = vadd.f32 %v463, %v3916
        %v3949 = vadd.f32 %v464, %v3917
        %v3950 = vadd.f32 %v465, %v3918
        %v3951 = vadd.f32 %v466, %v3919
        %v3952 = vadd.f32 %v467, %v3920
        %v3953 = vadd.f32 %v468, %v3921
        %v3954 = vadd.f32 %v469, %v3922
        %v3955 = vadd.f32 %v470, %v3923
        %v3956 = vadd.f32 %v471, %v3924
        %v3957 = vadd.f32 %v472, %v3925
        %v3958 = vadd.f32 %v473, %v3926
        %v3959 = vadd.f32 %v474, %v3927
        %v3960 = vadd.f32 %v475, %v3928
        %v3961 = vadd.f32 %v476, %v3929
        %v3962 = vadd.f32 %v477, %v3930
        %3963 = vst [vmem:[%s444] sm:$0xff] %v3931
        %3964 = vst [vmem:[%s444 + $0x8] sm:$0xff] %v3932
        %3965 = vst [vmem:[%s444 + $0x10] sm:$0xff] %v3933
        %3966 = vst [vmem:[%s444 + $0x18] sm:$0xff] %v3934
        %3967 = vst [vmem:[%s444 + $0x20] sm:$0xff] %v3935
        %3968 = vst [vmem:[%s444 + $0x28] sm:$0xff] %v3936
        %3969 = vst [vmem:[%s444 + $0x30] sm:$0xff] %v3937
        %3970 = vst [vmem:[%s444 + $0x38] sm:$0xff] %v3938
        %3971 = vst [vmem:[%s444 + $0x40] sm:$0xff] %v3939
        %3972 = vst [vmem:[%s444 + $0x48] sm:$0xff] %v3940
        %3973 = vst [vmem:[%s444 + $0x50] sm:$0xff] %v3941
        %3974 = vst [vmem:[%s444 + $0x58] sm:$0xff] %v3942
        %3975 = vst [vmem:[%s444 + $0x60] sm:$0xff] %v3943
        %3976 = vst [vmem:[%s444 + $0x68] sm:$0xff] %v3944
        %3977 = vst [vmem:[%s444 + $0x70] sm:$0xff] %v3945
        %3978 = vst [vmem:[%s444 + $0x78] sm:$0xff] %v3946
        %3979 = vst [vmem:[%s444 + $0x80] sm:$0xff] %v3947
        %3980 = vst [vmem:[%s444 + $0x88] sm:$0xff] %v3948
        %3981 = vst [vmem:[%s444 + $0x90] sm:$0xff] %v3949
        %3982 = vst [vmem:[%s444 + $0x98] sm:$0xff] %v3950
        %3983 = vst [vmem:[%s444 + $0xa0] sm:$0xff] %v3951
        %3984 = vst [vmem:[%s444 + $0xa8] sm:$0xff] %v3952
        %3985 = vst [vmem:[%s444 + $0xb0] sm:$0xff] %v3953
        %3986 = vst [vmem:[%s444 + $0xb8] sm:$0xff] %v3954
        %3987 = vst [vmem:[%s444 + $0xc0] sm:$0xff] %v3955
        %3988 = vst [vmem:[%s444 + $0xc8] sm:$0xff] %v3956
        %3989 = vst [vmem:[%s444 + $0xd0] sm:$0xff] %v3957
        %3990 = vst [vmem:[%s444 + $0xd8] sm:$0xff] %v3958
        %3991 = vst [vmem:[%s444 + $0xe0] sm:$0xff] %v3959
        %3992 = vst [vmem:[%s444 + $0xe8] sm:$0xff] %v3960
        %3993 = vst [vmem:[%s444 + $0xf0] sm:$0xff] %v3961
        %3994 = vst [vmem:[%s444 + $0xf8] sm:$0xff] %v3962
        %s3995 = sand.u32 %s295, 1
        %s3996 = scalar_lea.sflag [#allocation5], %s3995
        %s3997 = sand.u32 %s295, 1
        %s3998 = smul.addr %s3997, 256
        %s3999 = scalar_lea.vmem [#allocation8], %s3998
        // Predicated region
        $region77: #{tpu_custom_call.1} parent=67 // pred_check
          %p4000 = pneg %p305
        $region78: #{tpu_custom_call.1} parent=67 // pred_check_branch
          %4002 = sbr.rel (%p4000) target = $region80
        $region79: #{tpu_custom_call.1} parent=67 // pred_region
          %s4004 = ssub.s32 4096, 4096
          %4005 = vsyncadd %s3996, %s4004
          %s4006 = smul.addr %s30, 32
          %s4007 = smul.addr %s4006, 128
          %s4008 = scalar_lea.hbm %s12, %s4007
          %s4009 = sshll.u32 %s3999, 4
          %s4010 = int_to_ptr.vmem [resolvable:$true] %s4009
          %4015 = dma.vmem_to_hbm [thread:$0]  %s4010, 4096, %s4008, %s3996, 128, 128, 8
        $region80: #{tpu_custom_call.1} parent=67 // pred_fallthru
          _
      $region68: #{tpu_custom_call.1} parent=5 // pred_fallthru
        _
      %p4016 = scmp.le.s32.totalorder 2, %s25
      // Predicated region
      $region81: #{tpu_custom_call.1} parent=5 // pred_check
        %p4017 = pneg %p4016
      $region82: #{tpu_custom_call.1} parent=5 // pred_check_branch
        %4019 = sbr.rel (%p4017) target = $region84
      $region83: #{tpu_custom_call.1} parent=5 // pred_region
        %s4020 = ssub.s32 %s25, 2
        // Predicated region
        $region85: #{tpu_custom_call.1} parent=83 // pred_check
          %p4021 = pneg %p311
        $region86: #{tpu_custom_call.1} parent=83 // pred_check_branch
          %4023 = sbr.rel (%p4021) target = $region88
        $region87: #{tpu_custom_call.1} parent=83 // pred_region
          %s4024 = sand.u32 %s296, 1
          %s4025 = scalar_lea.sflag [#allocation5], %s4024
          %s4026 = sand.u32 %s296, 1
          %s4027 = smul.addr %s4026, 256
          %s4028 = scalar_lea.vmem [#allocation8], %s4027
          %4029 = dma.done %s4025, 4096
        $region88: #{tpu_custom_call.1} parent=83 // pred_fallthru
          _
      $region84: #{tpu_custom_call.1} parent=5 // pred_fallthru
        _
    $region6: #{tpu_custom_call.1} parent=1 // loop_footer
      %s29 = sadd.s32 1, %s25
    $region7: #{tpu_custom_call.1} parent=1 // loop_footer_branch
      %24 = sbr.rel target = $region3
    $region8: #{tpu_custom_call.1} parent=1 // loop_exit
      _
    %4030 = vsyncpa [#allocation4], 1
    %s4031 = scalar_lea.sflag [#allocation4], 1
    %4032 = vsyncpa %s4031, 1
    %4033 = vsyncpa [#allocation7], 1
    %4034 = vsyncpa [#allocation5], 1
    %s4035 = scalar_lea.sflag [#allocation5], 1
    %4036 = vsyncpa %s4035, 1

</llo_original>
